<compile_context>
chip_gen: v6e
topology: v6e:2x2x1
jax: 0.10.0
libtpu: 0.0.40
codegen_flags: <defaults>
</compile_context>

<pallas_src>
import functools

import jax
import jax.numpy as jnp
from jax import lax
from jax.experimental import pallas as pl
from jax.experimental.pallas import tpu as pltpu

DECAY = 0.5  # LIF membrane decay constant


def _vmem_limit_bytes():
    """Per-generation scoped-VMEM limit: ~48 MiB on v7x (64 MiB physical),
    ~112 MiB on v5e/v6e (128 MiB physical)."""
    try:
        cap = int(pltpu.get_tpu_info().vmem_capacity_bytes)
    except Exception:  # query unavailable -> conservative (v7x-safe) default
        cap = 64 * 1024 * 1024
    return int(min(max(cap - 16 * 1024 * 1024, 32 * 1024 * 1024),
                   112 * 1024 * 1024))


VMEM_LIMIT = _vmem_limit_bytes()


def _round_up(x, m):
    return -(-x // m) * m


def _split_tile(full, pref, align):
    """Aligned tile <= pref that yields >= 2 blocks whenever possible, so an
    outer 'parallel' grid axis can be sharded across v7x's two TensorCores."""
    if full <= align:
        return full
    half = _round_up(-(-full // 2), align)
    t = min(pref, half, full)
    return max(align, (t // align) * align)


def _pick_tile_d(dout, bp):
    """Dout tile for the SNN layer: sized by LIF vreg pressure
    (mem+spk+thr+i_t live f32 state ~= 4*ceil(Bp/8)*(tile_d/128) vregs,
    kept <~40) and capped so Dout > 128 gives >= 2 grid blocks (megacore)."""
    if dout <= 128:
        return dout
    sub = max(1, bp // 8)
    max_lanes = max(1, 40 // (4 * sub))          # in units of 128 lanes
    t = min(512, max_lanes * 128)
    t = min(t, _round_up(-(-dout // 2), 128))    # >= 2 blocks
    return max(128, (t // 128) * 128)


def _pick_chunk(t_len, pref=8):
    """Time-chunk length: a divisor of T, <= pref, and giving >= 2 chunks
    whenever T >= 2 so the chunked matmul can overlap the LIF recurrence."""
    cap = max(1, min(pref, t_len // 2))
    for c in range(min(t_len, cap), 0, -1):
        if t_len % c == 0:
            return c
    return 1


# ----------------------------------------------------------------------------
# Kernel 1: one "linear + spiking neuron" layer.
#   - time-chunked MXU matmul (bf16 in, f32 accumulate) into a double-buffered
#     VMEM scratch, overlapped with the in-vreg LIF recurrence
#   - grid over Dout blocks, "parallel" (independent output columns)
# ----------------------------------------------------------------------------
def _snn_layer_kernel(x_ref, w_ref, b_ref, mem0_ref, spk0_ref, thr_ref,
                      out_ref, memf_ref, spkf_ref, i_sc, *, T, Bp, Tc):
    n_chunks = T // Tc
    rows = Tc * Bp                    # rows of (T*Bp, Din) input per chunk

    def compute_chunk(c, slot):
        # Input current for Tc time steps: one MXU matmul, bias added once.
        start = c * rows
        if not isinstance(start, int):
            start = pl.multiple_of(start, 8)          # Bp is a multiple of 16
        xs = x_ref[pl.ds(start, rows), :]             # (Tc*Bp, Din) bf16
        i_sc[slot] = (jnp.dot(xs, w_ref[...],
                              preferred_element_type=jnp.float32)
                      + b_ref[...])

    compute_chunk(0, 0)               # prime the pipeline with chunk 0
    thr = thr_ref[...]                # loop-invariant, load once

    def chunk_body(c, carry):
        mem, spk = carry
        slot = lax.rem(c, 2)
        # Issue the matmul for the NEXT chunk into the other buffer while the
        # LIF recurrence consumes the current one.  The chunk index is clamped
        # (instead of pl.when) so MXU pushes and VALU ops stay in one basic
        # block and co-issue; the final redundant matmul writes a buffer that
        # is never read.
        compute_chunk(jnp.minimum(c + 1, n_chunks - 1), 1 - slot)

        for t in range(Tc):           # static unroll: full LLO visibility
            i_t = i_sc[slot, pl.ds(t * Bp, Bp), :]    # (Bp, tile_d) f32, dense
            # spk is exactly 0/1: one select replaces sub+mul of the reset.
            mem = jnp.where(spk > 0.0, i_t, DECAY * mem + i_t)
            spk = (mem > thr).astype(jnp.float32)
            out_ref[c * Tc + t] = spk.astype(out_ref.dtype)   # dense slab
        return mem, spk

    mem, spk = lax.fori_loop(0, n_chunks, chunk_body,
                             (mem0_ref[...], spk0_ref[...]))
    memf_ref[...] = mem               # final state written once
    spkf_ref[...] = spk


def snn_layer(x, w, b, mem0, spk0, thr0):
    """x: (T, Bp, Din) bf16 (Bp multiple of 16); w: (Din, Dout) bf16;
    b: (Dout,) f32; mem0/spk0/thr0: (Bp, Dout) f32."""
    T, Bp, Din = x.shape
    Dout = w.shape[1]
    Tc = _pick_chunk(T)
    tile_d = _pick_tile_d(Dout, Bp)
    grid = (pl.cdiv(Dout, tile_d),)

    kernel = functools.partial(_snn_layer_kernel, T=T, Bp=Bp, Tc=Tc)
    out, memf, spkf = pl.pallas_call(
        kernel,
        grid=grid,
        in_specs=[
            pl.BlockSpec((T * Bp, Din), lambda j: (0, 0)),       # x (resident)
            pl.BlockSpec((Din, tile_d), lambda j: (0, j)),       # W column blk
            pl.BlockSpec((1, tile_d), lambda j: (0, j)),         # bias
            pl.BlockSpec((Bp, tile_d), lambda j: (0, j)),        # mem0
            pl.BlockSpec((Bp, tile_d), lambda j: (0, j)),        # spk0
            pl.BlockSpec((Bp, tile_d), lambda j: (0, j)),        # threshold
        ],
        out_specs=(
            pl.BlockSpec((T, Bp, tile_d), lambda j: (0, 0, j)),  # spikes
            pl.BlockSpec((Bp, tile_d), lambda j: (0, j)),        # final mem
            pl.BlockSpec((Bp, tile_d), lambda j: (0, j)),        # final spk
        ),
        out_shape=(
            jax.ShapeDtypeStruct((T, Bp, Dout), jnp.bfloat16),
            jax.ShapeDtypeStruct((Bp, Dout), jnp.float32),
            jax.ShapeDtypeStruct((Bp, Dout), jnp.float32),
        ),
        scratch_shapes=[pltpu.VMEM((2, Tc * Bp, tile_d), jnp.float32)],
        compiler_params=pltpu.CompilerParams(
            dimension_semantics=("parallel",),
            vmem_limit_bytes=VMEM_LIMIT,
        ),
    )(x.reshape(T * Bp, Din), w, b.reshape(1, Dout), mem0, spk0, thr0)
    return out, (memf, spkf)


# ----------------------------------------------------------------------------
# Kernel 2: tied-weight decoder  logits = h @ emb_weight^T + bias
#   - canonical contraction against a persistent pre-transposed (E, V) copy
#   - vocab axis is the OUTER grid axis so the big weight block is fetched
#     once per vocab tile (rows-inner re-streams only the small h tiles)
#   - f32 logits kept to match the module's output (bf16 logits / fused LSE
#     left as a future option per the review's precision caveat)
# ----------------------------------------------------------------------------
def _decoder_kernel(h_ref, wt_ref, b_ref, out_ref):
    out_ref[...] = (jnp.dot(h_ref[...], wt_ref[...],
                            preferred_element_type=jnp.float32)
                    + b_ref[...])


def decoder(h, emb_weight_t, dec_bias):
    """h: (T, Bp, E) bf16; emb_weight_t: (E, V) bf16 (tied, pre-transposed);
    dec_bias: (V,) f32."""
    T, Bp, E = h.shape
    TB = T * Bp
    V = emb_weight_t.shape[1]
    tile_m = _split_tile(TB, 512, 8)
    tile_v = _split_tile(V, 512, 128)                 # lane-dense output tiles
    grid = (pl.cdiv(V, tile_v), pl.cdiv(TB, tile_m))  # vocab outer: W resident

    out = pl.pallas_call(
        _decoder_kernel,
        grid=grid,
        in_specs=[
            pl.BlockSpec((tile_m, E), lambda j, i: (i, 0)),   # h rows (inner)
            pl.BlockSpec((E, tile_v), lambda j, i: (0, j)),   # weights (outer)
            pl.BlockSpec((1, tile_v), lambda j, i: (0, j)),   # bias
        ],
        out_specs=pl.BlockSpec((tile_m, tile_v), lambda j, i: (i, j)),
        out_shape=jax.ShapeDtypeStruct((TB, V), jnp.float32),
        compiler_params=pltpu.CompilerParams(
            dimension_semantics=("parallel", "parallel"),
            vmem_limit_bytes=VMEM_LIMIT,
        ),
    )(h.reshape(TB, E), emb_weight_t, dec_bias.reshape(1, V))
    return out.reshape(T, Bp, V)


# ----------------------------------------------------------------------------
# Parameter / state setup (deterministic, mirrors LMSNN.__init__ shapes)
# ----------------------------------------------------------------------------
def init_params(key, vocab_size, emb_dim, hidden_dim, nlayers):
    keys = jax.random.split(key, 1 + 2 * nlayers)
    # init_weights(initrange=0.1); stored bf16 for MXU / halved HBM traffic.
    emb_w = jax.random.uniform(keys[0], (vocab_size, emb_dim), jnp.float32,
                               -0.1, 0.1).astype(jnp.bfloat16)
    dec_b = jnp.zeros((vocab_size,), jnp.float32)     # decoder.bias.fill_(0)
    linears = []
    for l in range(nlayers):
        din = emb_dim if l == 0 else hidden_dim
        dout = emb_dim if l == nlayers - 1 else hidden_dim
        bound = 1.0 / (din ** 0.5)                    # nn.Linear default init
        w = jax.random.uniform(keys[1 + 2 * l], (din, dout), jnp.float32,
                               -bound, bound).astype(jnp.bfloat16)
        b = jax.random.uniform(keys[2 + 2 * l], (dout,), jnp.float32,
                               -bound, bound)
        linears.append((w, b))
    return dict(emb_weight=emb_w,
                emb_weight_t=emb_w.T,   # persistent pre-transposed tied copy
                dec_bias=dec_b, linears=linears)


def init_hidden(batch, emb_dim, hidden_dim, nlayers):
    # matches LMSNN.init_hidden: (zeros, zeros, 0.5-filled) per layer
    states = []
    for l in range(nlayers):
        d = emb_dim if l == nlayers - 1 else hidden_dim
        states.append((jnp.zeros((batch, d), jnp.float32),
                       jnp.zeros((batch, d), jnp.float32),
                       jnp.full((batch, d), 0.5, jnp.float32)))
    return states


def _pad_rows(x, bp):
    b = x.shape[0]
    if b == bp:
        return x
    return jnp.pad(x, ((0, bp - b),) + ((0, 0),) * (x.ndim - 1))


def lmsnn_forward(params, inputs, state):
    T, B = inputs.shape
    Bp = _round_up(B, 16)   # aligned rows -> dense per-step slabs (bf16 spikes)
    # embedded_dropout with dropout=0 (eval) == plain embedding gather (glue)
    embedded = jnp.take(params['emb_weight'], inputs, axis=0)   # (T, B, E)
    h = (jnp.pad(embedded, ((0, 0), (0, Bp - B), (0, 0)))
         if Bp != B else embedded)
    # LockedDropout: identity when not training
    new_states = []
    for l, (w, b) in enumerate(params['linears']):
        mem0, spk0, thr0 = state[l]
        h, (memf, spkf) = snn_layer(h, w, b,
                                    _pad_rows(mem0, Bp),
                                    _pad_rows(spk0, Bp),
                                    _pad_rows(thr0, Bp))
        new_states.append((memf[:B], spkf[:B], thr0))  # threshold unchanged
    decoded = decoder(h, params['emb_weight_t'], params['dec_bias'])
    return decoded[:, :B, :], new_states


if __name__ == "__main__":
    # Small, lane-dense shapes (feature axes are multiples of 128).
    T, B = 8, 4
    emb_dim, hidden_dim = 128, 256
    vocab_size = 256
    nlayers = 2

    key = jax.random.PRNGKey(0)
    k_param, k_in = jax.random.split(key)
    params = init_params(k_param, vocab_size, emb_dim, hidden_dim, nlayers)
    state = init_hidden(B, emb_dim, hidden_dim, nlayers)
    inputs = jax.random.randint(k_in, (T, B), 0, vocab_size, dtype=jnp.int32)

    forward = jax.jit(lmsnn_forward)
    decoded, new_states = forward(params, inputs, state)
    decoded = jax.block_until_ready(decoded)
    for s in new_states:
        for t in s:
            jax.block_until_ready(t)

    assert decoded.shape == (T, B, vocab_size)
    assert decoded.dtype == jnp.float32
    assert bool(jnp.isfinite(decoded).all())
    assert new_states[0][0].shape == (B, hidden_dim)
    assert new_states[-1][0].shape == (B, emb_dim)
    print("KERNEL_OK")
</pallas_src>

<mosaic_0001>
module attributes {stable_mosaic.version = 11 : i64} {
  func.func @_decoder_kernel(%arg0: i32, %arg1: i32, %arg2: memref<64x128xbf16, #tpu.memory_space<vmem>>, %arg3: memref<128x128xbf16, #tpu.memory_space<vmem>>, %arg4: memref<1x128xf32, #tpu.memory_space<vmem>>, %arg5: memref<64x128xf32, #tpu.memory_space<vmem>>) attributes {dimension_semantics = [#tpu.dimension_semantics<parallel>, #tpu.dimension_semantics<parallel>], iteration_bounds = array<i64: 2, 2>, scalar_prefetch = 0 : i64, scratch_operands = 0 : i64, tpu.core_type = #tpu.core_type<tc>, window_params = [{transform_indices = @transform_0, window_bounds = array<i64: 64, 128>}, {transform_indices = @transform_1, window_bounds = array<i64: 128, 128>}, {transform_indices = @transform_2, window_bounds = array<i64: 1, 128>}, {transform_indices = @transform_3, window_bounds = array<i64: 64, 128>}]} {
    %c0 = arith.constant 0 : index
    %c0_0 = arith.constant 0 : index
    %0 = vector.load %arg2[%c0, %c0_0] : memref<64x128xbf16, #tpu.memory_space<vmem>>, vector<64x128xbf16>
    %c0_1 = arith.constant 0 : index
    %c0_2 = arith.constant 0 : index
    %1 = vector.load %arg3[%c0_1, %c0_2] : memref<128x128xbf16, #tpu.memory_space<vmem>>, vector<128x128xbf16>
    %cst = arith.constant dense<0.000000e+00> : vector<64x128xf32>
    %2 = tpu.matmul %0, %1, %cst {dimension_numbers = #tpu.dot_dimension_numbers<[1], [0], [0], [1], [0, 0, 1, 1], [], []>} : vector<64x128xbf16>, vector<128x128xbf16>, vector<64x128xf32> -> vector<64x128xf32>
    %c0_3 = arith.constant 0 : index
    %c0_4 = arith.constant 0 : index
    %3 = vector.load %arg4[%c0_3, %c0_4] : memref<1x128xf32, #tpu.memory_space<vmem>>, vector<1x128xf32>
    %4 = vector.broadcast %3 : vector<1x128xf32> to vector<64x128xf32>
    %5 = arith.addf %2, %4 : vector<64x128xf32>
    %c0_5 = arith.constant 0 : index
    %c0_6 = arith.constant 0 : index
    %6 = vector.load %arg5[%c0_5, %c0_6] : memref<64x128xf32, #tpu.memory_space<vmem>>, vector<64x128xf32>
    tpu.vector_store %arg5[%c0_5, %c0_6], %5 {strides = array<i32>} : memref<64x128xf32, #tpu.memory_space<vmem>>, vector<64x128xf32>,
    return
  }
  func.func @transform_0(%arg0: i32, %arg1: i32) -> (i32, i32) {
    %c0_i32 = arith.constant 0 : i32
    %c0_i32_0 = arith.constant 0 : i32
    return %arg1, %c0_i32 : i32, i32
  }
  func.func @transform_1(%arg0: i32, %arg1: i32) -> (i32, i32) {
    %c0_i32 = arith.constant 0 : i32
    %c0_i32_0 = arith.constant 0 : i32
    return %c0_i32, %arg0 : i32, i32
  }
  func.func @transform_2(%arg0: i32, %arg1: i32) -> (i32, i32) {
    %c0_i32 = arith.constant 0 : i32
    %c0_i32_0 = arith.constant 0 : i32
    return %c0_i32, %arg0 : i32, i32
  }
  func.func @transform_3(%arg0: i32, %arg1: i32) -> (i32, i32) {
    %c0_i32 = arith.constant 0 : i32
    return %arg1, %arg0 : i32, i32
  }
}

module attributes {stable_mosaic.version = 11 : i64} {
  func.func @_snn_layer_kernel(%arg0: i32, %arg1: memref<128x256xbf16, #tpu.memory_space<vmem>>, %arg2: memref<256x128xbf16, #tpu.memory_space<vmem>>, %arg3: memref<1x128xf32, #tpu.memory_space<vmem>>, %arg4: memref<16x128xf32, #tpu.memory_space<vmem>>, %arg5: memref<16x128xf32, #tpu.memory_space<vmem>>, %arg6: memref<16x128xf32, #tpu.memory_space<vmem>>, %arg7: memref<8x16x128xbf16, #tpu.memory_space<vmem>>, %arg8: memref<16x128xf32, #tpu.memory_space<vmem>>, %arg9: memref<16x128xf32, #tpu.memory_space<vmem>>, %arg10: memref<2x64x128xf32, #tpu.memory_space<vmem>>) attributes {dimension_semantics = [#tpu.dimension_semantics<parallel>], iteration_bounds = array<i64: 1>, scalar_prefetch = 0 : i64, scratch_operands = 1 : i64, tpu.core_type = #tpu.core_type<tc>, window_params = [{pipeline_mode = #tpu.pipeline_mode<synchronous>, transform_indices = @transform_0, window_bounds = array<i64: 128, 256>}, {transform_indices = @transform_1, window_bounds = array<i64: 256, 128>}, {transform_indices = @transform_2, window_bounds = array<i64: 1, 128>}, {transform_indices = @transform_3, window_bounds = array<i64: 16, 128>}, {transform_indices = @transform_4, window_bounds = array<i64: 16, 128>}, {transform_indices = @transform_5, window_bounds = array<i64: 16, 128>}, {transform_indices = @transform_6, window_bounds = array<i64: 8, 16, 128>}, {transform_indices = @transform_7, window_bounds = array<i64: 16, 128>}, {transform_indices = @transform_8, window_bounds = array<i64: 16, 128>}]} {
    %c0 = arith.constant 0 : index
    %c0_0 = arith.constant 0 : index
    %0 = vector.load %arg1[%c0, %c0_0] : memref<128x256xbf16, #tpu.memory_space<vmem>>, vector<64x256xbf16>
    %c0_1 = arith.constant 0 : index
    %c0_2 = arith.constant 0 : index
    %1 = vector.load %arg2[%c0_1, %c0_2] : memref<256x128xbf16, #tpu.memory_space<vmem>>, vector<256x128xbf16>
    %cst = arith.constant dense<0.000000e+00> : vector<64x128xf32>
    %2 = tpu.matmul %0, %1, %cst {dimension_numbers = #tpu.dot_dimension_numbers<[1], [0], [0], [1], [0, 0, 1, 1], [], []>} : vector<64x256xbf16>, vector<256x128xbf16>, vector<64x128xf32> -> vector<64x128xf32>
    %c0_3 = arith.constant 0 : index
    %c0_4 = arith.constant 0 : index
    %3 = vector.load %arg3[%c0_3, %c0_4] : memref<1x128xf32, #tpu.memory_space<vmem>>, vector<1x128xf32>
    %4 = vector.broadcast %3 : vector<1x128xf32> to vector<64x128xf32>
    %5 = arith.addf %2, %4 : vector<64x128xf32>
    %c0_5 = arith.constant 0 : index
    %c0_6 = arith.constant 0 : index
    %c0_7 = arith.constant 0 : index
    %6 = vector.load %arg10[%c0_5, %c0_6, %c0_7] : memref<2x64x128xf32, #tpu.memory_space<vmem>>, vector<1x64x128xf32>
    %7 = vector.shape_cast %6 : vector<1x64x128xf32> to vector<64x128xf32>
    %8 = vector.shape_cast %5 : vector<64x128xf32> to vector<1x64x128xf32>
    tpu.vector_store %arg10[%c0_5, %c0_6, %c0_7], %8 {strides = array<i32>} : memref<2x64x128xf32, #tpu.memory_space<vmem>>, vector<1x64x128xf32>,
    %c0_8 = arith.constant 0 : index
    %c0_9 = arith.constant 0 : index
    %9 = vector.load %arg6[%c0_8, %c0_9] : memref<16x128xf32, #tpu.memory_space<vmem>>, vector<16x128xf32>
    %c0_10 = arith.constant 0 : index
    %c0_11 = arith.constant 0 : index
    %10 = vector.load %arg4[%c0_10, %c0_11] : memref<16x128xf32, #tpu.memory_space<vmem>>, vector<16x128xf32>
    %c0_12 = arith.constant 0 : index
    %c0_13 = arith.constant 0 : index
    %11 = vector.load %arg5[%c0_12, %c0_13] : memref<16x128xf32, #tpu.memory_space<vmem>>, vector<16x128xf32>
    %c0_i32 = arith.constant 0 : i32
    %c2_i32 = arith.constant 2 : i32
    %12 = arith.addi %c0_i32, %c2_i32 : i32
    %c1_i32 = arith.constant 1 : i32
    %13:2 = scf.for %arg11 = %c0_i32 to %12 step %c1_i32 iter_args(%arg12 = %10, %arg13 = %11) -> (vector<16x128xf32>, vector<16x128xf32>)  : i32 {
      %c2_i32_19 = arith.constant 2 : i32
      %16 = arith.remsi %arg11, %c2_i32_19 : i32
      %c1_i32_20 = arith.constant 1 : i32
      %17 = arith.addi %arg11, %c1_i32_20 : i32
      %c1_i32_21 = arith.constant 1 : i32
      %18 = arith.minsi %17, %c1_i32_21 : i32
      %c1_i32_22 = arith.constant 1 : i32
      %19 = arith.subi %c1_i32_22, %16 : i32
      %c64_i32 = arith.constant 64 : i32
      %20 = arith.muli %18, %c64_i32 : i32
      %21 = tpu.assume_multiple %20, 8 : i32
      %22 = arith.index_cast %21 : i32 to index
      %c0_23 = arith.constant 0 : index
      %23 = vector.load %arg1[%22, %c0_23] : memref<128x256xbf16, #tpu.memory_space<vmem>>, vector<64x256xbf16>
      %c0_24 = arith.constant 0 : index
      %c0_25 = arith.constant 0 : index
      %24 = vector.load %arg2[%c0_24, %c0_25] : memref<256x128xbf16, #tpu.memory_space<vmem>>, vector<256x128xbf16>
      %cst_26 = arith.constant dense<0.000000e+00> : vector<64x128xf32>
      %25 = tpu.matmul %23, %24, %cst_26 {dimension_numbers = #tpu.dot_dimension_numbers<[1], [0], [0], [1], [0, 0, 1, 1], [], []>} : vector<64x256xbf16>, vector<256x128xbf16>, vector<64x128xf32> -> vector<64x128xf32>
      %c0_27 = arith.constant 0 : index
      %c0_28 = arith.constant 0 : index
      %26 = vector.load %arg3[%c0_27, %c0_28] : memref<1x128xf32, #tpu.memory_space<vmem>>, vector<1x128xf32>
      %27 = vector.broadcast %26 : vector<1x128xf32> to vector<64x128xf32>
      %28 = arith.addf %25, %27 : vector<64x128xf32>
      %29 = arith.index_cast %19 : i32 to index
      %c0_29 = arith.constant 0 : index
      %c0_30 = arith.constant 0 : index
      %30 = vector.load %arg10[%29, %c0_29, %c0_30] : memref<2x64x128xf32, #tpu.memory_space<vmem>>, vector<1x64x128xf32>
      %31 = vector.shape_cast %30 : vector<1x64x128xf32> to vector<64x128xf32>
      %32 = vector.shape_cast %28 : vector<64x128xf32> to vector<1x64x128xf32>
      tpu.vector_store %arg10[%29, %c0_29, %c0_30], %32 {strides = array<i32>} : memref<2x64x128xf32, #tpu.memory_space<vmem>>, vector<1x64x128xf32>,
      %33 = arith.index_cast %16 : i32 to index
      %c0_31 = arith.constant 0 : index
      %c0_32 = arith.constant 0 : index
      %34 = vector.load %arg10[%33, %c0_31, %c0_32] : memref<2x64x128xf32, #tpu.memory_space<vmem>>, vector<1x16x128xf32>
      %35 = vector.shape_cast %34 : vector<1x16x128xf32> to vector<16x128xf32>
      %cst_33 = arith.constant 0.000000e+00 : f32
      %36 = vector.broadcast %cst_33 : f32 to vector<16x128xf32>
      %37 = arith.cmpf ogt, %arg13, %36 : vector<16x128xf32>
      %cst_34 = arith.constant 5.000000e-01 : f32
      %38 = vector.broadcast %cst_34 : f32 to vector<16x128xf32>
      %39 = arith.mulf %38, %arg12 : vector<16x128xf32>
      %40 = arith.addf %39, %35 : vector<16x128xf32>
      %41 = arith.select %37, %35, %40 : vector<16x128xi1>, vector<16x128xf32>
      %42 = arith.cmpf ogt, %41, %9 : vector<16x128xf32>
      %43 = arith.extui %42 : vector<16x128xi1> to vector<16x128xi32>
      %44 = arith.sitofp %43 : vector<16x128xi32> to vector<16x128xf32>
      %45 = arith.truncf %44 : vector<16x128xf32> to vector<16x128xbf16>
      %c4_i32 = arith.constant 4 : i32
      %46 = arith.muli %arg11, %c4_i32 : i32
      %c0_i32_35 = arith.constant 0 : i32
      %47 = arith.addi %46, %c0_i32_35 : i32
      %48 = arith.index_cast %47 : i32 to index
      %c0_36 = arith.constant 0 : index
      %c0_37 = arith.constant 0 : index
      %49 = vector.load %arg7[%48, %c0_36, %c0_37] : memref<8x16x128xbf16, #tpu.memory_space<vmem>>, vector<1x16x128xbf16>
      %50 = vector.shape_cast %49 : vector<1x16x128xbf16> to vector<16x128xbf16>
      %51 = vector.shape_cast %45 : vector<16x128xbf16> to vector<1x16x128xbf16>
      tpu.vector_store %arg7[%48, %c0_36, %c0_37], %51 {strides = array<i32>} : memref<8x16x128xbf16, #tpu.memory_space<vmem>>, vector<1x16x128xbf16>,
      %52 = arith.index_cast %16 : i32 to index
      %c16 = arith.constant 16 : index
      %c0_38 = arith.constant 0 : index
      %53 = vector.load %arg10[%52, %c16, %c0_38] : memref<2x64x128xf32, #tpu.memory_space<vmem>>, vector<1x16x128xf32>
      %54 = vector.shape_cast %53 : vector<1x16x128xf32> to vector<16x128xf32>
      %cst_39 = arith.constant 0.000000e+00 : f32
      %55 = vector.broadcast %cst_39 : f32 to vector<16x128xf32>
      %56 = arith.cmpf ogt, %44, %55 : vector<16x128xf32>
      %cst_40 = arith.constant 5.000000e-01 : f32
      %57 = vector.broadcast %cst_40 : f32 to vector<16x128xf32>
      %58 = arith.mulf %57, %41 : vector<16x128xf32>
      %59 = arith.addf %58, %54 : vector<16x128xf32>
      %60 = arith.select %56, %54, %59 : vector<16x128xi1>, vector<16x128xf32>
      %61 = arith.cmpf ogt, %60, %9 : vector<16x128xf32>
      %62 = arith.extui %61 : vector<16x128xi1> to vector<16x128xi32>
      %63 = arith.sitofp %62 : vector<16x128xi32> to vector<16x128xf32>
      %64 = arith.truncf %63 : vector<16x128xf32> to vector<16x128xbf16>
      %c4_i32_41 = arith.constant 4 : i32
      %65 = arith.muli %arg11, %c4_i32_41 : i32
      %c1_i32_42 = arith.constant 1 : i32
      %66 = arith.addi %65, %c1_i32_42 : i32
      %67 = arith.index_cast %66 : i32 to index
      %c0_43 = arith.constant 0 : index
      %c0_44 = arith.constant 0 : index
      %68 = vector.load %arg7[%67, %c0_43, %c0_44] : memref<8x16x128xbf16, #tpu.memory_space<vmem>>, vector<1x16x128xbf16>
      %69 = vector.shape_cast %68 : vector<1x16x128xbf16> to vector<16x128xbf16>
      %70 = vector.shape_cast %64 : vector<16x128xbf16> to vector<1x16x128xbf16>
      tpu.vector_store %arg7[%67, %c0_43, %c0_44], %70 {strides = array<i32>} : memref<8x16x128xbf16, #tpu.memory_space<vmem>>, vector<1x16x128xbf16>,
      %71 = arith.index_cast %16 : i32 to index
      %c32 = arith.constant 32 : index
      %c0_45 = arith.constant 0 : index
      %72 = vector.load %arg10[%71, %c32, %c0_45] : memref<2x64x128xf32, #tpu.memory_space<vmem>>, vector<1x16x128xf32>
      %73 = vector.shape_cast %72 : vector<1x16x128xf32> to vector<16x128xf32>
      %cst_46 = arith.constant 0.000000e+00 : f32
      %74 = vector.broadcast %cst_46 : f32 to vector<16x128xf32>
      %75 = arith.cmpf ogt, %63, %74 : vector<16x128xf32>
      %cst_47 = arith.constant 5.000000e-01 : f32
      %76 = vector.broadcast %cst_47 : f32 to vector<16x128xf32>
      %77 = arith.mulf %76, %60 : vector<16x128xf32>
      %78 = arith.addf %77, %73 : vector<16x128xf32>
      %79 = arith.select %75, %73, %78 : vector<16x128xi1>, vector<16x128xf32>
      %80 = arith.cmpf ogt, %79, %9 : vector<16x128xf32>
      %81 = arith.extui %80 : vector<16x128xi1> to vector<16x128xi32>
      %82 = arith.sitofp %81 : vector<16x128xi32> to vector<16x128xf32>
      %83 = arith.truncf %82 : vector<16x128xf32> to vector<16x128xbf16>
      %c4_i32_48 = arith.constant 4 : i32
      %84 = arith.muli %arg11, %c4_i32_48 : i32
      %c2_i32_49 = arith.constant 2 : i32
      %85 = arith.addi %84, %c2_i32_49 : i32
      %86 = arith.index_cast %85 : i32 to index
      %c0_50 = arith.constant 0 : index
      %c0_51 = arith.constant 0 : index
      %87 = vector.load %arg7[%86, %c0_50, %c0_51] : memref<8x16x128xbf16, #tpu.memory_space<vmem>>, vector<1x16x128xbf16>
      %88 = vector.shape_cast %87 : vector<1x16x128xbf16> to vector<16x128xbf16>
      %89 = vector.shape_cast %83 : vector<16x128xbf16> to vector<1x16x128xbf16>
      tpu.vector_store %arg7[%86, %c0_50, %c0_51], %89 {strides = array<i32>} : memref<8x16x128xbf16, #tpu.memory_space<vmem>>, vector<1x16x128xbf16>,
      %90 = arith.index_cast %16 : i32 to index
      %c48 = arith.constant 48 : index
      %c0_52 = arith.constant 0 : index
      %91 = vector.load %arg10[%90, %c48, %c0_52] : memref<2x64x128xf32, #tpu.memory_space<vmem>>, vector<1x16x128xf32>
      %92 = vector.shape_cast %91 : vector<1x16x128xf32> to vector<16x128xf32>
      %cst_53 = arith.constant 0.000000e+00 : f32
      %93 = vector.broadcast %cst_53 : f32 to vector<16x128xf32>
      %94 = arith.cmpf ogt, %82, %93 : vector<16x128xf32>
      %cst_54 = arith.constant 5.000000e-01 : f32
      %95 = vector.broadcast %cst_54 : f32 to vector<16x128xf32>
      %96 = arith.mulf %95, %79 : vector<16x128xf32>
      %97 = arith.addf %96, %92 : vector<16x128xf32>
      %98 = arith.select %94, %92, %97 : vector<16x128xi1>, vector<16x128xf32>
      %99 = arith.cmpf ogt, %98, %9 : vector<16x128xf32>
      %100 = arith.extui %99 : vector<16x128xi1> to vector<16x128xi32>
      %101 = arith.sitofp %100 : vector<16x128xi32> to vector<16x128xf32>
      %102 = arith.truncf %101 : vector<16x128xf32> to vector<16x128xbf16>
      %c4_i32_55 = arith.constant 4 : i32
      %103 = arith.muli %arg11, %c4_i32_55 : i32
      %c3_i32 = arith.constant 3 : i32
      %104 = arith.addi %103, %c3_i32 : i32
      %105 = arith.index_cast %104 : i32 to index
      %c0_56 = arith.constant 0 : index
      %c0_57 = arith.constant 0 : index
      %106 = vector.load %arg7[%105, %c0_56, %c0_57] : memref<8x16x128xbf16, #tpu.memory_space<vmem>>, vector<1x16x128xbf16>
      %107 = vector.shape_cast %106 : vector<1x16x128xbf16> to vector<16x128xbf16>
      %108 = vector.shape_cast %102 : vector<16x128xbf16> to vector<1x16x128xbf16>
      tpu.vector_store %arg7[%105, %c0_56, %c0_57], %108 {strides = array<i32>} : memref<8x16x128xbf16, #tpu.memory_space<vmem>>, vector<1x16x128xbf16>,
      scf.yield %98, %101 : vector<16x128xf32>, vector<16x128xf32>
    }
    %c2_i32_14 = arith.constant 2 : i32
    %c0_15 = arith.constant 0 : index
    %c0_16 = arith.constant 0 : index
    %14 = vector.load %arg8[%c0_15, %c0_16] : memref<16x128xf32, #tpu.memory_space<vmem>>, vector<16x128xf32>
    tpu.vector_store %arg8[%c0_15, %c0_16], %13#0 {strides = array<i32>} : memref<16x128xf32, #tpu.memory_space<vmem>>, vector<16x128xf32>,
    %c0_17 = arith.constant 0 : index
    %c0_18 = arith.constant 0 : index
    %15 = vector.load %arg9[%c0_17, %c0_18] : memref<16x128xf32, #tpu.memory_space<vmem>>, vector<16x128xf32>
    tpu.vector_store %arg9[%c0_17, %c0_18], %13#1 {strides = array<i32>} : memref<16x128xf32, #tpu.memory_space<vmem>>, vector<16x128xf32>,
    return
  }
  func.func @transform_0(%arg0: i32) -> (i32, i32) {
    %c0_i32 = arith.constant 0 : i32
    %c0_i32_0 = arith.constant 0 : i32
    %c0_i32_1 = arith.constant 0 : i32
    return %c0_i32, %c0_i32_0 : i32, i32
  }
  func.func @transform_1(%arg0: i32) -> (i32, i32) {
    %c0_i32 = arith.constant 0 : i32
    %c0_i32_0 = arith.constant 0 : i32
    return %c0_i32, %arg0 : i32, i32
  }
  func.func @transform_2(%arg0: i32) -> (i32, i32) {
    %c0_i32 = arith.constant 0 : i32
    %c0_i32_0 = arith.constant 0 : i32
    return %c0_i32, %arg0 : i32, i32
  }
  func.func @transform_3(%arg0: i32) -> (i32, i32) {
    %c0_i32 = arith.constant 0 : i32
    %c0_i32_0 = arith.constant 0 : i32
    return %c0_i32, %arg0 : i32, i32
  }
  func.func @transform_4(%arg0: i32) -> (i32, i32) {
    %c0_i32 = arith.constant 0 : i32
    %c0_i32_0 = arith.constant 0 : i32
    return %c0_i32, %arg0 : i32, i32
  }
  func.func @transform_5(%arg0: i32) -> (i32, i32) {
    %c0_i32 = arith.constant 0 : i32
    %c0_i32_0 = arith.constant 0 : i32
    return %c0_i32, %arg0 : i32, i32
  }
  func.func @transform_6(%arg0: i32) -> (i32, i32, i32) {
    %c0_i32 = arith.constant 0 : i32
    %c0_i32_0 = arith.constant 0 : i32
    %c0_i32_1 = arith.constant 0 : i32
    return %c0_i32, %c0_i32_0, %arg0 : i32, i32, i32
  }
  func.func @transform_7(%arg0: i32) -> (i32, i32) {
    %c0_i32 = arith.constant 0 : i32
    %c0_i32_0 = arith.constant 0 : i32
    return %c0_i32, %arg0 : i32, i32
  }
  func.func @transform_8(%arg0: i32) -> (i32, i32) {
    %c0_i32 = arith.constant 0 : i32
    %c0_i32_0 = arith.constant 0 : i32
    return %c0_i32, %arg0 : i32, i32
  }
}

module attributes {stable_mosaic.version = 11 : i64} {
  func.func @_snn_layer_kernel(%arg0: i32, %arg1: memref<128x128xbf16, #tpu.memory_space<vmem>>, %arg2: memref<128x128xbf16, #tpu.memory_space<vmem>>, %arg3: memref<1x128xf32, #tpu.memory_space<vmem>>, %arg4: memref<16x128xf32, #tpu.memory_space<vmem>>, %arg5: memref<16x128xf32, #tpu.memory_space<vmem>>, %arg6: memref<16x128xf32, #tpu.memory_space<vmem>>, %arg7: memref<8x16x128xbf16, #tpu.memory_space<vmem>>, %arg8: memref<16x128xf32, #tpu.memory_space<vmem>>, %arg9: memref<16x128xf32, #tpu.memory_space<vmem>>, %arg10: memref<2x64x128xf32, #tpu.memory_space<vmem>>) attributes {dimension_semantics = [#tpu.dimension_semantics<parallel>], iteration_bounds = array<i64: 2>, scalar_prefetch = 0 : i64, scratch_operands = 1 : i64, tpu.core_type = #tpu.core_type<tc>, window_params = [{pipeline_mode = #tpu.pipeline_mode<synchronous>, transform_indices = @transform_0, window_bounds = array<i64: 128, 128>}, {transform_indices = @transform_1, window_bounds = array<i64: 128, 128>}, {transform_indices = @transform_2, window_bounds = array<i64: 1, 128>}, {transform_indices = @transform_3, window_bounds = array<i64: 16, 128>}, {transform_indices = @transform_4, window_bounds = array<i64: 16, 128>}, {transform_indices = @transform_5, window_bounds = array<i64: 16, 128>}, {transform_indices = @transform_6, window_bounds = array<i64: 8, 16, 128>}, {transform_indices = @transform_7, window_bounds = array<i64: 16, 128>}, {transform_indices = @transform_8, window_bounds = array<i64: 16, 128>}]} {
    %c0 = arith.constant 0 : index
    %c0_0 = arith.constant 0 : index
    %0 = vector.load %arg1[%c0, %c0_0] : memref<128x128xbf16, #tpu.memory_space<vmem>>, vector<64x128xbf16>
    %c0_1 = arith.constant 0 : index
    %c0_2 = arith.constant 0 : index
    %1 = vector.load %arg2[%c0_1, %c0_2] : memref<128x128xbf16, #tpu.memory_space<vmem>>, vector<128x128xbf16>
    %cst = arith.constant dense<0.000000e+00> : vector<64x128xf32>
    %2 = tpu.matmul %0, %1, %cst {dimension_numbers = #tpu.dot_dimension_numbers<[1], [0], [0], [1], [0, 0, 1, 1], [], []>} : vector<64x128xbf16>, vector<128x128xbf16>, vector<64x128xf32> -> vector<64x128xf32>
    %c0_3 = arith.constant 0 : index
    %c0_4 = arith.constant 0 : index
    %3 = vector.load %arg3[%c0_3, %c0_4] : memref<1x128xf32, #tpu.memory_space<vmem>>, vector<1x128xf32>
    %4 = vector.broadcast %3 : vector<1x128xf32> to vector<64x128xf32>
    %5 = arith.addf %2, %4 : vector<64x128xf32>
    %c0_5 = arith.constant 0 : index
    %c0_6 = arith.constant 0 : index
    %c0_7 = arith.constant 0 : index
    %6 = vector.load %arg10[%c0_5, %c0_6, %c0_7] : memref<2x64x128xf32, #tpu.memory_space<vmem>>, vector<1x64x128xf32>
    %7 = vector.shape_cast %6 : vector<1x64x128xf32> to vector<64x128xf32>
    %8 = vector.shape_cast %5 : vector<64x128xf32> to vector<1x64x128xf32>
    tpu.vector_store %arg10[%c0_5, %c0_6, %c0_7], %8 {strides = array<i32>} : memref<2x64x128xf32, #tpu.memory_space<vmem>>, vector<1x64x128xf32>,
    %c0_8 = arith.constant 0 : index
    %c0_9 = arith.constant 0 : index
    %9 = vector.load %arg6[%c0_8, %c0_9] : memref<16x128xf32, #tpu.memory_space<vmem>>, vector<16x128xf32>
    %c0_10 = arith.constant 0 : index
    %c0_11 = arith.constant 0 : index
    %10 = vector.load %arg4[%c0_10, %c0_11] : memref<16x128xf32, #tpu.memory_space<vmem>>, vector<16x128xf32>
    %c0_12 = arith.constant 0 : index
    %c0_13 = arith.constant 0 : index
    %11 = vector.load %arg5[%c0_12, %c0_13] : memref<16x128xf32, #tpu.memory_space<vmem>>, vector<16x128xf32>
    %c0_i32 = arith.constant 0 : i32
    %c2_i32 = arith.constant 2 : i32
    %12 = arith.addi %c0_i32, %c2_i32 : i32
    %c1_i32 = arith.constant 1 : i32
    %13:2 = scf.for %arg11 = %c0_i32 to %12 step %c1_i32 iter_args(%arg12 = %10, %arg13 = %11) -> (vector<16x128xf32>, vector<16x128xf32>)  : i32 {
      %c2_i32_19 = arith.constant 2 : i32
      %16 = arith.remsi %arg11, %c2_i32_19 : i32
      %c1_i32_20 = arith.constant 1 : i32
      %17 = arith.addi %arg11, %c1_i32_20 : i32
      %c1_i32_21 = arith.constant 1 : i32
      %18 = arith.minsi %17, %c1_i32_21 : i32
      %c1_i32_22 = arith.constant 1 : i32
      %19 = arith.subi %c1_i32_22, %16 : i32
      %c64_i32 = arith.constant 64 : i32
      %20 = arith.muli %18, %c64_i32 : i32
      %21 = tpu.assume_multiple %20, 8 : i32
      %22 = arith.index_cast %21 : i32 to index
      %c0_23 = arith.constant 0 : index
      %23 = vector.load %arg1[%22, %c0_23] : memref<128x128xbf16, #tpu.memory_space<vmem>>, vector<64x128xbf16>
      %c0_24 = arith.constant 0 : index
      %c0_25 = arith.constant 0 : index
      %24 = vector.load %arg2[%c0_24, %c0_25] : memref<128x128xbf16, #tpu.memory_space<vmem>>, vector<128x128xbf16>
      %cst_26 = arith.constant dense<0.000000e+00> : vector<64x128xf32>
      %25 = tpu.matmul %23, %24, %cst_26 {dimension_numbers = #tpu.dot_dimension_numbers<[1], [0], [0], [1], [0, 0, 1, 1], [], []>} : vector<64x128xbf16>, vector<128x128xbf16>, vector<64x128xf32> -> vector<64x128xf32>
      %c0_27 = arith.constant 0 : index
      %c0_28 = arith.constant 0 : index
      %26 = vector.load %arg3[%c0_27, %c0_28] : memref<1x128xf32, #tpu.memory_space<vmem>>, vector<1x128xf32>
      %27 = vector.broadcast %26 : vector<1x128xf32> to vector<64x128xf32>
      %28 = arith.addf %25, %27 : vector<64x128xf32>
      %29 = arith.index_cast %19 : i32 to index
      %c0_29 = arith.constant 0 : index
      %c0_30 = arith.constant 0 : index
      %30 = vector.load %arg10[%29, %c0_29, %c0_30] : memref<2x64x128xf32, #tpu.memory_space<vmem>>, vector<1x64x128xf32>
      %31 = vector.shape_cast %30 : vector<1x64x128xf32> to vector<64x128xf32>
      %32 = vector.shape_cast %28 : vector<64x128xf32> to vector<1x64x128xf32>
      tpu.vector_store %arg10[%29, %c0_29, %c0_30], %32 {strides = array<i32>} : memref<2x64x128xf32, #tpu.memory_space<vmem>>, vector<1x64x128xf32>,
      %33 = arith.index_cast %16 : i32 to index
      %c0_31 = arith.constant 0 : index
      %c0_32 = arith.constant 0 : index
      %34 = vector.load %arg10[%33, %c0_31, %c0_32] : memref<2x64x128xf32, #tpu.memory_space<vmem>>, vector<1x16x128xf32>
      %35 = vector.shape_cast %34 : vector<1x16x128xf32> to vector<16x128xf32>
      %cst_33 = arith.constant 0.000000e+00 : f32
      %36 = vector.broadcast %cst_33 : f32 to vector<16x128xf32>
      %37 = arith.cmpf ogt, %arg13, %36 : vector<16x128xf32>
      %cst_34 = arith.constant 5.000000e-01 : f32
      %38 = vector.broadcast %cst_34 : f32 to vector<16x128xf32>
      %39 = arith.mulf %38, %arg12 : vector<16x128xf32>
      %40 = arith.addf %39, %35 : vector<16x128xf32>
      %41 = arith.select %37, %35, %40 : vector<16x128xi1>, vector<16x128xf32>
      %42 = arith.cmpf ogt, %41, %9 : vector<16x128xf32>
      %43 = arith.extui %42 : vector<16x128xi1> to vector<16x128xi32>
      %44 = arith.sitofp %43 : vector<16x128xi32> to vector<16x128xf32>
      %45 = arith.truncf %44 : vector<16x128xf32> to vector<16x128xbf16>
      %c4_i32 = arith.constant 4 : i32
      %46 = arith.muli %arg11, %c4_i32 : i32
      %c0_i32_35 = arith.constant 0 : i32
      %47 = arith.addi %46, %c0_i32_35 : i32
      %48 = arith.index_cast %47 : i32 to index
      %c0_36 = arith.constant 0 : index
      %c0_37 = arith.constant 0 : index
      %49 = vector.load %arg7[%48, %c0_36, %c0_37] : memref<8x16x128xbf16, #tpu.memory_space<vmem>>, vector<1x16x128xbf16>
      %50 = vector.shape_cast %49 : vector<1x16x128xbf16> to vector<16x128xbf16>
      %51 = vector.shape_cast %45 : vector<16x128xbf16> to vector<1x16x128xbf16>
      tpu.vector_store %arg7[%48, %c0_36, %c0_37], %51 {strides = array<i32>} : memref<8x16x128xbf16, #tpu.memory_space<vmem>>, vector<1x16x128xbf16>,
      %52 = arith.index_cast %16 : i32 to index
      %c16 = arith.constant 16 : index
      %c0_38 = arith.constant 0 : index
      %53 = vector.load %arg10[%52, %c16, %c0_38] : memref<2x64x128xf32, #tpu.memory_space<vmem>>, vector<1x16x128xf32>
      %54 = vector.shape_cast %53 : vector<1x16x128xf32> to vector<16x128xf32>
      %cst_39 = arith.constant 0.000000e+00 : f32
      %55 = vector.broadcast %cst_39 : f32 to vector<16x128xf32>
      %56 = arith.cmpf ogt, %44, %55 : vector<16x128xf32>
      %cst_40 = arith.constant 5.000000e-01 : f32
      %57 = vector.broadcast %cst_40 : f32 to vector<16x128xf32>
      %58 = arith.mulf %57, %41 : vector<16x128xf32>
      %59 = arith.addf %58, %54 : vector<16x128xf32>
      %60 = arith.select %56, %54, %59 : vector<16x128xi1>, vector<16x128xf32>
      %61 = arith.cmpf ogt, %60, %9 : vector<16x128xf32>
      %62 = arith.extui %61 : vector<16x128xi1> to vector<16x128xi32>
      %63 = arith.sitofp %62 : vector<16x128xi32> to vector<16x128xf32>
      %64 = arith.truncf %63 : vector<16x128xf32> to vector<16x128xbf16>
      %c4_i32_41 = arith.constant 4 : i32
      %65 = arith.muli %arg11, %c4_i32_41 : i32
      %c1_i32_42 = arith.constant 1 : i32
      %66 = arith.addi %65, %c1_i32_42 : i32
      %67 = arith.index_cast %66 : i32 to index
      %c0_43 = arith.constant 0 : index
      %c0_44 = arith.constant 0 : index
      %68 = vector.load %arg7[%67, %c0_43, %c0_44] : memref<8x16x128xbf16, #tpu.memory_space<vmem>>, vector<1x16x128xbf16>
      %69 = vector.shape_cast %68 : vector<1x16x128xbf16> to vector<16x128xbf16>
      %70 = vector.shape_cast %64 : vector<16x128xbf16> to vector<1x16x128xbf16>
      tpu.vector_store %arg7[%67, %c0_43, %c0_44], %70 {strides = array<i32>} : memref<8x16x128xbf16, #tpu.memory_space<vmem>>, vector<1x16x128xbf16>,
      %71 = arith.index_cast %16 : i32 to index
      %c32 = arith.constant 32 : index
      %c0_45 = arith.constant 0 : index
      %72 = vector.load %arg10[%71, %c32, %c0_45] : memref<2x64x128xf32, #tpu.memory_space<vmem>>, vector<1x16x128xf32>
      %73 = vector.shape_cast %72 : vector<1x16x128xf32> to vector<16x128xf32>
      %cst_46 = arith.constant 0.000000e+00 : f32
      %74 = vector.broadcast %cst_46 : f32 to vector<16x128xf32>
      %75 = arith.cmpf ogt, %63, %74 : vector<16x128xf32>
      %cst_47 = arith.constant 5.000000e-01 : f32
      %76 = vector.broadcast %cst_47 : f32 to vector<16x128xf32>
      %77 = arith.mulf %76, %60 : vector<16x128xf32>
      %78 = arith.addf %77, %73 : vector<16x128xf32>
      %79 = arith.select %75, %73, %78 : vector<16x128xi1>, vector<16x128xf32>
      %80 = arith.cmpf ogt, %79, %9 : vector<16x128xf32>
      %81 = arith.extui %80 : vector<16x128xi1> to vector<16x128xi32>
      %82 = arith.sitofp %81 : vector<16x128xi32> to vector<16x128xf32>
      %83 = arith.truncf %82 : vector<16x128xf32> to vector<16x128xbf16>
      %c4_i32_48 = arith.constant 4 : i32
      %84 = arith.muli %arg11, %c4_i32_48 : i32
      %c2_i32_49 = arith.constant 2 : i32
      %85 = arith.addi %84, %c2_i32_49 : i32
      %86 = arith.index_cast %85 : i32 to index
      %c0_50 = arith.constant 0 : index
      %c0_51 = arith.constant 0 : index
      %87 = vector.load %arg7[%86, %c0_50, %c0_51] : memref<8x16x128xbf16, #tpu.memory_space<vmem>>, vector<1x16x128xbf16>
      %88 = vector.shape_cast %87 : vector<1x16x128xbf16> to vector<16x128xbf16>
      %89 = vector.shape_cast %83 : vector<16x128xbf16> to vector<1x16x128xbf16>
      tpu.vector_store %arg7[%86, %c0_50, %c0_51], %89 {strides = array<i32>} : memref<8x16x128xbf16, #tpu.memory_space<vmem>>, vector<1x16x128xbf16>,
      %90 = arith.index_cast %16 : i32 to index
      %c48 = arith.constant 48 : index
      %c0_52 = arith.constant 0 : index
      %91 = vector.load %arg10[%90, %c48, %c0_52] : memref<2x64x128xf32, #tpu.memory_space<vmem>>, vector<1x16x128xf32>
      %92 = vector.shape_cast %91 : vector<1x16x128xf32> to vector<16x128xf32>
      %cst_53 = arith.constant 0.000000e+00 : f32
      %93 = vector.broadcast %cst_53 : f32 to vector<16x128xf32>
      %94 = arith.cmpf ogt, %82, %93 : vector<16x128xf32>
      %cst_54 = arith.constant 5.000000e-01 : f32
      %95 = vector.broadcast %cst_54 : f32 to vector<16x128xf32>
      %96 = arith.mulf %95, %79 : vector<16x128xf32>
      %97 = arith.addf %96, %92 : vector<16x128xf32>
      %98 = arith.select %94, %92, %97 : vector<16x128xi1>, vector<16x128xf32>
      %99 = arith.cmpf ogt, %98, %9 : vector<16x128xf32>
      %100 = arith.extui %99 : vector<16x128xi1> to vector<16x128xi32>
      %101 = arith.sitofp %100 : vector<16x128xi32> to vector<16x128xf32>
      %102 = arith.truncf %101 : vector<16x128xf32> to vector<16x128xbf16>
      %c4_i32_55 = arith.constant 4 : i32
      %103 = arith.muli %arg11, %c4_i32_55 : i32
      %c3_i32 = arith.constant 3 : i32
      %104 = arith.addi %103, %c3_i32 : i32
      %105 = arith.index_cast %104 : i32 to index
      %c0_56 = arith.constant 0 : index
      %c0_57 = arith.constant 0 : index
      %106 = vector.load %arg7[%105, %c0_56, %c0_57] : memref<8x16x128xbf16, #tpu.memory_space<vmem>>, vector<1x16x128xbf16>
      %107 = vector.shape_cast %106 : vector<1x16x128xbf16> to vector<16x128xbf16>
      %108 = vector.shape_cast %102 : vector<16x128xbf16> to vector<1x16x128xbf16>
      tpu.vector_store %arg7[%105, %c0_56, %c0_57], %108 {strides = array<i32>} : memref<8x16x128xbf16, #tpu.memory_space<vmem>>, vector<1x16x128xbf16>,
      scf.yield %98, %101 : vector<16x128xf32>, vector<16x128xf32>
    }
    %c2_i32_14 = arith.constant 2 : i32
    %c0_15 = arith.constant 0 : index
    %c0_16 = arith.constant 0 : index
    %14 = vector.load %arg8[%c0_15, %c0_16] : memref<16x128xf32, #tpu.memory_space<vmem>>, vector<16x128xf32>
    tpu.vector_store %arg8[%c0_15, %c0_16], %13#0 {strides = array<i32>} : memref<16x128xf32, #tpu.memory_space<vmem>>, vector<16x128xf32>,
    %c0_17 = arith.constant 0 : index
    %c0_18 = arith.constant 0 : index
    %15 = vector.load %arg9[%c0_17, %c0_18] : memref<16x128xf32, #tpu.memory_space<vmem>>, vector<16x128xf32>
    tpu.vector_store %arg9[%c0_17, %c0_18], %13#1 {strides = array<i32>} : memref<16x128xf32, #tpu.memory_space<vmem>>, vector<16x128xf32>,
    return
  }
  func.func @transform_0(%arg0: i32) -> (i32, i32) {
    %c0_i32 = arith.constant 0 : i32
    %c0_i32_0 = arith.constant 0 : i32
    %c0_i32_1 = arith.constant 0 : i32
    return %c0_i32, %c0_i32_0 : i32, i32
  }
  func.func @transform_1(%arg0: i32) -> (i32, i32) {
    %c0_i32 = arith.constant 0 : i32
    %c0_i32_0 = arith.constant 0 : i32
    return %c0_i32, %arg0 : i32, i32
  }
  func.func @transform_2(%arg0: i32) -> (i32, i32) {
    %c0_i32 = arith.constant 0 : i32
    %c0_i32_0 = arith.constant 0 : i32
    return %c0_i32, %arg0 : i32, i32
  }
  func.func @transform_3(%arg0: i32) -> (i32, i32) {
    %c0_i32 = arith.constant 0 : i32
    %c0_i32_0 = arith.constant 0 : i32
    return %c0_i32, %arg0 : i32, i32
  }
  func.func @transform_4(%arg0: i32) -> (i32, i32) {
    %c0_i32 = arith.constant 0 : i32
    %c0_i32_0 = arith.constant 0 : i32
    return %c0_i32, %arg0 : i32, i32
  }
  func.func @transform_5(%arg0: i32) -> (i32, i32) {
    %c0_i32 = arith.constant 0 : i32
    %c0_i32_0 = arith.constant 0 : i32
    return %c0_i32, %arg0 : i32, i32
  }
  func.func @transform_6(%arg0: i32) -> (i32, i32, i32) {
    %c0_i32 = arith.constant 0 : i32
    %c0_i32_0 = arith.constant 0 : i32
    %c0_i32_1 = arith.constant 0 : i32
    return %c0_i32, %c0_i32_0, %arg0 : i32, i32, i32
  }
  func.func @transform_7(%arg0: i32) -> (i32, i32) {
    %c0_i32 = arith.constant 0 : i32
    %c0_i32_0 = arith.constant 0 : i32
    return %c0_i32, %arg0 : i32, i32
  }
  func.func @transform_8(%arg0: i32) -> (i32, i32) {
    %c0_i32 = arith.constant 0 : i32
    %c0_i32_0 = arith.constant 0 : i32
    return %c0_i32, %arg0 : i32, i32
  }
}

</mosaic_0001>

<llo_original>
// kernel: lmsnn_forward.5
$region0: #{lmsnn_forward.5}
  #allocation0 [shape = 'u32[]', space=smem, size = 0x4, offset = 0x4, fixed_abs, tag = 'smem constant byte address 0x4 - core index']
  #allocation1 [shape = 'u32[144,128]{1,0:T(1,128)}', space=vmem, size = 0x12000, scoped, tag = 'internal scratch']
  %s0 = inlined_call_operand.vmem [shape: bf16[128,128], index: 0, kind: input, shape index: {}]
  %s1 = inlined_call_operand.vmem [shape: bf16[128,256], index: 1, kind: input, shape index: {}]
  %s2 = inlined_call_operand.vmem [shape: f32[1,256], index: 2, kind: input, shape index: {}]
  %s3 = inlined_call_operand.vmem [shape: f32[128,256], index: 3, kind: output, shape index: {}]
  %s4 = sld [smem:[#allocation0]]
  $region120: #{lmsnn_forward.5} parent=0
    _
  %s6 = ssub.s32 1, %s4
  %s7 = scalar_select 0, %s6, %s4
  $region1: #{lmsnn_forward.5} parent=0
    #allocation2 [shape = 'u8[65536]{0}', space=vmem, size = 0x10000, scoped, tag = 'input window, operand 1']
    #allocation3 [shape = 'u8[65536]{0}', space=vmem, size = 0x10000, scoped, tag = 'output window, operand 0']
    loop: start=0, step=1, limit=6
    $region2: #{lmsnn_forward.5} parent=1 // loop_pre_header
      _
    $region3: #{lmsnn_forward.5} parent=1 // loop_header
      %s9 = sphi 0, %s13
      %p10 = scmp.ge.s32.totalorder %s9, 6
      %s16 = sphi 0, %s28
      %s17 = sphi 0, %s24
      %s18 = sphi 0, %s16
      %s19 = sphi 0, %s17
      %s20 = sphi 0, %s18
      %s21 = sphi 0, %s19
      %s31 = sphi 0, %s33
      %s34 = sphi 0, %s31
      %s35 = sphi 0, %s34
      %s51 = sphi 0, %s35
      %s57 = sphi 0, %s59
      %s60 = sphi 0, %s57
      %s61 = sphi 0, %s60
      %s77 = sphi 0, %s61
      %s83 = sphi 0, %s85
      %s86 = sphi 0, %s83
      %s87 = sphi 0, %s86
      %s103 = sphi 0, %s87
      %s111 = sphi 0, %s113
      %s114 = sphi 0, %s111
      %s115 = sphi 0, %s114
      %s131 = sphi 0, %s115
    $region4: #{lmsnn_forward.5} parent=1 // loop_header_branch
      %12 = sbr.rel (%p10) target = $region8
    $region5: #{lmsnn_forward.5} parent=1 // loop_body
      %s14 = ssub.s32 %s9, 1
      %s15 = ssub.s32 %s9, 2
      %s22 = sadd.s32 1, %s17
      %p23 = scmp.ge.s32.totalorder %s22, 2
      %s24 = scalar_select %p23, 0, %s22
      %s25 = sadd.s32 1, %s16
      %s26 = scalar_select %p23, %s25, %s16
      %p27 = scmp.ge.s32.totalorder %s26, 2
      %s28 = scalar_select %p27, 0, %s26
      %s29 = ssub.s32 %s17, %s24
      %p30 = scmp.eq.s32.totalorder %s29, 0
      %s32 = sadd.s32 %s31, 1
      %s33 = scalar_select %p30, %s31, %s32
      %p36 = pneg %p30
      %p37 = scmp.eq.s32.totalorder %s9, 3
      %p38 = por %p36, %p37
      %p39 = scmp.ne.s32.totalorder %s31, %s34
      %p40 = scmp.eq.s32.totalorder %s9, 0
      %p41 = por %p39, %p40
      %p42 = scmp.ne.s32.totalorder %s31, %s34
      %p43 = scmp.eq.s32.totalorder %s14, 3
      %p44 = por %p42, %p43
      %p45 = scmp.ne.s32.totalorder %s34, %s35
      %p46 = scmp.eq.s32.totalorder %s14, 0
      %p47 = por %p45, %p46
      %p48 = scmp.ne.s32.totalorder %s34, %s35
      %p49 = scmp.eq.s32.totalorder %s15, 3
      %p50 = por %p48, %p49
      %p52 = scmp.ne.s32.totalorder %s35, %s51
      %p53 = scmp.eq.s32.totalorder %s15, 0
      %p54 = por %p52, %p53
      %s55 = ssub.s32 %s16, %s28
      %p56 = scmp.eq.s32.totalorder %s55, 0
      %s58 = sadd.s32 %s57, 1
      %s59 = scalar_select %p56, %s57, %s58
      %p62 = pneg %p56
      %p63 = scmp.eq.s32.totalorder %s9, 3
      %p64 = por %p62, %p63
      %p65 = scmp.ne.s32.totalorder %s57, %s60
      %p66 = scmp.eq.s32.totalorder %s9, 0
      %p67 = por %p65, %p66
      %p68 = scmp.ne.s32.totalorder %s57, %s60
      %p69 = scmp.eq.s32.totalorder %s14, 3
      %p70 = por %p68, %p69
      %p71 = scmp.ne.s32.totalorder %s60, %s61
      %p72 = scmp.eq.s32.totalorder %s14, 0
      %p73 = por %p71, %p72
      %p74 = scmp.ne.s32.totalorder %s60, %s61
      %p75 = scmp.eq.s32.totalorder %s15, 3
      %p76 = por %p74, %p75
      %p78 = scmp.ne.s32.totalorder %s61, %s77
      %p79 = scmp.eq.s32.totalorder %s15, 0
      %p80 = por %p78, %p79
      %s81 = ssub.s32 %s16, %s28
      %p82 = scmp.eq.s32.totalorder %s81, 0
      %s84 = sadd.s32 %s83, 1
      %s85 = scalar_select %p82, %s83, %s84
      %p88 = pneg %p82
      %p89 = scmp.eq.s32.totalorder %s9, 3
      %p90 = por %p88, %p89
      %p91 = scmp.ne.s32.totalorder %s83, %s86
      %p92 = scmp.eq.s32.totalorder %s9, 0
      %p93 = por %p91, %p92
      %p94 = scmp.ne.s32.totalorder %s83, %s86
      %p95 = scmp.eq.s32.totalorder %s14, 3
      %p96 = por %p94, %p95
      %p97 = scmp.ne.s32.totalorder %s86, %s87
      %p98 = scmp.eq.s32.totalorder %s14, 0
      %p99 = por %p97, %p98
      %p100 = scmp.ne.s32.totalorder %s86, %s87
      %p101 = scmp.eq.s32.totalorder %s15, 3
      %p102 = por %p100, %p101
      %p104 = scmp.ne.s32.totalorder %s87, %s103
      %p105 = scmp.eq.s32.totalorder %s15, 0
      %p106 = por %p104, %p105
      %s107 = ssub.s32 %s17, %s24
      %s108 = ssub.s32 %s16, %s28
      %s109 = sor.u32 %s107, %s108
      %p110 = scmp.eq.s32.totalorder %s109, 0
      %s112 = sadd.s32 %s111, 1
      %s113 = scalar_select %p110, %s111, %s112
      %p116 = pneg %p110
      %p117 = scmp.eq.s32.totalorder %s9, 3
      %p118 = por %p116, %p117
      %p119 = scmp.ne.s32.totalorder %s111, %s114
      %p120 = scmp.eq.s32.totalorder %s9, 0
      %p121 = por %p119, %p120
      %p122 = scmp.ne.s32.totalorder %s111, %s114
      %p123 = scmp.eq.s32.totalorder %s14, 3
      %p124 = por %p122, %p123
      %p125 = scmp.ne.s32.totalorder %s114, %s115
      %p126 = scmp.eq.s32.totalorder %s14, 0
      %p127 = por %p125, %p126
      %p128 = scmp.ne.s32.totalorder %s114, %s115
      %p129 = scmp.eq.s32.totalorder %s15, 3
      %p130 = por %p128, %p129
      %p132 = scmp.ne.s32.totalorder %s115, %s131
      %p133 = scmp.eq.s32.totalorder %s15, 0
      %p134 = por %p132, %p133
      %p135 = scmp.le.s32.totalorder 1, %s9
      %p136 = scmp.lt.s32.totalorder %s9, 5
      %p137 = pnand %p135, %p136
      %p138 = pneg %p137
      // Predicated region
      $region9: #{lmsnn_forward.5} parent=5 // pred_check
        _
      $region10: #{lmsnn_forward.5} parent=5 // pred_check_branch
        %140 = sbr.rel (%p137) target = $region12
      $region11: #{lmsnn_forward.5} parent=5 // pred_region
        %s141 = ssub.s32 %s9, 1
      $region12: #{lmsnn_forward.5} parent=5 // pred_fallthru
        _
      %p142 = scmp.lt.s32.totalorder %s9, 4
      // Predicated region
      $region13: #{lmsnn_forward.5} parent=5 // pred_check
        %p143 = pneg %p142
      $region14: #{lmsnn_forward.5} parent=5 // pred_check_branch
        %145 = sbr.rel (%p143) target = $region16
      $region15: #{lmsnn_forward.5} parent=5 // pred_region
        // Predicated region
        $region17: #{lmsnn_forward.5} parent=15 // pred_check
          %p146 = pneg %p41
        $region18: #{lmsnn_forward.5} parent=15 // pred_check_branch
          %148 = sbr.rel (%p146) target = $region20
        $region19: #{lmsnn_forward.5} parent=15 // pred_region
          %s149 = smul.u32 8, %s17
          %p150 = scmp.lt.s32.totalorder %s149, 15
          %s151 = scalar_select %p150, %s149, 15
          %s152 = smul.addr %s151, 4
          %s153 = scalar_lea.vmem %s0, %s152
          %s154 = smul.u32 8, %s17
        $region20: #{lmsnn_forward.5} parent=15 // pred_fallthru
          _
        // Predicated region
        $region21: #{lmsnn_forward.5} parent=15 // pred_check
          %p155 = pneg %p67
        $region22: #{lmsnn_forward.5} parent=15 // pred_check_branch
          %157 = sbr.rel (%p155) target = $region24
        $region23: #{lmsnn_forward.5} parent=15 // pred_region
          %s158 = sand.u32 %s57, 1
          %s159 = sand.u32 %s57, 1
          %s160 = smul.addr %s159, 64
          %s161 = scalar_lea.vmem [#allocation2], %s160
          %s162 = smul.addr %s16, 4
          %s163 = scalar_lea.vmem %s1, %s162
          // Predicated region
          $region25: #{lmsnn_forward.5} parent=23 // pred_check
            _
          $region26: #{lmsnn_forward.5} parent=23 // pred_check_branch
            %165 = sbr.rel (0) target = $region28
          $region27: #{lmsnn_forward.5} parent=23 // pred_region
            // Predicated region
            $region29: #{lmsnn_forward.5} parent=27 // pred_check
              _
            $region30: #{lmsnn_forward.5} parent=27 // pred_check_branch
              %167 = sbr.rel target = $region32
            $region31: #{lmsnn_forward.5} parent=27 // pred_region
              // Predicated region
              $region44: #{lmsnn_forward.5} parent=31 // pred_check
                _
              $region45: #{lmsnn_forward.5} parent=31 // pred_check_branch
                %213 = sbr.rel (0) target = $region47
              $region46: #{lmsnn_forward.5} parent=31 // pred_region
                loop: start=0, step=1, limit=1
                $region48: #{lmsnn_forward.5} parent=46 // loop_pre_header
                  _
                $region49: #{lmsnn_forward.5} parent=46 // loop_header
                  %s215 = sphi 0, %s219
                  %p216 = scmp.ge.s32.totalorder %s215, 1
                  %s220 = sphi %s163, %s163
                  %s221 = sphi %s161, %s161
                $region50: #{lmsnn_forward.5} parent=46 // loop_header_branch
                  %218 = sbr.rel (%p216) target = $region54
                $region51: #{lmsnn_forward.5} parent=46 // loop_body
                  _
                $region52: #{lmsnn_forward.5} parent=46 // loop_footer
                  %s219 = sadd.s32 1, %s215
                $region53: #{lmsnn_forward.5} parent=46 // loop_footer_branch
                  %214 = sbr.rel target = $region49
                $region54: #{lmsnn_forward.5} parent=46 // loop_exit
                  _
                %s223 = ssub.s32 16, 1
                loop: start=0, step=1, limit=1
                $region55: #{lmsnn_forward.5} parent=46 // loop_pre_header
                  _
                $region56: #{lmsnn_forward.5} parent=46 // loop_header
                  %s225 = sphi 0, %s229
                  %p226 = scmp.ge.s32.totalorder %s225, 1
                  %s230 = sphi %s163, %s163
                  %s231 = sphi %s161, %s161
                $region57: #{lmsnn_forward.5} parent=46 // loop_header_branch
                  %228 = sbr.rel (%p226) target = $region61
                $region58: #{lmsnn_forward.5} parent=46 // loop_body
                  %v232 = vld [vmem:[%s230] sm:%s223]
                  %233 = vst [vmem:[%s231] sm:%s223] %v232
                  %v234 = vld [vmem:[%s230 + $0x8] sm:%s223]
                  %235 = vst [vmem:[%s231 + $0x4] sm:%s223] %v234
                  %v236 = vld [vmem:[%s230 + $0x10] sm:%s223]
                  %237 = vst [vmem:[%s231 + $0x8] sm:%s223] %v236
                  %v238 = vld [vmem:[%s230 + $0x18] sm:%s223]
                  %239 = vst [vmem:[%s231 + $0xc] sm:%s223] %v238
                  %v240 = vld [vmem:[%s230 + $0x20] sm:%s223]
                  %241 = vst [vmem:[%s231 + $0x10] sm:%s223] %v240
                  %v242 = vld [vmem:[%s230 + $0x28] sm:%s223]
                  %243 = vst [vmem:[%s231 + $0x14] sm:%s223] %v242
                  %v244 = vld [vmem:[%s230 + $0x30] sm:%s223]
                  %245 = vst [vmem:[%s231 + $0x18] sm:%s223] %v244
                  %v246 = vld [vmem:[%s230 + $0x38] sm:%s223]
                  %247 = vst [vmem:[%s231 + $0x1c] sm:%s223] %v246
                  %v248 = vld [vmem:[%s230 + $0x40] sm:%s223]
                  %249 = vst [vmem:[%s231 + $0x20] sm:%s223] %v248
                  %v250 = vld [vmem:[%s230 + $0x48] sm:%s223]
                  %251 = vst [vmem:[%s231 + $0x24] sm:%s223] %v250
                  %v252 = vld [vmem:[%s230 + $0x50] sm:%s223]
                  %253 = vst [vmem:[%s231 + $0x28] sm:%s223] %v252
                  %v254 = vld [vmem:[%s230 + $0x58] sm:%s223]
                  %255 = vst [vmem:[%s231 + $0x2c] sm:%s223] %v254
                  %v256 = vld [vmem:[%s230 + $0x60] sm:%s223]
                  %257 = vst [vmem:[%s231 + $0x30] sm:%s223] %v256
                  %v258 = vld [vmem:[%s230 + $0x68] sm:%s223]
                  %259 = vst [vmem:[%s231 + $0x34] sm:%s223] %v258
                  %v260 = vld [vmem:[%s230 + $0x70] sm:%s223]
                  %261 = vst [vmem:[%s231 + $0x38] sm:%s223] %v260
                  %v262 = vld [vmem:[%s230 + $0x78] sm:%s223]
                  %263 = vst [vmem:[%s231 + $0x3c] sm:%s223] %v262
                $region59: #{lmsnn_forward.5} parent=46 // loop_footer
                  %s229 = sadd.s32 1, %s225
                $region60: #{lmsnn_forward.5} parent=46 // loop_footer_branch
                  %224 = sbr.rel target = $region56
                $region61: #{lmsnn_forward.5} parent=46 // loop_exit
                  _
              $region47: #{lmsnn_forward.5} parent=31 // pred_fallthru
                _
            $region32: #{lmsnn_forward.5} parent=27 // pred_fallthru
              _
            // Predicated region
            $region33: #{lmsnn_forward.5} parent=27 // pred_check
              _
            $region34: #{lmsnn_forward.5} parent=27 // pred_check_branch
              %169 = sbr.rel (0) target = $region36
            $region35: #{lmsnn_forward.5} parent=27 // pred_region
              %s171 = ssub.s32 16, 1
              loop: start=0, step=1, limit=1
              $region37: #{lmsnn_forward.5} parent=35 // loop_pre_header
                _
              $region38: #{lmsnn_forward.5} parent=35 // loop_header
                %s173 = sphi 0, %s177
                %p174 = scmp.ge.s32.totalorder %s173, 1
                %s178 = sphi %s163, %s163
                %s179 = sphi %s161, %s161
              $region39: #{lmsnn_forward.5} parent=35 // loop_header_branch
                %176 = sbr.rel (%p174) target = $region43
              $region40: #{lmsnn_forward.5} parent=35 // loop_body
                %v180 = vld [vmem:[%s178] sm:%s171]
                %181 = vst [vmem:[%s179] sm:%s171] %v180
                %v182 = vld [vmem:[%s178 + $0x8] sm:%s171]
                %183 = vst [vmem:[%s179 + $0x4] sm:%s171] %v182
                %v184 = vld [vmem:[%s178 + $0x10] sm:%s171]
                %185 = vst [vmem:[%s179 + $0x8] sm:%s171] %v184
                %v186 = vld [vmem:[%s178 + $0x18] sm:%s171]
                %187 = vst [vmem:[%s179 + $0xc] sm:%s171] %v186
                %v188 = vld [vmem:[%s178 + $0x20] sm:%s171]
                %189 = vst [vmem:[%s179 + $0x10] sm:%s171] %v188
                %v190 = vld [vmem:[%s178 + $0x28] sm:%s171]
                %191 = vst [vmem:[%s179 + $0x14] sm:%s171] %v190
                %v192 = vld [vmem:[%s178 + $0x30] sm:%s171]
                %193 = vst [vmem:[%s179 + $0x18] sm:%s171] %v192
                %v194 = vld [vmem:[%s178 + $0x38] sm:%s171]
                %195 = vst [vmem:[%s179 + $0x1c] sm:%s171] %v194
                %v196 = vld [vmem:[%s178 + $0x40] sm:%s171]
                %197 = vst [vmem:[%s179 + $0x20] sm:%s171] %v196
                %v198 = vld [vmem:[%s178 + $0x48] sm:%s171]
                %199 = vst [vmem:[%s179 + $0x24] sm:%s171] %v198
                %v200 = vld [vmem:[%s178 + $0x50] sm:%s171]
                %201 = vst [vmem:[%s179 + $0x28] sm:%s171] %v200
                %v202 = vld [vmem:[%s178 + $0x58] sm:%s171]
                %203 = vst [vmem:[%s179 + $0x2c] sm:%s171] %v202
                %v204 = vld [vmem:[%s178 + $0x60] sm:%s171]
                %205 = vst [vmem:[%s179 + $0x30] sm:%s171] %v204
                %v206 = vld [vmem:[%s178 + $0x68] sm:%s171]
                %207 = vst [vmem:[%s179 + $0x34] sm:%s171] %v206
                %v208 = vld [vmem:[%s178 + $0x70] sm:%s171]
                %209 = vst [vmem:[%s179 + $0x38] sm:%s171] %v208
                %v210 = vld [vmem:[%s178 + $0x78] sm:%s171]
                %211 = vst [vmem:[%s179 + $0x3c] sm:%s171] %v210
              $region41: #{lmsnn_forward.5} parent=35 // loop_footer
                %s177 = sadd.s32 1, %s173
              $region42: #{lmsnn_forward.5} parent=35 // loop_footer_branch
                %172 = sbr.rel target = $region38
              $region43: #{lmsnn_forward.5} parent=35 // loop_exit
                _
            $region36: #{lmsnn_forward.5} parent=27 // pred_fallthru
              _
          $region28: #{lmsnn_forward.5} parent=23 // pred_fallthru
            _
          %264 = vnop
        $region24: #{lmsnn_forward.5} parent=15 // pred_fallthru
          _
        // Predicated region
        $region62: #{lmsnn_forward.5} parent=15 // pred_check
          %p265 = pneg %p93
        $region63: #{lmsnn_forward.5} parent=15 // pred_check_branch
          %267 = sbr.rel (%p265) target = $region65
        $region64: #{lmsnn_forward.5} parent=15 // pred_region
          %p268 = scmp.lt.s32.totalorder %s16, 1
          %s269 = scalar_select %p268, %s16, 1
          %s270 = scalar_lea.vmem %s2, %s269
        $region65: #{lmsnn_forward.5} parent=15 // pred_fallthru
          _
      $region16: #{lmsnn_forward.5} parent=5 // pred_fallthru
        _
      %p271 = scmp.le.s32.totalorder 1, %s9
      %p272 = scmp.lt.s32.totalorder %s9, 5
      %p273 = pnand %p271, %p272
      %p274 = pneg %p273
      // Predicated region
      $region66: #{lmsnn_forward.5} parent=5 // pred_check
        _
      $region67: #{lmsnn_forward.5} parent=5 // pred_check_branch
        %276 = sbr.rel (%p273) target = $region69
      $region68: #{lmsnn_forward.5} parent=5 // pred_region
        %s277 = ssub.s32 %s9, 1
        %s278 = sand.u32 %s60, 1
        %s279 = sand.u32 %s60, 1
        %s280 = smul.addr %s279, 64
        %s281 = scalar_lea.vmem [#allocation2], %s280
        // Predicated region
        $region70: #{lmsnn_forward.5} parent=68 // pred_check
          %p282 = pneg %p73
        $region71: #{lmsnn_forward.5} parent=68 // pred_check_branch
          %284 = sbr.rel (%p282) target = $region73
        $region72: #{lmsnn_forward.5} parent=68 // pred_region
          _
        $region73: #{lmsnn_forward.5} parent=68 // pred_fallthru
          _
        %s285 = smul.u32 8, %s19
        %p286 = scmp.lt.s32.totalorder %s285, 15
        %s287 = scalar_select %p286, %s285, 15
        %s288 = smul.addr %s287, 4
        %s289 = scalar_lea.vmem %s0, %s288
        %p290 = pneg %p47
        %p291 = pneg %p44
        %s292 = sand.u32 %s60, 1
        %s293 = sand.u32 %s60, 1
        %s294 = smul.addr %s293, 64
        %s295 = scalar_lea.vmem [#allocation2], %s294
        %p296 = pneg %p73
        %p297 = pneg %p70
        %p298 = scmp.lt.s32.totalorder %s18, 1
        %s299 = scalar_select %p298, %s18, 1
        %s300 = scalar_lea.vmem %s2, %s299
        %p301 = pneg %p99
        %p302 = pneg %p96
        %p303 = pneg %p127
        %p304 = pneg %p124
        %s305 = sand.u32 %s114, 1
        %s306 = sand.u32 %s114, 1
        %s307 = smul.addr %s306, 64
        %s308 = scalar_lea.vmem [#allocation3], %s307
        %s309 = smul.u32 8, %s19
        %p310 = scmp.lt.s32.totalorder %s309, 15
        %s311 = scalar_select %p310, %s309, 15
        %s312 = smul.addr %s311, 4
        %s313 = scalar_lea.vmem %s0, %s312
        %s314 = smul.u32 8, %s19
        %p315 = scmp.lt.s32.totalorder %s18, 1
        %s316 = scalar_select %p315, %s18, 1
        %s317 = scalar_lea.vmem %s2, %s316
        %s318 = smul.u32 8, %s19
        %v320 = vld [vmem:[%s313] sm:$0xf]
        %v321 = vld [vmem:[%s313 + $0x4] sm:$0xf]
        %v322 = vld [vmem:[%s313 + $0x8] sm:$0xf]
        %v323 = vld [vmem:[%s313 + $0xc] sm:$0xf]
        %v324 = vld [vmem:[%s313 + $0x10] sm:$0xf]
        %v325 = vld [vmem:[%s313 + $0x14] sm:$0xf]
        %v326 = vld [vmem:[%s313 + $0x18] sm:$0xf]
        %v327 = vld [vmem:[%s313 + $0x1c] sm:$0xf]
        %v328 = vld [vmem:[%s281] sm:$0xf]
        %v329 = vld [vmem:[%s281 + $0x4] sm:$0xf]
        %v330 = vld [vmem:[%s281 + $0x8] sm:$0xf]
        %v331 = vld [vmem:[%s281 + $0xc] sm:$0xf]
        %v332 = vld [vmem:[%s281 + $0x10] sm:$0xf]
        %v333 = vld [vmem:[%s281 + $0x14] sm:$0xf]
        %v334 = vld [vmem:[%s281 + $0x18] sm:$0xf]
        %v335 = vld [vmem:[%s281 + $0x1c] sm:$0xf]
        %v336 = vld [vmem:[%s281 + $0x20] sm:$0xf]
        %v337 = vld [vmem:[%s281 + $0x24] sm:$0xf]
        %v338 = vld [vmem:[%s281 + $0x28] sm:$0xf]
        %v339 = vld [vmem:[%s281 + $0x2c] sm:$0xf]
        %v340 = vld [vmem:[%s281 + $0x30] sm:$0xf]
        %v341 = vld [vmem:[%s281 + $0x34] sm:$0xf]
        %v342 = vld [vmem:[%s281 + $0x38] sm:$0xf]
        %v343 = vld [vmem:[%s281 + $0x3c] sm:$0xf]
        %v344 = vld [vmem:[%s317] sm:$0x1]
        %v346 = vlaneseq
        %v347 = vshrl.u32 %v346, 7
        %v348 = vsub.s32 0, %v347
        %v349 = vrot.slane %v344, %v348
        %v359 = vunpack.c.l.b16 %v320
        %v360 = vunpack.c.l.b16 %v321
        %v361 = vunpack.c.l.b16 %v322
        %v362 = vunpack.c.l.b16 %v323
        %v363 = vunpack.c.l.b16 %v324
        %v364 = vunpack.c.l.b16 %v325
        %v365 = vunpack.c.l.b16 %v326
        %v366 = vunpack.c.l.b16 %v327
        %v367 = vpack.c.b16 %v360, %v359
        %v368 = vpack.c.b16 %v362, %v361
        %v369 = vpack.c.b16 %v364, %v363
        %v370 = vpack.c.b16 %v366, %v365
        %v391 = vunpack.c.l.b16 %v328
        %v392 = vunpack.c.l.b16 %v329
        %v393 = vunpack.c.l.b16 %v330
        %v394 = vunpack.c.l.b16 %v331
        %v395 = vunpack.c.l.b16 %v332
        %v396 = vunpack.c.l.b16 %v333
        %v397 = vunpack.c.l.b16 %v334
        %v398 = vunpack.c.l.b16 %v335
        %v399 = vunpack.c.l.b16 %v336
        %v400 = vunpack.c.l.b16 %v337
        %v401 = vunpack.c.l.b16 %v338
        %v402 = vunpack.c.l.b16 %v339
        %v403 = vunpack.c.l.b16 %v340
        %v404 = vunpack.c.l.b16 %v341
        %v405 = vunpack.c.l.b16 %v342
        %v406 = vunpack.c.l.b16 %v343
        %v407 = vpack.c.b16 %v392, %v391
        %v408 = vpack.c.b16 %v394, %v393
        %v409 = vpack.c.b16 %v396, %v395
        %v410 = vpack.c.b16 %v398, %v397
        %v411 = vpack.c.b16 %v400, %v399
        %v412 = vpack.c.b16 %v402, %v401
        %v413 = vpack.c.b16 %v404, %v403
        %v414 = vpack.c.b16 %v406, %v405
        %423 = vmatprep.subr.bf16.mxu0 0
        %424 = vmatpush1.bf16.msra.mxu0 %v414
        %425 = vmatprep.subr.bf16.mxu0 0
        %426 = vmatpush1.bf16.msra.mxu0 %v413
        %427 = vmatprep.subr.bf16.mxu0 0
        %428 = vmatpush1.bf16.msra.mxu0 %v412
        %429 = vmatprep.subr.bf16.mxu0 0
        %430 = vmatpush1.bf16.msra.mxu0 %v411
        %431 = vmatprep.subr.bf16.mxu0 0
        %432 = vmatpush1.bf16.msra.mxu0 %v410
        %433 = vmatprep.subr.bf16.mxu0 0
        %434 = vmatpush1.bf16.msra.mxu0 %v409
        %435 = vmatprep.subr.bf16.mxu0 0
        %436 = vmatpush1.bf16.msra.mxu0 %v408
        %437 = vmatprep.subr.bf16.mxu0 0
        %438 = vmatpush1.bf16.msra.mxu0 %v407
        %439 = vmatprep.subr.bf16.mxu0 0
        %440 = vmatpush2.bf16.msra.mxu0 0
        %441 = vmatprep.subr.bf16.mxu0 0
        %442 = vmatpush2.bf16.msra.mxu0 0
        %443 = vmatprep.subr.bf16.mxu0 0
        %444 = vmatpush2.bf16.msra.mxu0 0
        %445 = vmatprep.subr.bf16.mxu0 0
        %446 = vmatpush2.bf16.msra.mxu0 0
        %447 = vmatprep.subr.bf16.mxu0 0
        %448 = vmatpush2.bf16.msra.mxu0 0
        %449 = vmatprep.subr.bf16.mxu0 0
        %450 = vmatpush2.bf16.msra.mxu0 0
        %451 = vmatprep.subr.bf16.mxu0 0
        %452 = vmatpush2.bf16.msra.mxu0 0
        %453 = vmatprep.subr.bf16.mxu0 0
        %454 = vmatpush2.bf16.msra.mxu0 0
        %455 = vmatprep.mubr.bf16.mxu0 0
        %456 = vmatmul.mubr.bf16.gmra.mxu0 %v367
        %v457 = vpop.f32.mrf.mxu0
        %v458 = vadd.f32 %v349, %v457
        %v459 = vpop.f32.mrf.mxu0
        %v460 = vpop.f32.mrf.mxu0
        %v461 = vadd.f32 %v349, %v460
        %v462 = vpop.f32.mrf.mxu0
        %463 = vmatprep.mubr.bf16.mxu0 0
        %464 = vmatmul.mubr.bf16.gmra.mxu0 %v368
        %v465 = vpop.f32.mrf.mxu0
        %v466 = vadd.f32 %v349, %v465
        %v467 = vpop.f32.mrf.mxu0
        %v468 = vpop.f32.mrf.mxu0
        %v469 = vadd.f32 %v349, %v468
        %v470 = vpop.f32.mrf.mxu0
        %471 = vmatprep.mubr.bf16.mxu0 0
        %472 = vmatmul.mubr.bf16.gmra.mxu0 %v369
        %v473 = vpop.f32.mrf.mxu0
        %v474 = vadd.f32 %v349, %v473
        %v475 = vpop.f32.mrf.mxu0
        %v476 = vpop.f32.mrf.mxu0
        %v477 = vadd.f32 %v349, %v476
        %v478 = vpop.f32.mrf.mxu0
        %479 = vmatprep.mubr.bf16.mxu0 0
        %480 = vmatmul.mubr.bf16.gmra.mxu0 %v370
        %v481 = vpop.f32.mrf.mxu0
        %v482 = vadd.f32 %v349, %v481
        %v483 = vpop.f32.mrf.mxu0
        %v484 = vpop.f32.mrf.mxu0
        %v485 = vadd.f32 %v349, %v484
        %v486 = vpop.f32.mrf.mxu0
        %487 = vdwg.mxu0
        %488 = vst [vmem:[%s308] sm:$0xff] %v458
        %489 = vst [vmem:[%s308 + $0x8] sm:$0xff] %v461
        %490 = vst [vmem:[%s308 + $0x10] sm:$0xff] %v466
        %491 = vst [vmem:[%s308 + $0x18] sm:$0xff] %v469
        %492 = vst [vmem:[%s308 + $0x20] sm:$0xff] %v474
        %493 = vst [vmem:[%s308 + $0x28] sm:$0xff] %v477
        %494 = vst [vmem:[%s308 + $0x30] sm:$0xff] %v482
        %495 = vst [vmem:[%s308 + $0x38] sm:$0xff] %v485
        %s496 = sand.u32 %s114, 1
        %s497 = sand.u32 %s114, 1
        %s498 = smul.addr %s497, 64
        %s499 = scalar_lea.vmem [#allocation3], %s498
        // Predicated region
        $region74: #{lmsnn_forward.5} parent=68 // pred_check
          %p500 = pneg %p124
        $region75: #{lmsnn_forward.5} parent=68 // pred_check_branch
          %502 = sbr.rel (%p500) target = $region77
        $region76: #{lmsnn_forward.5} parent=68 // pred_region
          %s503 = smul.u32 8, %s19
          %s504 = smul.addr %s503, 2
          %s505 = sadd.s32 %s18, %s504
          %s506 = smul.addr %s505, 8
          %s507 = scalar_lea.vmem %s3, %s506
          // Predicated region
          $region78: #{lmsnn_forward.5} parent=76 // pred_check
            _
          $region79: #{lmsnn_forward.5} parent=76 // pred_check_branch
            %509 = sbr.rel (0) target = $region81
          $region80: #{lmsnn_forward.5} parent=76 // pred_region
            // Predicated region
            $region82: #{lmsnn_forward.5} parent=80 // pred_check
              _
            $region83: #{lmsnn_forward.5} parent=80 // pred_check_branch
              %511 = sbr.rel (0) target = $region85
            $region84: #{lmsnn_forward.5} parent=80 // pred_region
              // Predicated region
              $region97: #{lmsnn_forward.5} parent=84 // pred_check
                _
              $region98: #{lmsnn_forward.5} parent=84 // pred_check_branch
                %541 = sbr.rel (0) target = $region100
              $region99: #{lmsnn_forward.5} parent=84 // pred_region
                loop: start=0, step=1, limit=1
                $region101: #{lmsnn_forward.5} parent=99 // loop_pre_header
                  _
                $region102: #{lmsnn_forward.5} parent=99 // loop_header
                  %s543 = sphi 0, %s547
                  %p544 = scmp.ge.s32.totalorder %s543, 1
                  %s548 = sphi %s499, %s499
                  %s549 = sphi %s507, %s507
                $region103: #{lmsnn_forward.5} parent=99 // loop_header_branch
                  %546 = sbr.rel (%p544) target = $region107
                $region104: #{lmsnn_forward.5} parent=99 // loop_body
                  %v550 = vld [vmem:[%s548] sm:$0xff]
                  %551 = vst [vmem:[%s549] sm:$0xff] %v550
                  %v552 = vld [vmem:[%s548 + $0x8] sm:$0xff]
                  %553 = vst [vmem:[%s549 + $0x10] sm:$0xff] %v552
                  %v554 = vld [vmem:[%s548 + $0x10] sm:$0xff]
                  %555 = vst [vmem:[%s549 + $0x20] sm:$0xff] %v554
                  %v556 = vld [vmem:[%s548 + $0x18] sm:$0xff]
                  %557 = vst [vmem:[%s549 + $0x30] sm:$0xff] %v556
                  %v558 = vld [vmem:[%s548 + $0x20] sm:$0xff]
                  %559 = vst [vmem:[%s549 + $0x40] sm:$0xff] %v558
                  %v560 = vld [vmem:[%s548 + $0x28] sm:$0xff]
                  %561 = vst [vmem:[%s549 + $0x50] sm:$0xff] %v560
                  %v562 = vld [vmem:[%s548 + $0x30] sm:$0xff]
                  %563 = vst [vmem:[%s549 + $0x60] sm:$0xff] %v562
                  %v564 = vld [vmem:[%s548 + $0x38] sm:$0xff]
                  %565 = vst [vmem:[%s549 + $0x70] sm:$0xff] %v564
                $region105: #{lmsnn_forward.5} parent=99 // loop_footer
                  %s547 = sadd.s32 1, %s543
                $region106: #{lmsnn_forward.5} parent=99 // loop_footer_branch
                  %542 = sbr.rel target = $region102
                $region107: #{lmsnn_forward.5} parent=99 // loop_exit
                  _
              $region100: #{lmsnn_forward.5} parent=84 // pred_fallthru
                _
              // Predicated region
              $region108: #{lmsnn_forward.5} parent=84 // pred_check
                _
              $region109: #{lmsnn_forward.5} parent=84 // pred_check_branch
                %567 = sbr.rel target = $region111
              $region110: #{lmsnn_forward.5} parent=84 // pred_region
                _
              $region111: #{lmsnn_forward.5} parent=84 // pred_fallthru
                _
            $region85: #{lmsnn_forward.5} parent=80 // pred_fallthru
              _
            // Predicated region
            $region86: #{lmsnn_forward.5} parent=80 // pred_check
              _
            $region87: #{lmsnn_forward.5} parent=80 // pred_check_branch
              %513 = sbr.rel target = $region89
            $region88: #{lmsnn_forward.5} parent=80 // pred_region
              %s515 = ssub.s32 256, 1
              loop: start=0, step=1, limit=1
              $region90: #{lmsnn_forward.5} parent=88 // loop_pre_header
                _
              $region91: #{lmsnn_forward.5} parent=88 // loop_header
                %s517 = sphi 0, %s521
                %p518 = scmp.ge.s32.totalorder %s517, 1
                %s522 = sphi %s499, %s499
                %s523 = sphi %s507, %s507
              $region92: #{lmsnn_forward.5} parent=88 // loop_header_branch
                %520 = sbr.rel (%p518) target = $region96
              $region93: #{lmsnn_forward.5} parent=88 // loop_body
                %v524 = vld [vmem:[%s522] sm:%s515]
                %525 = vst [vmem:[%s523] sm:%s515] %v524
                %v526 = vld [vmem:[%s522 + $0x8] sm:%s515]
                %527 = vst [vmem:[%s523 + $0x10] sm:%s515] %v526
                %v528 = vld [vmem:[%s522 + $0x10] sm:%s515]
                %529 = vst [vmem:[%s523 + $0x20] sm:%s515] %v528
                %v530 = vld [vmem:[%s522 + $0x18] sm:%s515]
                %531 = vst [vmem:[%s523 + $0x30] sm:%s515] %v530
                %v532 = vld [vmem:[%s522 + $0x20] sm:%s515]
                %533 = vst [vmem:[%s523 + $0x40] sm:%s515] %v532
                %v534 = vld [vmem:[%s522 + $0x28] sm:%s515]
                %535 = vst [vmem:[%s523 + $0x50] sm:%s515] %v534
                %v536 = vld [vmem:[%s522 + $0x30] sm:%s515]
                %537 = vst [vmem:[%s523 + $0x60] sm:%s515] %v536
                %v538 = vld [vmem:[%s522 + $0x38] sm:%s515]
                %539 = vst [vmem:[%s523 + $0x70] sm:%s515] %v538
              $region94: #{lmsnn_forward.5} parent=88 // loop_footer
                %s521 = sadd.s32 1, %s517
              $region95: #{lmsnn_forward.5} parent=88 // loop_footer_branch
                %516 = sbr.rel target = $region91
              $region96: #{lmsnn_forward.5} parent=88 // loop_exit
                _
            $region89: #{lmsnn_forward.5} parent=80 // pred_fallthru
              _
          $region81: #{lmsnn_forward.5} parent=76 // pred_fallthru
            _
          %568 = vnop
        $region77: #{lmsnn_forward.5} parent=68 // pred_fallthru
          _
      $region69: #{lmsnn_forward.5} parent=5 // pred_fallthru
        _
      %p569 = scmp.le.s32.totalorder 2, %s9
      // Predicated region
      $region112: #{lmsnn_forward.5} parent=5 // pred_check
        %p570 = pneg %p569
      $region113: #{lmsnn_forward.5} parent=5 // pred_check_branch
        %572 = sbr.rel (%p570) target = $region115
      $region114: #{lmsnn_forward.5} parent=5 // pred_region
        %s573 = ssub.s32 %s9, 2
        // Predicated region
        $region116: #{lmsnn_forward.5} parent=114 // pred_check
          %p574 = pneg %p130
        $region117: #{lmsnn_forward.5} parent=114 // pred_check_branch
          %576 = sbr.rel (%p574) target = $region119
        $region118: #{lmsnn_forward.5} parent=114 // pred_region
          %s577 = sand.u32 %s115, 1
          %s578 = sand.u32 %s115, 1
          %s579 = smul.addr %s578, 64
          %s580 = scalar_lea.vmem [#allocation3], %s579
        $region119: #{lmsnn_forward.5} parent=114 // pred_fallthru
          _
      $region115: #{lmsnn_forward.5} parent=5 // pred_fallthru
        _
    $region6: #{lmsnn_forward.5} parent=1 // loop_footer
      %s13 = sadd.s32 1, %s9
    $region7: #{lmsnn_forward.5} parent=1 // loop_footer_branch
      %8 = sbr.rel target = $region3
    $region8: #{lmsnn_forward.5} parent=1 // loop_exit
      _

// kernel: lmsnn_forward.3
$region0: #{lmsnn_forward.3}
  #allocation0 [shape = 'u32[]', space=smem, size = 0x4, offset = 0x4, fixed_abs, tag = 'smem constant byte address 0x4 - core index']
  #allocation1 [shape = 'u32[144,128]{1,0:T(1,128)}', space=vmem, size = 0x12000, scoped, tag = 'internal scratch']
  #allocation2 [shape = 'f32[2,64,128]{2,1,0:T(8,128)}', space=vmem, size = 0x10000, scoped, tag = 'scratch operand']
  %s0 = inlined_call_operand.vmem [shape: bf16[128,128], index: 0, kind: input, shape index: {}]
  %s1 = inlined_call_operand.vmem [shape: bf16[128,256], index: 1, kind: input, shape index: {}]
  %s2 = inlined_call_operand.vmem [shape: f32[1,256], index: 2, kind: input, shape index: {}]
  %s3 = inlined_call_operand.vmem [shape: f32[16,256], index: 3, kind: input, shape index: {}]
  %s4 = inlined_call_operand.vmem [shape: f32[16,256], index: 4, kind: input, shape index: {}]
  %s5 = inlined_call_operand.vmem [shape: f32[16,256], index: 5, kind: input, shape index: {}]
  %s6 = inlined_call_operand.vmem [shape: bf16[8,16,256], index: 6, kind: output, shape index: {0}]
  %s7 = inlined_call_operand.vmem [shape: f32[16,256], index: 7, kind: output, shape index: {1}]
  %s8 = inlined_call_operand.vmem [shape: f32[16,256], index: 8, kind: output, shape index: {2}]
  %9 = xla_tuple %s6, %s7, %s8
  %s10 = sld [smem:[#allocation0]]
  $region340: #{lmsnn_forward.3} parent=0
    _
  %s12 = ssub.s32 1, %s10
  %s13 = scalar_select 0, %s12, %s10
  $region1: #{lmsnn_forward.3} parent=0
    #allocation3 [shape = 'u8[65536]{0}', space=vmem, size = 0x10000, scoped, tag = 'input window, operand 1']
    #allocation4 [shape = 'u8[16384]{0}', space=vmem, size = 0x4000, scoped, tag = 'input window, operand 3']
    #allocation5 [shape = 'u8[16384]{0}', space=vmem, size = 0x4000, scoped, tag = 'input window, operand 4']
    #allocation6 [shape = 'u8[16384]{0}', space=vmem, size = 0x4000, scoped, tag = 'input window, operand 5']
    #allocation7 [shape = 'u8[65536]{0}', space=vmem, size = 0x10000, scoped, tag = 'output window, operand 0']
    #allocation8 [shape = 'u8[16384]{0}', space=vmem, size = 0x4000, scoped, tag = 'output window, operand 1']
    #allocation9 [shape = 'u8[16384]{0}', space=vmem, size = 0x4000, scoped, tag = 'output window, operand 2']
    loop: start=0, step=1, limit=4
    $region2: #{lmsnn_forward.3} parent=1 // loop_pre_header
      _
    $region3: #{lmsnn_forward.3} parent=1 // loop_header
      %s15 = sphi 0, %s19
      %p16 = scmp.ge.s32.totalorder %s15, 4
      %s23 = sphi 0, %s23
      %s25 = sphi 0, %s23
      %s26 = sphi 0, %s25
      %s40 = sphi 0, %s26
      %s46 = sphi 0, %s48
      %s49 = sphi 0, %s46
      %s50 = sphi 0, %s49
      %s66 = sphi 0, %s50
      %s72 = sphi 0, %s74
      %s75 = sphi 0, %s72
      %s76 = sphi 0, %s75
      %s92 = sphi 0, %s76
      %s98 = sphi 0, %s100
      %s101 = sphi 0, %s98
      %s102 = sphi 0, %s101
      %s118 = sphi 0, %s102
      %s124 = sphi 0, %s126
      %s127 = sphi 0, %s124
      %s128 = sphi 0, %s127
      %s144 = sphi 0, %s128
      %s150 = sphi 0, %s152
      %s153 = sphi 0, %s150
      %s154 = sphi 0, %s153
      %s170 = sphi 0, %s154
      %s176 = sphi 0, %s178
      %s179 = sphi 0, %s176
      %s180 = sphi 0, %s179
      %s196 = sphi 0, %s180
      %s202 = sphi 0, %s204
      %s205 = sphi 0, %s202
      %s206 = sphi 0, %s205
      %s222 = sphi 0, %s206
      %s228 = sphi 0, %s230
      %s231 = sphi 0, %s228
      %s232 = sphi 0, %s231
      %s248 = sphi 0, %s232
    $region4: #{lmsnn_forward.3} parent=1 // loop_header_branch
      %18 = sbr.rel (%p16) target = $region8
    $region5: #{lmsnn_forward.3} parent=1 // loop_body
      %s20 = ssub.s32 %s15, 1
      %s21 = ssub.s32 %s15, 2
      %s22 = sadd.s32 %s15, 1
      %s24 = sadd.s32 %s23, 1
      %p27 = scmp.eq.s32.totalorder %s15, 1
      %p28 = scmp.ne.s32.totalorder %s23, %s25
      %p29 = scmp.eq.s32.totalorder %s15, 0
      %p30 = por %p28, %p29
      %p31 = scmp.ne.s32.totalorder %s23, %s25
      %p32 = scmp.eq.s32.totalorder %s20, 1
      %p33 = por %p31, %p32
      %p34 = scmp.ne.s32.totalorder %s25, %s26
      %p35 = scmp.eq.s32.totalorder %s20, 0
      %p36 = por %p34, %p35
      %p37 = scmp.ne.s32.totalorder %s25, %s26
      %p38 = scmp.eq.s32.totalorder %s21, 1
      %p39 = por %p37, %p38
      %p41 = scmp.ne.s32.totalorder %s26, %s40
      %p42 = scmp.eq.s32.totalorder %s21, 0
      %p43 = por %p41, %p42
      %s44 = ssub.s32 %s15, %s22
      %p45 = scmp.eq.s32.totalorder %s44, 0
      %s47 = sadd.s32 %s46, 1
      %s48 = scalar_select %p45, %s46, %s47
      %p51 = pneg %p45
      %p52 = scmp.eq.s32.totalorder %s15, 1
      %p53 = por %p51, %p52
      %p54 = scmp.ne.s32.totalorder %s46, %s49
      %p55 = scmp.eq.s32.totalorder %s15, 0
      %p56 = por %p54, %p55
      %p57 = scmp.ne.s32.totalorder %s46, %s49
      %p58 = scmp.eq.s32.totalorder %s20, 1
      %p59 = por %p57, %p58
      %p60 = scmp.ne.s32.totalorder %s49, %s50
      %p61 = scmp.eq.s32.totalorder %s20, 0
      %p62 = por %p60, %p61
      %p63 = scmp.ne.s32.totalorder %s49, %s50
      %p64 = scmp.eq.s32.totalorder %s21, 1
      %p65 = por %p63, %p64
      %p67 = scmp.ne.s32.totalorder %s50, %s66
      %p68 = scmp.eq.s32.totalorder %s21, 0
      %p69 = por %p67, %p68
      %s70 = ssub.s32 %s15, %s22
      %p71 = scmp.eq.s32.totalorder %s70, 0
      %s73 = sadd.s32 %s72, 1
      %s74 = scalar_select %p71, %s72, %s73
      %p77 = pneg %p71
      %p78 = scmp.eq.s32.totalorder %s15, 1
      %p79 = por %p77, %p78
      %p80 = scmp.ne.s32.totalorder %s72, %s75
      %p81 = scmp.eq.s32.totalorder %s15, 0
      %p82 = por %p80, %p81
      %p83 = scmp.ne.s32.totalorder %s72, %s75
      %p84 = scmp.eq.s32.totalorder %s20, 1
      %p85 = por %p83, %p84
      %p86 = scmp.ne.s32.totalorder %s75, %s76
      %p87 = scmp.eq.s32.totalorder %s20, 0
      %p88 = por %p86, %p87
      %p89 = scmp.ne.s32.totalorder %s75, %s76
      %p90 = scmp.eq.s32.totalorder %s21, 1
      %p91 = por %p89, %p90
      %p93 = scmp.ne.s32.totalorder %s76, %s92
      %p94 = scmp.eq.s32.totalorder %s21, 0
      %p95 = por %p93, %p94
      %s96 = ssub.s32 %s15, %s22
      %p97 = scmp.eq.s32.totalorder %s96, 0
      %s99 = sadd.s32 %s98, 1
      %s100 = scalar_select %p97, %s98, %s99
      %p103 = pneg %p97
      %p104 = scmp.eq.s32.totalorder %s15, 1
      %p105 = por %p103, %p104
      %p106 = scmp.ne.s32.totalorder %s98, %s101
      %p107 = scmp.eq.s32.totalorder %s15, 0
      %p108 = por %p106, %p107
      %p109 = scmp.ne.s32.totalorder %s98, %s101
      %p110 = scmp.eq.s32.totalorder %s20, 1
      %p111 = por %p109, %p110
      %p112 = scmp.ne.s32.totalorder %s101, %s102
      %p113 = scmp.eq.s32.totalorder %s20, 0
      %p114 = por %p112, %p113
      %p115 = scmp.ne.s32.totalorder %s101, %s102
      %p116 = scmp.eq.s32.totalorder %s21, 1
      %p117 = por %p115, %p116
      %p119 = scmp.ne.s32.totalorder %s102, %s118
      %p120 = scmp.eq.s32.totalorder %s21, 0
      %p121 = por %p119, %p120
      %s122 = ssub.s32 %s15, %s22
      %p123 = scmp.eq.s32.totalorder %s122, 0
      %s125 = sadd.s32 %s124, 1
      %s126 = scalar_select %p123, %s124, %s125
      %p129 = pneg %p123
      %p130 = scmp.eq.s32.totalorder %s15, 1
      %p131 = por %p129, %p130
      %p132 = scmp.ne.s32.totalorder %s124, %s127
      %p133 = scmp.eq.s32.totalorder %s15, 0
      %p134 = por %p132, %p133
      %p135 = scmp.ne.s32.totalorder %s124, %s127
      %p136 = scmp.eq.s32.totalorder %s20, 1
      %p137 = por %p135, %p136
      %p138 = scmp.ne.s32.totalorder %s127, %s128
      %p139 = scmp.eq.s32.totalorder %s20, 0
      %p140 = por %p138, %p139
      %p141 = scmp.ne.s32.totalorder %s127, %s128
      %p142 = scmp.eq.s32.totalorder %s21, 1
      %p143 = por %p141, %p142
      %p145 = scmp.ne.s32.totalorder %s128, %s144
      %p146 = scmp.eq.s32.totalorder %s21, 0
      %p147 = por %p145, %p146
      %s148 = ssub.s32 %s15, %s22
      %p149 = scmp.eq.s32.totalorder %s148, 0
      %s151 = sadd.s32 %s150, 1
      %s152 = scalar_select %p149, %s150, %s151
      %p155 = pneg %p149
      %p156 = scmp.eq.s32.totalorder %s15, 1
      %p157 = por %p155, %p156
      %p158 = scmp.ne.s32.totalorder %s150, %s153
      %p159 = scmp.eq.s32.totalorder %s15, 0
      %p160 = por %p158, %p159
      %p161 = scmp.ne.s32.totalorder %s150, %s153
      %p162 = scmp.eq.s32.totalorder %s20, 1
      %p163 = por %p161, %p162
      %p164 = scmp.ne.s32.totalorder %s153, %s154
      %p165 = scmp.eq.s32.totalorder %s20, 0
      %p166 = por %p164, %p165
      %p167 = scmp.ne.s32.totalorder %s153, %s154
      %p168 = scmp.eq.s32.totalorder %s21, 1
      %p169 = por %p167, %p168
      %p171 = scmp.ne.s32.totalorder %s154, %s170
      %p172 = scmp.eq.s32.totalorder %s21, 0
      %p173 = por %p171, %p172
      %s174 = ssub.s32 %s15, %s22
      %p175 = scmp.eq.s32.totalorder %s174, 0
      %s177 = sadd.s32 %s176, 1
      %s178 = scalar_select %p175, %s176, %s177
      %p181 = pneg %p175
      %p182 = scmp.eq.s32.totalorder %s15, 1
      %p183 = por %p181, %p182
      %p184 = scmp.ne.s32.totalorder %s176, %s179
      %p185 = scmp.eq.s32.totalorder %s15, 0
      %p186 = por %p184, %p185
      %p187 = scmp.ne.s32.totalorder %s176, %s179
      %p188 = scmp.eq.s32.totalorder %s20, 1
      %p189 = por %p187, %p188
      %p190 = scmp.ne.s32.totalorder %s179, %s180
      %p191 = scmp.eq.s32.totalorder %s20, 0
      %p192 = por %p190, %p191
      %p193 = scmp.ne.s32.totalorder %s179, %s180
      %p194 = scmp.eq.s32.totalorder %s21, 1
      %p195 = por %p193, %p194
      %p197 = scmp.ne.s32.totalorder %s180, %s196
      %p198 = scmp.eq.s32.totalorder %s21, 0
      %p199 = por %p197, %p198
      %s200 = ssub.s32 %s15, %s22
      %p201 = scmp.eq.s32.totalorder %s200, 0
      %s203 = sadd.s32 %s202, 1
      %s204 = scalar_select %p201, %s202, %s203
      %p207 = pneg %p201
      %p208 = scmp.eq.s32.totalorder %s15, 1
      %p209 = por %p207, %p208
      %p210 = scmp.ne.s32.totalorder %s202, %s205
      %p211 = scmp.eq.s32.totalorder %s15, 0
      %p212 = por %p210, %p211
      %p213 = scmp.ne.s32.totalorder %s202, %s205
      %p214 = scmp.eq.s32.totalorder %s20, 1
      %p215 = por %p213, %p214
      %p216 = scmp.ne.s32.totalorder %s205, %s206
      %p217 = scmp.eq.s32.totalorder %s20, 0
      %p218 = por %p216, %p217
      %p219 = scmp.ne.s32.totalorder %s205, %s206
      %p220 = scmp.eq.s32.totalorder %s21, 1
      %p221 = por %p219, %p220
      %p223 = scmp.ne.s32.totalorder %s206, %s222
      %p224 = scmp.eq.s32.totalorder %s21, 0
      %p225 = por %p223, %p224
      %s226 = ssub.s32 %s15, %s22
      %p227 = scmp.eq.s32.totalorder %s226, 0
      %s229 = sadd.s32 %s228, 1
      %s230 = scalar_select %p227, %s228, %s229
      %p233 = pneg %p227
      %p234 = scmp.eq.s32.totalorder %s15, 1
      %p235 = por %p233, %p234
      %p236 = scmp.ne.s32.totalorder %s228, %s231
      %p237 = scmp.eq.s32.totalorder %s15, 0
      %p238 = por %p236, %p237
      %p239 = scmp.ne.s32.totalorder %s228, %s231
      %p240 = scmp.eq.s32.totalorder %s20, 1
      %p241 = por %p239, %p240
      %p242 = scmp.ne.s32.totalorder %s231, %s232
      %p243 = scmp.eq.s32.totalorder %s20, 0
      %p244 = por %p242, %p243
      %p245 = scmp.ne.s32.totalorder %s231, %s232
      %p246 = scmp.eq.s32.totalorder %s21, 1
      %p247 = por %p245, %p246
      %p249 = scmp.ne.s32.totalorder %s232, %s248
      %p250 = scmp.eq.s32.totalorder %s21, 0
      %p251 = por %p249, %p250
      %p252 = scmp.le.s32.totalorder 1, %s15
      %p253 = scmp.lt.s32.totalorder %s15, 3
      %p254 = pnand %p252, %p253
      %p255 = pneg %p254
      // Predicated region
      $region9: #{lmsnn_forward.3} parent=5 // pred_check
        _
      $region10: #{lmsnn_forward.3} parent=5 // pred_check_branch
        %257 = sbr.rel (%p254) target = $region12
      $region11: #{lmsnn_forward.3} parent=5 // pred_region
        %s258 = ssub.s32 %s15, 1
        // Predicated region
        $region13: #{lmsnn_forward.3} parent=11 // pred_check
          %p259 = pneg %p36
        $region14: #{lmsnn_forward.3} parent=11 // pred_check_branch
          %261 = sbr.rel (%p259) target = $region16
        $region15: #{lmsnn_forward.3} parent=11 // pred_region
          _
        $region16: #{lmsnn_forward.3} parent=11 // pred_fallthru
          _
      $region12: #{lmsnn_forward.3} parent=5 // pred_fallthru
        _
      %p262 = scmp.lt.s32.totalorder %s15, 2
      // Predicated region
      $region17: #{lmsnn_forward.3} parent=5 // pred_check
        %p263 = pneg %p262
      $region18: #{lmsnn_forward.3} parent=5 // pred_check_branch
        %265 = sbr.rel (%p263) target = $region20
      $region19: #{lmsnn_forward.3} parent=5 // pred_region
        // Predicated region
        $region21: #{lmsnn_forward.3} parent=19 // pred_check
          %p266 = pneg %p56
        $region22: #{lmsnn_forward.3} parent=19 // pred_check_branch
          %268 = sbr.rel (%p266) target = $region24
        $region23: #{lmsnn_forward.3} parent=19 // pred_region
          %s269 = sand.u32 %s46, 1
          %s270 = sand.u32 %s46, 1
          %s271 = smul.addr %s270, 64
          %s272 = scalar_lea.vmem [#allocation3], %s271
          %s273 = smul.addr %s15, 4
          %s274 = scalar_lea.vmem %s1, %s273
          // Predicated region
          $region25: #{lmsnn_forward.3} parent=23 // pred_check
            _
          $region26: #{lmsnn_forward.3} parent=23 // pred_check_branch
            %276 = sbr.rel (0) target = $region28
          $region27: #{lmsnn_forward.3} parent=23 // pred_region
            // Predicated region
            $region29: #{lmsnn_forward.3} parent=27 // pred_check
              _
            $region30: #{lmsnn_forward.3} parent=27 // pred_check_branch
              %278 = sbr.rel target = $region32
            $region31: #{lmsnn_forward.3} parent=27 // pred_region
              // Predicated region
              $region44: #{lmsnn_forward.3} parent=31 // pred_check
                _
              $region45: #{lmsnn_forward.3} parent=31 // pred_check_branch
                %324 = sbr.rel (0) target = $region47
              $region46: #{lmsnn_forward.3} parent=31 // pred_region
                loop: start=0, step=1, limit=1
                $region48: #{lmsnn_forward.3} parent=46 // loop_pre_header
                  _
                $region49: #{lmsnn_forward.3} parent=46 // loop_header
                  %s326 = sphi 0, %s330
                  %p327 = scmp.ge.s32.totalorder %s326, 1
                  %s331 = sphi %s274, %s274
                  %s332 = sphi %s272, %s272
                $region50: #{lmsnn_forward.3} parent=46 // loop_header_branch
                  %329 = sbr.rel (%p327) target = $region54
                $region51: #{lmsnn_forward.3} parent=46 // loop_body
                  _
                $region52: #{lmsnn_forward.3} parent=46 // loop_footer
                  %s330 = sadd.s32 1, %s326
                $region53: #{lmsnn_forward.3} parent=46 // loop_footer_branch
                  %325 = sbr.rel target = $region49
                $region54: #{lmsnn_forward.3} parent=46 // loop_exit
                  _
                %s334 = ssub.s32 16, 1
                loop: start=0, step=1, limit=1
                $region55: #{lmsnn_forward.3} parent=46 // loop_pre_header
                  _
                $region56: #{lmsnn_forward.3} parent=46 // loop_header
                  %s336 = sphi 0, %s340
                  %p337 = scmp.ge.s32.totalorder %s336, 1
                  %s341 = sphi %s274, %s274
                  %s342 = sphi %s272, %s272
                $region57: #{lmsnn_forward.3} parent=46 // loop_header_branch
                  %339 = sbr.rel (%p337) target = $region61
                $region58: #{lmsnn_forward.3} parent=46 // loop_body
                  %v343 = vld [vmem:[%s341] sm:%s334]
                  %344 = vst [vmem:[%s342] sm:%s334] %v343
                  %v345 = vld [vmem:[%s341 + $0x8] sm:%s334]
                  %346 = vst [vmem:[%s342 + $0x4] sm:%s334] %v345
                  %v347 = vld [vmem:[%s341 + $0x10] sm:%s334]
                  %348 = vst [vmem:[%s342 + $0x8] sm:%s334] %v347
                  %v349 = vld [vmem:[%s341 + $0x18] sm:%s334]
                  %350 = vst [vmem:[%s342 + $0xc] sm:%s334] %v349
                  %v351 = vld [vmem:[%s341 + $0x20] sm:%s334]
                  %352 = vst [vmem:[%s342 + $0x10] sm:%s334] %v351
                  %v353 = vld [vmem:[%s341 + $0x28] sm:%s334]
                  %354 = vst [vmem:[%s342 + $0x14] sm:%s334] %v353
                  %v355 = vld [vmem:[%s341 + $0x30] sm:%s334]
                  %356 = vst [vmem:[%s342 + $0x18] sm:%s334] %v355
                  %v357 = vld [vmem:[%s341 + $0x38] sm:%s334]
                  %358 = vst [vmem:[%s342 + $0x1c] sm:%s334] %v357
                  %v359 = vld [vmem:[%s341 + $0x40] sm:%s334]
                  %360 = vst [vmem:[%s342 + $0x20] sm:%s334] %v359
                  %v361 = vld [vmem:[%s341 + $0x48] sm:%s334]
                  %362 = vst [vmem:[%s342 + $0x24] sm:%s334] %v361
                  %v363 = vld [vmem:[%s341 + $0x50] sm:%s334]
                  %364 = vst [vmem:[%s342 + $0x28] sm:%s334] %v363
                  %v365 = vld [vmem:[%s341 + $0x58] sm:%s334]
                  %366 = vst [vmem:[%s342 + $0x2c] sm:%s334] %v365
                  %v367 = vld [vmem:[%s341 + $0x60] sm:%s334]
                  %368 = vst [vmem:[%s342 + $0x30] sm:%s334] %v367
                  %v369 = vld [vmem:[%s341 + $0x68] sm:%s334]
                  %370 = vst [vmem:[%s342 + $0x34] sm:%s334] %v369
                  %v371 = vld [vmem:[%s341 + $0x70] sm:%s334]
                  %372 = vst [vmem:[%s342 + $0x38] sm:%s334] %v371
                  %v373 = vld [vmem:[%s341 + $0x78] sm:%s334]
                  %374 = vst [vmem:[%s342 + $0x3c] sm:%s334] %v373
                $region59: #{lmsnn_forward.3} parent=46 // loop_footer
                  %s340 = sadd.s32 1, %s336
                $region60: #{lmsnn_forward.3} parent=46 // loop_footer_branch
                  %335 = sbr.rel target = $region56
                $region61: #{lmsnn_forward.3} parent=46 // loop_exit
                  _
              $region47: #{lmsnn_forward.3} parent=31 // pred_fallthru
                _
            $region32: #{lmsnn_forward.3} parent=27 // pred_fallthru
              _
            // Predicated region
            $region33: #{lmsnn_forward.3} parent=27 // pred_check
              _
            $region34: #{lmsnn_forward.3} parent=27 // pred_check_branch
              %280 = sbr.rel (0) target = $region36
            $region35: #{lmsnn_forward.3} parent=27 // pred_region
              %s282 = ssub.s32 16, 1
              loop: start=0, step=1, limit=1
              $region37: #{lmsnn_forward.3} parent=35 // loop_pre_header
                _
              $region38: #{lmsnn_forward.3} parent=35 // loop_header
                %s284 = sphi 0, %s288
                %p285 = scmp.ge.s32.totalorder %s284, 1
                %s289 = sphi %s274, %s274
                %s290 = sphi %s272, %s272
              $region39: #{lmsnn_forward.3} parent=35 // loop_header_branch
                %287 = sbr.rel (%p285) target = $region43
              $region40: #{lmsnn_forward.3} parent=35 // loop_body
                %v291 = vld [vmem:[%s289] sm:%s282]
                %292 = vst [vmem:[%s290] sm:%s282] %v291
                %v293 = vld [vmem:[%s289 + $0x8] sm:%s282]
                %294 = vst [vmem:[%s290 + $0x4] sm:%s282] %v293
                %v295 = vld [vmem:[%s289 + $0x10] sm:%s282]
                %296 = vst [vmem:[%s290 + $0x8] sm:%s282] %v295
                %v297 = vld [vmem:[%s289 + $0x18] sm:%s282]
                %298 = vst [vmem:[%s290 + $0xc] sm:%s282] %v297
                %v299 = vld [vmem:[%s289 + $0x20] sm:%s282]
                %300 = vst [vmem:[%s290 + $0x10] sm:%s282] %v299
                %v301 = vld [vmem:[%s289 + $0x28] sm:%s282]
                %302 = vst [vmem:[%s290 + $0x14] sm:%s282] %v301
                %v303 = vld [vmem:[%s289 + $0x30] sm:%s282]
                %304 = vst [vmem:[%s290 + $0x18] sm:%s282] %v303
                %v305 = vld [vmem:[%s289 + $0x38] sm:%s282]
                %306 = vst [vmem:[%s290 + $0x1c] sm:%s282] %v305
                %v307 = vld [vmem:[%s289 + $0x40] sm:%s282]
                %308 = vst [vmem:[%s290 + $0x20] sm:%s282] %v307
                %v309 = vld [vmem:[%s289 + $0x48] sm:%s282]
                %310 = vst [vmem:[%s290 + $0x24] sm:%s282] %v309
                %v311 = vld [vmem:[%s289 + $0x50] sm:%s282]
                %312 = vst [vmem:[%s290 + $0x28] sm:%s282] %v311
                %v313 = vld [vmem:[%s289 + $0x58] sm:%s282]
                %314 = vst [vmem:[%s290 + $0x2c] sm:%s282] %v313
                %v315 = vld [vmem:[%s289 + $0x60] sm:%s282]
                %316 = vst [vmem:[%s290 + $0x30] sm:%s282] %v315
                %v317 = vld [vmem:[%s289 + $0x68] sm:%s282]
                %318 = vst [vmem:[%s290 + $0x34] sm:%s282] %v317
                %v319 = vld [vmem:[%s289 + $0x70] sm:%s282]
                %320 = vst [vmem:[%s290 + $0x38] sm:%s282] %v319
                %v321 = vld [vmem:[%s289 + $0x78] sm:%s282]
                %322 = vst [vmem:[%s290 + $0x3c] sm:%s282] %v321
              $region41: #{lmsnn_forward.3} parent=35 // loop_footer
                %s288 = sadd.s32 1, %s284
              $region42: #{lmsnn_forward.3} parent=35 // loop_footer_branch
                %283 = sbr.rel target = $region38
              $region43: #{lmsnn_forward.3} parent=35 // loop_exit
                _
            $region36: #{lmsnn_forward.3} parent=27 // pred_fallthru
              _
          $region28: #{lmsnn_forward.3} parent=23 // pred_fallthru
            _
          %375 = vnop
        $region24: #{lmsnn_forward.3} parent=19 // pred_fallthru
          _
        // Predicated region
        $region62: #{lmsnn_forward.3} parent=19 // pred_check
          %p376 = pneg %p82
        $region63: #{lmsnn_forward.3} parent=19 // pred_check_branch
          %378 = sbr.rel (%p376) target = $region65
        $region64: #{lmsnn_forward.3} parent=19 // pred_region
          %p379 = scmp.lt.s32.totalorder %s15, 1
          %s380 = scalar_select %p379, %s15, 1
          %s381 = scalar_lea.vmem %s2, %s380
        $region65: #{lmsnn_forward.3} parent=19 // pred_fallthru
          _
        // Predicated region
        $region66: #{lmsnn_forward.3} parent=19 // pred_check
          %p382 = pneg %p108
        $region67: #{lmsnn_forward.3} parent=19 // pred_check_branch
          %384 = sbr.rel (%p382) target = $region69
        $region68: #{lmsnn_forward.3} parent=19 // pred_region
          %s385 = sand.u32 %s98, 1
          %s386 = sand.u32 %s98, 1
          %s387 = smul.addr %s386, 16
          %s388 = scalar_lea.vmem [#allocation4], %s387
          %s389 = smul.addr %s15, 8
          %s390 = scalar_lea.vmem %s3, %s389
          // Predicated region
          $region70: #{lmsnn_forward.3} parent=68 // pred_check
            _
          $region71: #{lmsnn_forward.3} parent=68 // pred_check_branch
            %392 = sbr.rel (0) target = $region73
          $region72: #{lmsnn_forward.3} parent=68 // pred_region
            // Predicated region
            $region74: #{lmsnn_forward.3} parent=72 // pred_check
              _
            $region75: #{lmsnn_forward.3} parent=72 // pred_check_branch
              %394 = sbr.rel (0) target = $region77
            $region76: #{lmsnn_forward.3} parent=72 // pred_region
              // Predicated region
              $region89: #{lmsnn_forward.3} parent=76 // pred_check
                _
              $region90: #{lmsnn_forward.3} parent=76 // pred_check_branch
                %412 = sbr.rel (0) target = $region92
              $region91: #{lmsnn_forward.3} parent=76 // pred_region
                loop: start=0, step=1, limit=1
                $region93: #{lmsnn_forward.3} parent=91 // loop_pre_header
                  _
                $region94: #{lmsnn_forward.3} parent=91 // loop_header
                  %s414 = sphi 0, %s418
                  %p415 = scmp.ge.s32.totalorder %s414, 1
                  %s419 = sphi %s390, %s390
                  %s420 = sphi %s388, %s388
                $region95: #{lmsnn_forward.3} parent=91 // loop_header_branch
                  %417 = sbr.rel (%p415) target = $region99
                $region96: #{lmsnn_forward.3} parent=91 // loop_body
                  %v421 = vld [vmem:[%s419] sm:$0xff]
                  %422 = vst [vmem:[%s420] sm:$0xff] %v421
                  %v423 = vld [vmem:[%s419 + $0x10] sm:$0xff]
                  %424 = vst [vmem:[%s420 + $0x8] sm:$0xff] %v423
                $region97: #{lmsnn_forward.3} parent=91 // loop_footer
                  %s418 = sadd.s32 1, %s414
                $region98: #{lmsnn_forward.3} parent=91 // loop_footer_branch
                  %413 = sbr.rel target = $region94
                $region99: #{lmsnn_forward.3} parent=91 // loop_exit
                  _
              $region92: #{lmsnn_forward.3} parent=76 // pred_fallthru
                _
              // Predicated region
              $region100: #{lmsnn_forward.3} parent=76 // pred_check
                _
              $region101: #{lmsnn_forward.3} parent=76 // pred_check_branch
                %426 = sbr.rel target = $region103
              $region102: #{lmsnn_forward.3} parent=76 // pred_region
                _
              $region103: #{lmsnn_forward.3} parent=76 // pred_fallthru
                _
            $region77: #{lmsnn_forward.3} parent=72 // pred_fallthru
              _
            // Predicated region
            $region78: #{lmsnn_forward.3} parent=72 // pred_check
              _
            $region79: #{lmsnn_forward.3} parent=72 // pred_check_branch
              %396 = sbr.rel target = $region81
            $region80: #{lmsnn_forward.3} parent=72 // pred_region
              %s398 = ssub.s32 256, 1
              loop: start=0, step=1, limit=1
              $region82: #{lmsnn_forward.3} parent=80 // loop_pre_header
                _
              $region83: #{lmsnn_forward.3} parent=80 // loop_header
                %s400 = sphi 0, %s404
                %p401 = scmp.ge.s32.totalorder %s400, 1
                %s405 = sphi %s390, %s390
                %s406 = sphi %s388, %s388
              $region84: #{lmsnn_forward.3} parent=80 // loop_header_branch
                %403 = sbr.rel (%p401) target = $region88
              $region85: #{lmsnn_forward.3} parent=80 // loop_body
                %v407 = vld [vmem:[%s405] sm:%s398]
                %408 = vst [vmem:[%s406] sm:%s398] %v407
                %v409 = vld [vmem:[%s405 + $0x10] sm:%s398]
                %410 = vst [vmem:[%s406 + $0x8] sm:%s398] %v409
              $region86: #{lmsnn_forward.3} parent=80 // loop_footer
                %s404 = sadd.s32 1, %s400
              $region87: #{lmsnn_forward.3} parent=80 // loop_footer_branch
                %399 = sbr.rel target = $region83
              $region88: #{lmsnn_forward.3} parent=80 // loop_exit
                _
            $region81: #{lmsnn_forward.3} parent=72 // pred_fallthru
              _
          $region73: #{lmsnn_forward.3} parent=68 // pred_fallthru
            _
          %427 = vnop
        $region69: #{lmsnn_forward.3} parent=19 // pred_fallthru
          _
        // Predicated region
        $region104: #{lmsnn_forward.3} parent=19 // pred_check
          %p428 = pneg %p134
        $region105: #{lmsnn_forward.3} parent=19 // pred_check_branch
          %430 = sbr.rel (%p428) target = $region107
        $region106: #{lmsnn_forward.3} parent=19 // pred_region
          %s431 = sand.u32 %s124, 1
          %s432 = sand.u32 %s124, 1
          %s433 = smul.addr %s432, 16
          %s434 = scalar_lea.vmem [#allocation5], %s433
          %s435 = smul.addr %s15, 8
          %s436 = scalar_lea.vmem %s4, %s435
          // Predicated region
          $region108: #{lmsnn_forward.3} parent=106 // pred_check
            _
          $region109: #{lmsnn_forward.3} parent=106 // pred_check_branch
            %438 = sbr.rel (0) target = $region111
          $region110: #{lmsnn_forward.3} parent=106 // pred_region
            // Predicated region
            $region112: #{lmsnn_forward.3} parent=110 // pred_check
              _
            $region113: #{lmsnn_forward.3} parent=110 // pred_check_branch
              %440 = sbr.rel (0) target = $region115
            $region114: #{lmsnn_forward.3} parent=110 // pred_region
              // Predicated region
              $region127: #{lmsnn_forward.3} parent=114 // pred_check
                _
              $region128: #{lmsnn_forward.3} parent=114 // pred_check_branch
                %458 = sbr.rel (0) target = $region130
              $region129: #{lmsnn_forward.3} parent=114 // pred_region
                loop: start=0, step=1, limit=1
                $region131: #{lmsnn_forward.3} parent=129 // loop_pre_header
                  _
                $region132: #{lmsnn_forward.3} parent=129 // loop_header
                  %s460 = sphi 0, %s464
                  %p461 = scmp.ge.s32.totalorder %s460, 1
                  %s465 = sphi %s436, %s436
                  %s466 = sphi %s434, %s434
                $region133: #{lmsnn_forward.3} parent=129 // loop_header_branch
                  %463 = sbr.rel (%p461) target = $region137
                $region134: #{lmsnn_forward.3} parent=129 // loop_body
                  %v467 = vld [vmem:[%s465] sm:$0xff]
                  %468 = vst [vmem:[%s466] sm:$0xff] %v467
                  %v469 = vld [vmem:[%s465 + $0x10] sm:$0xff]
                  %470 = vst [vmem:[%s466 + $0x8] sm:$0xff] %v469
                $region135: #{lmsnn_forward.3} parent=129 // loop_footer
                  %s464 = sadd.s32 1, %s460
                $region136: #{lmsnn_forward.3} parent=129 // loop_footer_branch
                  %459 = sbr.rel target = $region132
                $region137: #{lmsnn_forward.3} parent=129 // loop_exit
                  _
              $region130: #{lmsnn_forward.3} parent=114 // pred_fallthru
                _
              // Predicated region
              $region138: #{lmsnn_forward.3} parent=114 // pred_check
                _
              $region139: #{lmsnn_forward.3} parent=114 // pred_check_branch
                %472 = sbr.rel target = $region141
              $region140: #{lmsnn_forward.3} parent=114 // pred_region
                _
              $region141: #{lmsnn_forward.3} parent=114 // pred_fallthru
                _
            $region115: #{lmsnn_forward.3} parent=110 // pred_fallthru
              _
            // Predicated region
            $region116: #{lmsnn_forward.3} parent=110 // pred_check
              _
            $region117: #{lmsnn_forward.3} parent=110 // pred_check_branch
              %442 = sbr.rel target = $region119
            $region118: #{lmsnn_forward.3} parent=110 // pred_region
              %s444 = ssub.s32 256, 1
              loop: start=0, step=1, limit=1
              $region120: #{lmsnn_forward.3} parent=118 // loop_pre_header
                _
              $region121: #{lmsnn_forward.3} parent=118 // loop_header
                %s446 = sphi 0, %s450
                %p447 = scmp.ge.s32.totalorder %s446, 1
                %s451 = sphi %s436, %s436
                %s452 = sphi %s434, %s434
              $region122: #{lmsnn_forward.3} parent=118 // loop_header_branch
                %449 = sbr.rel (%p447) target = $region126
              $region123: #{lmsnn_forward.3} parent=118 // loop_body
                %v453 = vld [vmem:[%s451] sm:%s444]
                %454 = vst [vmem:[%s452] sm:%s444] %v453
                %v455 = vld [vmem:[%s451 + $0x10] sm:%s444]
                %456 = vst [vmem:[%s452 + $0x8] sm:%s444] %v455
              $region124: #{lmsnn_forward.3} parent=118 // loop_footer
                %s450 = sadd.s32 1, %s446
              $region125: #{lmsnn_forward.3} parent=118 // loop_footer_branch
                %445 = sbr.rel target = $region121
              $region126: #{lmsnn_forward.3} parent=118 // loop_exit
                _
            $region119: #{lmsnn_forward.3} parent=110 // pred_fallthru
              _
          $region111: #{lmsnn_forward.3} parent=106 // pred_fallthru
            _
          %473 = vnop
        $region107: #{lmsnn_forward.3} parent=19 // pred_fallthru
          _
        // Predicated region
        $region142: #{lmsnn_forward.3} parent=19 // pred_check
          %p474 = pneg %p160
        $region143: #{lmsnn_forward.3} parent=19 // pred_check_branch
          %476 = sbr.rel (%p474) target = $region145
        $region144: #{lmsnn_forward.3} parent=19 // pred_region
          %s477 = sand.u32 %s150, 1
          %s478 = sand.u32 %s150, 1
          %s479 = smul.addr %s478, 16
          %s480 = scalar_lea.vmem [#allocation6], %s479
          %s481 = smul.addr %s15, 8
          %s482 = scalar_lea.vmem %s5, %s481
          // Predicated region
          $region146: #{lmsnn_forward.3} parent=144 // pred_check
            _
          $region147: #{lmsnn_forward.3} parent=144 // pred_check_branch
            %484 = sbr.rel (0) target = $region149
          $region148: #{lmsnn_forward.3} parent=144 // pred_region
            // Predicated region
            $region150: #{lmsnn_forward.3} parent=148 // pred_check
              _
            $region151: #{lmsnn_forward.3} parent=148 // pred_check_branch
              %486 = sbr.rel (0) target = $region153
            $region152: #{lmsnn_forward.3} parent=148 // pred_region
              // Predicated region
              $region165: #{lmsnn_forward.3} parent=152 // pred_check
                _
              $region166: #{lmsnn_forward.3} parent=152 // pred_check_branch
                %504 = sbr.rel (0) target = $region168
              $region167: #{lmsnn_forward.3} parent=152 // pred_region
                loop: start=0, step=1, limit=1
                $region169: #{lmsnn_forward.3} parent=167 // loop_pre_header
                  _
                $region170: #{lmsnn_forward.3} parent=167 // loop_header
                  %s506 = sphi 0, %s510
                  %p507 = scmp.ge.s32.totalorder %s506, 1
                  %s511 = sphi %s482, %s482
                  %s512 = sphi %s480, %s480
                $region171: #{lmsnn_forward.3} parent=167 // loop_header_branch
                  %509 = sbr.rel (%p507) target = $region175
                $region172: #{lmsnn_forward.3} parent=167 // loop_body
                  %v513 = vld [vmem:[%s511] sm:$0xff]
                  %514 = vst [vmem:[%s512] sm:$0xff] %v513
                  %v515 = vld [vmem:[%s511 + $0x10] sm:$0xff]
                  %516 = vst [vmem:[%s512 + $0x8] sm:$0xff] %v515
                $region173: #{lmsnn_forward.3} parent=167 // loop_footer
                  %s510 = sadd.s32 1, %s506
                $region174: #{lmsnn_forward.3} parent=167 // loop_footer_branch
                  %505 = sbr.rel target = $region170
                $region175: #{lmsnn_forward.3} parent=167 // loop_exit
                  _
              $region168: #{lmsnn_forward.3} parent=152 // pred_fallthru
                _
              // Predicated region
              $region176: #{lmsnn_forward.3} parent=152 // pred_check
                _
              $region177: #{lmsnn_forward.3} parent=152 // pred_check_branch
                %518 = sbr.rel target = $region179
              $region178: #{lmsnn_forward.3} parent=152 // pred_region
                _
              $region179: #{lmsnn_forward.3} parent=152 // pred_fallthru
                _
            $region153: #{lmsnn_forward.3} parent=148 // pred_fallthru
              _
            // Predicated region
            $region154: #{lmsnn_forward.3} parent=148 // pred_check
              _
            $region155: #{lmsnn_forward.3} parent=148 // pred_check_branch
              %488 = sbr.rel target = $region157
            $region156: #{lmsnn_forward.3} parent=148 // pred_region
              %s490 = ssub.s32 256, 1
              loop: start=0, step=1, limit=1
              $region158: #{lmsnn_forward.3} parent=156 // loop_pre_header
                _
              $region159: #{lmsnn_forward.3} parent=156 // loop_header
                %s492 = sphi 0, %s496
                %p493 = scmp.ge.s32.totalorder %s492, 1
                %s497 = sphi %s482, %s482
                %s498 = sphi %s480, %s480
              $region160: #{lmsnn_forward.3} parent=156 // loop_header_branch
                %495 = sbr.rel (%p493) target = $region164
              $region161: #{lmsnn_forward.3} parent=156 // loop_body
                %v499 = vld [vmem:[%s497] sm:%s490]
                %500 = vst [vmem:[%s498] sm:%s490] %v499
                %v501 = vld [vmem:[%s497 + $0x10] sm:%s490]
                %502 = vst [vmem:[%s498 + $0x8] sm:%s490] %v501
              $region162: #{lmsnn_forward.3} parent=156 // loop_footer
                %s496 = sadd.s32 1, %s492
              $region163: #{lmsnn_forward.3} parent=156 // loop_footer_branch
                %491 = sbr.rel target = $region159
              $region164: #{lmsnn_forward.3} parent=156 // loop_exit
                _
            $region157: #{lmsnn_forward.3} parent=148 // pred_fallthru
              _
          $region149: #{lmsnn_forward.3} parent=144 // pred_fallthru
            _
          %519 = vnop
        $region145: #{lmsnn_forward.3} parent=19 // pred_fallthru
          _
      $region20: #{lmsnn_forward.3} parent=5 // pred_fallthru
        _
      %p520 = scmp.le.s32.totalorder 1, %s15
      %p521 = scmp.lt.s32.totalorder %s15, 3
      %p522 = pnand %p520, %p521
      %p523 = pneg %p522
      // Predicated region
      $region180: #{lmsnn_forward.3} parent=5 // pred_check
        _
      $region181: #{lmsnn_forward.3} parent=5 // pred_check_branch
        %525 = sbr.rel (%p522) target = $region183
      $region182: #{lmsnn_forward.3} parent=5 // pred_region
        %s526 = ssub.s32 %s15, 1
        %s527 = sand.u32 %s49, 1
        %s528 = sand.u32 %s49, 1
        %s529 = smul.addr %s528, 64
        %s530 = scalar_lea.vmem [#allocation3], %s529
        // Predicated region
        $region184: #{lmsnn_forward.3} parent=182 // pred_check
          %p531 = pneg %p62
        $region185: #{lmsnn_forward.3} parent=182 // pred_check_branch
          %533 = sbr.rel (%p531) target = $region187
        $region186: #{lmsnn_forward.3} parent=182 // pred_region
          _
        $region187: #{lmsnn_forward.3} parent=182 // pred_fallthru
          _
        %s534 = sand.u32 %s101, 1
        %s535 = sand.u32 %s101, 1
        %s536 = smul.addr %s535, 16
        %s537 = scalar_lea.vmem [#allocation4], %s536
        // Predicated region
        $region188: #{lmsnn_forward.3} parent=182 // pred_check
          %p538 = pneg %p114
        $region189: #{lmsnn_forward.3} parent=182 // pred_check_branch
          %540 = sbr.rel (%p538) target = $region191
        $region190: #{lmsnn_forward.3} parent=182 // pred_region
          _
        $region191: #{lmsnn_forward.3} parent=182 // pred_fallthru
          _
        %s541 = sand.u32 %s127, 1
        %s542 = sand.u32 %s127, 1
        %s543 = smul.addr %s542, 16
        %s544 = scalar_lea.vmem [#allocation5], %s543
        // Predicated region
        $region192: #{lmsnn_forward.3} parent=182 // pred_check
          %p545 = pneg %p140
        $region193: #{lmsnn_forward.3} parent=182 // pred_check_branch
          %547 = sbr.rel (%p545) target = $region195
        $region194: #{lmsnn_forward.3} parent=182 // pred_region
          _
        $region195: #{lmsnn_forward.3} parent=182 // pred_fallthru
          _
        %s548 = sand.u32 %s153, 1
        %s549 = sand.u32 %s153, 1
        %s550 = smul.addr %s549, 16
        %s551 = scalar_lea.vmem [#allocation6], %s550
        // Predicated region
        $region196: #{lmsnn_forward.3} parent=182 // pred_check
          %p552 = pneg %p166
        $region197: #{lmsnn_forward.3} parent=182 // pred_check_branch
          %554 = sbr.rel (%p552) target = $region199
        $region198: #{lmsnn_forward.3} parent=182 // pred_region
          _
        $region199: #{lmsnn_forward.3} parent=182 // pred_fallthru
          _
        %p555 = pneg %p36
        %p556 = pneg %p33
        %s557 = sand.u32 %s49, 1
        %s558 = sand.u32 %s49, 1
        %s559 = smul.addr %s558, 64
        %s560 = scalar_lea.vmem [#allocation3], %s559
        %p561 = pneg %p62
        %p562 = pneg %p59
        %p563 = scmp.lt.s32.totalorder %s20, 1
        %s564 = scalar_select %p563, %s20, 1
        %s565 = scalar_lea.vmem %s2, %s564
        %p566 = pneg %p88
        %p567 = pneg %p85
        %s568 = sand.u32 %s101, 1
        %s569 = sand.u32 %s101, 1
        %s570 = smul.addr %s569, 16
        %s571 = scalar_lea.vmem [#allocation4], %s570
        %p572 = pneg %p114
        %p573 = pneg %p111
        %s574 = sand.u32 %s127, 1
        %s575 = sand.u32 %s127, 1
        %s576 = smul.addr %s575, 16
        %s577 = scalar_lea.vmem [#allocation5], %s576
        %p578 = pneg %p140
        %p579 = pneg %p137
        %s580 = sand.u32 %s153, 1
        %s581 = sand.u32 %s153, 1
        %s582 = smul.addr %s581, 16
        %s583 = scalar_lea.vmem [#allocation6], %s582
        %p584 = pneg %p166
        %p585 = pneg %p163
        %p586 = pneg %p192
        %p587 = pneg %p189
        %s588 = sand.u32 %s179, 1
        %s589 = sand.u32 %s179, 1
        %s590 = smul.addr %s589, 64
        %s591 = scalar_lea.vmem [#allocation7], %s590
        %p592 = pneg %p218
        %p593 = pneg %p215
        %s594 = sand.u32 %s205, 1
        %s595 = sand.u32 %s205, 1
        %s596 = smul.addr %s595, 16
        %s597 = scalar_lea.vmem [#allocation8], %s596
        %p598 = pneg %p244
        %p599 = pneg %p241
        %s600 = sand.u32 %s231, 1
        %s601 = sand.u32 %s231, 1
        %s602 = smul.addr %s601, 16
        %s603 = scalar_lea.vmem [#allocation9], %s602
        %p604 = scmp.lt.s32.totalorder %s20, 1
        %s605 = scalar_select %p604, %s20, 1
        %s606 = scalar_lea.vmem %s2, %s605
        %v608 = vld [vmem:[%s0] sm:$0xf]
        %v609 = vld [vmem:[%s0 + $0x4] sm:$0xf]
        %v610 = vld [vmem:[%s0 + $0x8] sm:$0xf]
        %v611 = vld [vmem:[%s0 + $0xc] sm:$0xf]
        %v612 = vld [vmem:[%s0 + $0x10] sm:$0xf]
        %v613 = vld [vmem:[%s0 + $0x14] sm:$0xf]
        %v614 = vld [vmem:[%s0 + $0x18] sm:$0xf]
        %v615 = vld [vmem:[%s0 + $0x1c] sm:$0xf]
        %v616 = vld [vmem:[%s530] sm:$0xf]
        %v617 = vld [vmem:[%s530 + $0x4] sm:$0xf]
        %v618 = vld [vmem:[%s530 + $0x8] sm:$0xf]
        %v619 = vld [vmem:[%s530 + $0xc] sm:$0xf]
        %v620 = vld [vmem:[%s530 + $0x10] sm:$0xf]
        %v621 = vld [vmem:[%s530 + $0x14] sm:$0xf]
        %v622 = vld [vmem:[%s530 + $0x18] sm:$0xf]
        %v623 = vld [vmem:[%s530 + $0x1c] sm:$0xf]
        %v624 = vld [vmem:[%s530 + $0x20] sm:$0xf]
        %v625 = vld [vmem:[%s530 + $0x24] sm:$0xf]
        %v626 = vld [vmem:[%s530 + $0x28] sm:$0xf]
        %v627 = vld [vmem:[%s530 + $0x2c] sm:$0xf]
        %v628 = vld [vmem:[%s530 + $0x30] sm:$0xf]
        %v629 = vld [vmem:[%s530 + $0x34] sm:$0xf]
        %v630 = vld [vmem:[%s530 + $0x38] sm:$0xf]
        %v631 = vld [vmem:[%s530 + $0x3c] sm:$0xf]
        %v632 = vld [vmem:[%s606] sm:$0x1]
        %v634 = vlaneseq
        %v635 = vshrl.u32 %v634, 7
        %v636 = vsub.s32 0, %v635
        %v637 = vrot.slane %v632, %v636
        %v647 = vunpack.c.l.b16 %v608
        %v648 = vunpack.c.l.b16 %v609
        %v649 = vunpack.c.l.b16 %v610
        %v650 = vunpack.c.l.b16 %v611
        %v651 = vunpack.c.l.b16 %v612
        %v652 = vunpack.c.l.b16 %v613
        %v653 = vunpack.c.l.b16 %v614
        %v654 = vunpack.c.l.b16 %v615
        %v655 = vpack.c.b16 %v648, %v647
        %v656 = vpack.c.b16 %v650, %v649
        %v657 = vpack.c.b16 %v652, %v651
        %v658 = vpack.c.b16 %v654, %v653
        %v679 = vunpack.c.l.b16 %v616
        %v680 = vunpack.c.l.b16 %v617
        %v681 = vunpack.c.l.b16 %v618
        %v682 = vunpack.c.l.b16 %v619
        %v683 = vunpack.c.l.b16 %v620
        %v684 = vunpack.c.l.b16 %v621
        %v685 = vunpack.c.l.b16 %v622
        %v686 = vunpack.c.l.b16 %v623
        %v687 = vunpack.c.l.b16 %v624
        %v688 = vunpack.c.l.b16 %v625
        %v689 = vunpack.c.l.b16 %v626
        %v690 = vunpack.c.l.b16 %v627
        %v691 = vunpack.c.l.b16 %v628
        %v692 = vunpack.c.l.b16 %v629
        %v693 = vunpack.c.l.b16 %v630
        %v694 = vunpack.c.l.b16 %v631
        %v695 = vpack.c.b16 %v680, %v679
        %v696 = vpack.c.b16 %v682, %v681
        %v697 = vpack.c.b16 %v684, %v683
        %v698 = vpack.c.b16 %v686, %v685
        %v699 = vpack.c.b16 %v688, %v687
        %v700 = vpack.c.b16 %v690, %v689
        %v701 = vpack.c.b16 %v692, %v691
        %v702 = vpack.c.b16 %v694, %v693
        %711 = vmatprep.subr.bf16.mxu0 0
        %712 = vmatpush1.bf16.msra.mxu0 %v702
        %713 = vmatprep.subr.bf16.mxu0 0
        %714 = vmatpush1.bf16.msra.mxu0 %v701
        %715 = vmatprep.subr.bf16.mxu0 0
        %716 = vmatpush1.bf16.msra.mxu0 %v700
        %717 = vmatprep.subr.bf16.mxu0 0
        %718 = vmatpush1.bf16.msra.mxu0 %v699
        %719 = vmatprep.subr.bf16.mxu0 0
        %720 = vmatpush1.bf16.msra.mxu0 %v698
        %721 = vmatprep.subr.bf16.mxu0 0
        %722 = vmatpush1.bf16.msra.mxu0 %v697
        %723 = vmatprep.subr.bf16.mxu0 0
        %724 = vmatpush1.bf16.msra.mxu0 %v696
        %725 = vmatprep.subr.bf16.mxu0 0
        %726 = vmatpush1.bf16.msra.mxu0 %v695
        %727 = vmatprep.subr.bf16.mxu0 0
        %728 = vmatpush2.bf16.msra.mxu0 0
        %729 = vmatprep.subr.bf16.mxu0 0
        %730 = vmatpush2.bf16.msra.mxu0 0
        %731 = vmatprep.subr.bf16.mxu0 0
        %732 = vmatpush2.bf16.msra.mxu0 0
        %733 = vmatprep.subr.bf16.mxu0 0
        %734 = vmatpush2.bf16.msra.mxu0 0
        %735 = vmatprep.subr.bf16.mxu0 0
        %736 = vmatpush2.bf16.msra.mxu0 0
        %737 = vmatprep.subr.bf16.mxu0 0
        %738 = vmatpush2.bf16.msra.mxu0 0
        %739 = vmatprep.subr.bf16.mxu0 0
        %740 = vmatpush2.bf16.msra.mxu0 0
        %741 = vmatprep.subr.bf16.mxu0 0
        %742 = vmatpush2.bf16.msra.mxu0 0
        %743 = vmatprep.mubr.bf16.mxu0 0
        %744 = vmatmul.mubr.bf16.gmra.mxu0 %v655
        %v745 = vpop.f32.mrf.mxu0
        %v746 = vadd.f32 %v637, %v745
        %v747 = vpop.f32.mrf.mxu0
        %v748 = vpop.f32.mrf.mxu0
        %v749 = vadd.f32 %v637, %v748
        %v750 = vpop.f32.mrf.mxu0
        %751 = vmatprep.mubr.bf16.mxu0 0
        %752 = vmatmul.mubr.bf16.gmra.mxu0 %v656
        %v753 = vpop.f32.mrf.mxu0
        %v754 = vadd.f32 %v637, %v753
        %v755 = vpop.f32.mrf.mxu0
        %v756 = vpop.f32.mrf.mxu0
        %v757 = vadd.f32 %v637, %v756
        %v758 = vpop.f32.mrf.mxu0
        %759 = vmatprep.mubr.bf16.mxu0 0
        %760 = vmatmul.mubr.bf16.gmra.mxu0 %v657
        %v761 = vpop.f32.mrf.mxu0
        %v762 = vadd.f32 %v637, %v761
        %v763 = vpop.f32.mrf.mxu0
        %v764 = vpop.f32.mrf.mxu0
        %v765 = vadd.f32 %v637, %v764
        %v766 = vpop.f32.mrf.mxu0
        %767 = vmatprep.mubr.bf16.mxu0 0
        %768 = vmatmul.mubr.bf16.gmra.mxu0 %v658
        %v769 = vpop.f32.mrf.mxu0
        %v770 = vadd.f32 %v637, %v769
        %v771 = vpop.f32.mrf.mxu0
        %v772 = vpop.f32.mrf.mxu0
        %v773 = vadd.f32 %v637, %v772
        %v774 = vpop.f32.mrf.mxu0
        %775 = vdwg.mxu0
        %776 = vst [vmem:[#allocation2] sm:$0xff] %v746
        %777 = vst [vmem:[#allocation2 + $0x8] sm:$0xff] %v749
        %778 = vst [vmem:[#allocation2 + $0x10] sm:$0xff] %v754
        %779 = vst [vmem:[#allocation2 + $0x18] sm:$0xff] %v757
        %780 = vst [vmem:[#allocation2 + $0x20] sm:$0xff] %v762
        %781 = vst [vmem:[#allocation2 + $0x28] sm:$0xff] %v765
        %782 = vst [vmem:[#allocation2 + $0x30] sm:$0xff] %v770
        %783 = vst [vmem:[#allocation2 + $0x38] sm:$0xff] %v773
        %v784 = vld [vmem:[%s551] sm:$0xff]
        %v785 = vld [vmem:[%s551 + $0x8] sm:$0xff]
        %v786 = vld [vmem:[%s537] sm:$0xff]
        %v787 = vld [vmem:[%s537 + $0x8] sm:$0xff]
        %v788 = vld [vmem:[%s544] sm:$0xff]
        %v789 = vld [vmem:[%s544 + $0x8] sm:$0xff]
        loop: start=0, step=1, limit=2
        $region200: #{lmsnn_forward.3} parent=182 // loop_pre_header
          _
        $region201: #{lmsnn_forward.3} parent=182 // loop_header
          %s791 = sphi 0, %s795
          %p792 = scmp.ge.s32.totalorder %s791, 2
          %v796 = vphi %v786, %v1093
          %v797 = vphi %v787, %v1094
          %v798 = vphi %v788, %v1099
          %v799 = vphi %v789, %v1100
        $region202: #{lmsnn_forward.3} parent=182 // loop_header_branch
          %794 = sbr.rel (%p792) target = $region206
        $region203: #{lmsnn_forward.3} parent=182 // loop_body
          %p800 = scmp.lt.s32.totalorder %s791, 0
          %s801 = ssub.s32 0, %s791
          %s802 = scalar_select %p800, %s801, %s791
          %s803 = sand.u32 %s802, 1
          %s804 = ssub.s32 0, %s803
          %s805 = scalar_select %p800, %s804, %s803
          %s806 = sadd.s32 %s791, 1
          %p807 = scmp.lt.s32.totalorder %s806, 1
          %s808 = scalar_select %p807, %s806, 1
          %s809 = ssub.s32 1, %s805
          %s810 = smul.u32 %s808, 64
          %s811 = sshra.s32 %s810, 3
          %s812 = sand.u32 %s810, 7
          %s813 = smul.addr %s811, 4
          %s814 = scalar_lea.vmem %s0, %s813
          %v815 = vld [vmem:[%s814] sm:$0xf]
          %v816 = vld [vmem:[%s814 + $0x4] sm:$0xf]
          %v817 = vld [vmem:[%s814 + $0x8] sm:$0xf]
          %v818 = vld [vmem:[%s814 + $0xc] sm:$0xf]
          %v819 = vld [vmem:[%s814 + $0x10] sm:$0xf]
          %v820 = vld [vmem:[%s814 + $0x14] sm:$0xf]
          %v821 = vld [vmem:[%s814 + $0x18] sm:$0xf]
          %v822 = vld [vmem:[%s814 + $0x1c] sm:$0xf]
          %v823 = vld [vmem:[%s530] sm:$0xf]
          %v824 = vld [vmem:[%s530 + $0x4] sm:$0xf]
          %v825 = vld [vmem:[%s530 + $0x8] sm:$0xf]
          %v826 = vld [vmem:[%s530 + $0xc] sm:$0xf]
          %v827 = vld [vmem:[%s530 + $0x10] sm:$0xf]
          %v828 = vld [vmem:[%s530 + $0x14] sm:$0xf]
          %v829 = vld [vmem:[%s530 + $0x18] sm:$0xf]
          %v830 = vld [vmem:[%s530 + $0x1c] sm:$0xf]
          %v831 = vld [vmem:[%s530 + $0x20] sm:$0xf]
          %v832 = vld [vmem:[%s530 + $0x24] sm:$0xf]
          %v833 = vld [vmem:[%s530 + $0x28] sm:$0xf]
          %v834 = vld [vmem:[%s530 + $0x2c] sm:$0xf]
          %v835 = vld [vmem:[%s530 + $0x30] sm:$0xf]
          %v836 = vld [vmem:[%s530 + $0x34] sm:$0xf]
          %v837 = vld [vmem:[%s530 + $0x38] sm:$0xf]
          %v838 = vld [vmem:[%s530 + $0x3c] sm:$0xf]
          %v839 = vld [vmem:[%s606] sm:$0x1]
          %v841 = vlaneseq
          %v842 = vshrl.u32 %v841, 7
          %v843 = vsub.s32 0, %v842
          %v844 = vrot.slane %v839, %v843
          %v854 = vunpack.c.l.b16 %v815
          %v855 = vunpack.c.l.b16 %v816
          %v856 = vunpack.c.l.b16 %v817
          %v857 = vunpack.c.l.b16 %v818
          %v858 = vunpack.c.l.b16 %v819
          %v859 = vunpack.c.l.b16 %v820
          %v860 = vunpack.c.l.b16 %v821
          %v861 = vunpack.c.l.b16 %v822
          %v862 = vpack.c.b16 %v855, %v854
          %v863 = vpack.c.b16 %v857, %v856
          %v864 = vpack.c.b16 %v859, %v858
          %v865 = vpack.c.b16 %v861, %v860
          %v886 = vunpack.c.l.b16 %v823
          %v887 = vunpack.c.l.b16 %v824
          %v888 = vunpack.c.l.b16 %v825
          %v889 = vunpack.c.l.b16 %v826
          %v890 = vunpack.c.l.b16 %v827
          %v891 = vunpack.c.l.b16 %v828
          %v892 = vunpack.c.l.b16 %v829
          %v893 = vunpack.c.l.b16 %v830
          %v894 = vunpack.c.l.b16 %v831
          %v895 = vunpack.c.l.b16 %v832
          %v896 = vunpack.c.l.b16 %v833
          %v897 = vunpack.c.l.b16 %v834
          %v898 = vunpack.c.l.b16 %v835
          %v899 = vunpack.c.l.b16 %v836
          %v900 = vunpack.c.l.b16 %v837
          %v901 = vunpack.c.l.b16 %v838
          %v902 = vpack.c.b16 %v887, %v886
          %v903 = vpack.c.b16 %v889, %v888
          %v904 = vpack.c.b16 %v891, %v890
          %v905 = vpack.c.b16 %v893, %v892
          %v906 = vpack.c.b16 %v895, %v894
          %v907 = vpack.c.b16 %v897, %v896
          %v908 = vpack.c.b16 %v899, %v898
          %v909 = vpack.c.b16 %v901, %v900
          %918 = vmatprep.subr.bf16.mxu0 0
          %919 = vmatpush1.bf16.msra.mxu0 %v909
          %920 = vmatprep.subr.bf16.mxu0 0
          %921 = vmatpush1.bf16.msra.mxu0 %v908
          %922 = vmatprep.subr.bf16.mxu0 0
          %923 = vmatpush1.bf16.msra.mxu0 %v907
          %924 = vmatprep.subr.bf16.mxu0 0
          %925 = vmatpush1.bf16.msra.mxu0 %v906
          %926 = vmatprep.subr.bf16.mxu0 0
          %927 = vmatpush1.bf16.msra.mxu0 %v905
          %928 = vmatprep.subr.bf16.mxu0 0
          %929 = vmatpush1.bf16.msra.mxu0 %v904
          %930 = vmatprep.subr.bf16.mxu0 0
          %931 = vmatpush1.bf16.msra.mxu0 %v903
          %932 = vmatprep.subr.bf16.mxu0 0
          %933 = vmatpush1.bf16.msra.mxu0 %v902
          %934 = vmatprep.subr.bf16.mxu0 0
          %935 = vmatpush2.bf16.msra.mxu0 0
          %936 = vmatprep.subr.bf16.mxu0 0
          %937 = vmatpush2.bf16.msra.mxu0 0
          %938 = vmatprep.subr.bf16.mxu0 0
          %939 = vmatpush2.bf16.msra.mxu0 0
          %940 = vmatprep.subr.bf16.mxu0 0
          %941 = vmatpush2.bf16.msra.mxu0 0
          %942 = vmatprep.subr.bf16.mxu0 0
          %943 = vmatpush2.bf16.msra.mxu0 0
          %944 = vmatprep.subr.bf16.mxu0 0
          %945 = vmatpush2.bf16.msra.mxu0 0
          %946 = vmatprep.subr.bf16.mxu0 0
          %947 = vmatpush2.bf16.msra.mxu0 0
          %948 = vmatprep.subr.bf16.mxu0 0
          %949 = vmatpush2.bf16.msra.mxu0 0
          %950 = vmatprep.mubr.bf16.mxu0 0
          %951 = vmatmul.mubr.bf16.gmra.mxu0 %v862
          %v952 = vpop.f32.mrf.mxu0
          %v953 = vadd.f32 %v844, %v952
          %v954 = vpop.f32.mrf.mxu0
          %v955 = vpop.f32.mrf.mxu0
          %v956 = vadd.f32 %v844, %v955
          %v957 = vpop.f32.mrf.mxu0
          %958 = vmatprep.mubr.bf16.mxu0 0
          %959 = vmatmul.mubr.bf16.gmra.mxu0 %v863
          %v960 = vpop.f32.mrf.mxu0
          %v961 = vadd.f32 %v844, %v960
          %v962 = vpop.f32.mrf.mxu0
          %v963 = vpop.f32.mrf.mxu0
          %v964 = vadd.f32 %v844, %v963
          %v965 = vpop.f32.mrf.mxu0
          %966 = vmatprep.mubr.bf16.mxu0 0
          %967 = vmatmul.mubr.bf16.gmra.mxu0 %v864
          %v968 = vpop.f32.mrf.mxu0
          %v969 = vadd.f32 %v844, %v968
          %v970 = vpop.f32.mrf.mxu0
          %v971 = vpop.f32.mrf.mxu0
          %v972 = vadd.f32 %v844, %v971
          %v973 = vpop.f32.mrf.mxu0
          %974 = vmatprep.mubr.bf16.mxu0 0
          %975 = vmatmul.mubr.bf16.gmra.mxu0 %v865
          %v976 = vpop.f32.mrf.mxu0
          %v977 = vadd.f32 %v844, %v976
          %v978 = vpop.f32.mrf.mxu0
          %v979 = vpop.f32.mrf.mxu0
          %v980 = vadd.f32 %v844, %v979
          %v981 = vpop.f32.mrf.mxu0
          %982 = vdwg.mxu0
          %s983 = smul.u32 %s809, 64
          %s984 = scalar_lea.vmem [#allocation2], %s983
          %985 = vst [vmem:[%s984] sm:$0xff] %v953
          %986 = vst [vmem:[%s984 + $0x8] sm:$0xff] %v956
          %987 = vst [vmem:[%s984 + $0x10] sm:$0xff] %v961
          %988 = vst [vmem:[%s984 + $0x18] sm:$0xff] %v964
          %989 = vst [vmem:[%s984 + $0x20] sm:$0xff] %v969
          %990 = vst [vmem:[%s984 + $0x28] sm:$0xff] %v972
          %991 = vst [vmem:[%s984 + $0x30] sm:$0xff] %v977
          %992 = vst [vmem:[%s984 + $0x38] sm:$0xff] %v980
          %s993 = smul.u32 %s805, 64
          %s994 = scalar_lea.vmem [#allocation2], %s993
          %v995 = vld [vmem:[%s994] sm:$0xff]
          %v996 = vld [vmem:[%s994 + $0x8] sm:$0xff]
          %vm997 = vcmp.gt.f32.partialorder %v798, 0.0
          %vm998 = vcmp.gt.f32.partialorder %v799, 0.0
          %v999 = vmul.f32 %v796, 0.5
          %v1000 = vmul.f32 %v797, 0.5
          %v1001 = vadd.f32 %v999, %v995
          %v1002 = vadd.f32 %v1000, %v996
          %v1003 = vsel %vm997, %v995, %v1001
          %v1004 = vsel %vm998, %v996, %v1002
          %vm1005 = vcmp.gt.f32.partialorder %v1003, %v784
          %vm1006 = vcmp.gt.f32.partialorder %v1004, %v785
          %v1007 = vsel %vm1005, 1, 0
          %v1008 = vsel %vm1006, 1, 0
          %v1009 = vcvt.s32.f32 %v1007
          %v1010 = vcvt.s32.f32 %v1008
          %v1011 = vpack.c.bf16 %v1010, %v1009
          %s1012 = smul.u32 %s791, 4
          %v1014 = vunpack.c.l.b16 %v1011
          %v1015 = vunpack.c.h.b16 %v1011
          %v1016 = vpack.c.b16 %v1014, %v1014
          %v1017 = vpack.c.b16 %v1015, %v1015
          %s1020 = smul.u32 %s1012, 2
          %s1021 = smul.addr %s1020, 4
          %s1022 = scalar_lea.vmem %s591, %s1021 [#allocation7]
          %1023 = vst [vmem:[%s1022] sm:$0xf] %v1016
          %1024 = vst [vmem:[%s1022 + $0x4] sm:$0xf] %v1017
          %v1025 = vld [vmem:[%s994 + $0x10] sm:$0xff]
          %v1026 = vld [vmem:[%s994 + $0x18] sm:$0xff]
          %vm1027 = vcmp.gt.f32.partialorder %v1009, 0.0
          %vm1028 = vcmp.gt.f32.partialorder %v1010, 0.0
          %v1029 = vmul.f32 %v1003, 0.5
          %v1030 = vmul.f32 %v1004, 0.5
          %v1031 = vadd.f32 %v1029, %v1025
          %v1032 = vadd.f32 %v1030, %v1026
          %v1033 = vsel %vm1027, %v1025, %v1031
          %v1034 = vsel %vm1028, %v1026, %v1032
          %vm1035 = vcmp.gt.f32.partialorder %v1033, %v784
          %vm1036 = vcmp.gt.f32.partialorder %v1034, %v785
          %v1037 = vsel %vm1035, 1, 0
          %v1038 = vsel %vm1036, 1, 0
          %v1039 = vcvt.s32.f32 %v1037
          %v1040 = vcvt.s32.f32 %v1038
          %v1041 = vpack.c.bf16 %v1040, %v1039
          %s1042 = sadd.s32 %s1012, 1
          %v1044 = vunpack.c.l.b16 %v1041
          %v1045 = vunpack.c.h.b16 %v1041
          %v1046 = vpack.c.b16 %v1044, %v1044
          %v1047 = vpack.c.b16 %v1045, %v1045
          %s1050 = smul.u32 %s1042, 2
          %s1051 = smul.addr %s1050, 4
          %s1052 = scalar_lea.vmem %s591, %s1051 [#allocation7]
          %1053 = vst [vmem:[%s1052] sm:$0xf] %v1046
          %1054 = vst [vmem:[%s1052 + $0x4] sm:$0xf] %v1047
          %v1055 = vld [vmem:[%s994 + $0x20] sm:$0xff]
          %v1056 = vld [vmem:[%s994 + $0x28] sm:$0xff]
          %vm1057 = vcmp.gt.f32.partialorder %v1039, 0.0
          %vm1058 = vcmp.gt.f32.partialorder %v1040, 0.0
          %v1059 = vmul.f32 %v1033, 0.5
          %v1060 = vmul.f32 %v1034, 0.5
          %v1061 = vadd.f32 %v1059, %v1055
          %v1062 = vadd.f32 %v1060, %v1056
          %v1063 = vsel %vm1057, %v1055, %v1061
          %v1064 = vsel %vm1058, %v1056, %v1062
          %vm1065 = vcmp.gt.f32.partialorder %v1063, %v784
          %vm1066 = vcmp.gt.f32.partialorder %v1064, %v785
          %v1067 = vsel %vm1065, 1, 0
          %v1068 = vsel %vm1066, 1, 0
          %v1069 = vcvt.s32.f32 %v1067
          %v1070 = vcvt.s32.f32 %v1068
          %v1071 = vpack.c.bf16 %v1070, %v1069
          %s1072 = sadd.s32 %s1012, 2
          %v1074 = vunpack.c.l.b16 %v1071
          %v1075 = vunpack.c.h.b16 %v1071
          %v1076 = vpack.c.b16 %v1074, %v1074
          %v1077 = vpack.c.b16 %v1075, %v1075
          %s1080 = smul.u32 %s1072, 2
          %s1081 = smul.addr %s1080, 4
          %s1082 = scalar_lea.vmem %s591, %s1081 [#allocation7]
          %1083 = vst [vmem:[%s1082] sm:$0xf] %v1076
          %1084 = vst [vmem:[%s1082 + $0x4] sm:$0xf] %v1077
          %v1085 = vld [vmem:[%s994 + $0x30] sm:$0xff]
          %v1086 = vld [vmem:[%s994 + $0x38] sm:$0xff]
          %vm1087 = vcmp.gt.f32.partialorder %v1069, 0.0
          %vm1088 = vcmp.gt.f32.partialorder %v1070, 0.0
          %v1089 = vmul.f32 %v1063, 0.5
          %v1090 = vmul.f32 %v1064, 0.5
          %v1091 = vadd.f32 %v1089, %v1085
          %v1092 = vadd.f32 %v1090, %v1086
          %v1093 = vsel %vm1087, %v1085, %v1091
          %v1094 = vsel %vm1088, %v1086, %v1092
          %vm1095 = vcmp.gt.f32.partialorder %v1093, %v784
          %vm1096 = vcmp.gt.f32.partialorder %v1094, %v785
          %v1097 = vsel %vm1095, 1, 0
          %v1098 = vsel %vm1096, 1, 0
          %v1099 = vcvt.s32.f32 %v1097
          %v1100 = vcvt.s32.f32 %v1098
          %v1101 = vpack.c.bf16 %v1100, %v1099
          %s1102 = sadd.s32 %s1012, 3
          %v1104 = vunpack.c.l.b16 %v1101
          %v1105 = vunpack.c.h.b16 %v1101
          %v1106 = vpack.c.b16 %v1104, %v1104
          %v1107 = vpack.c.b16 %v1105, %v1105
          %s1110 = smul.u32 %s1102, 2
          %s1111 = smul.addr %s1110, 4
          %s1112 = scalar_lea.vmem %s591, %s1111 [#allocation7]
          %1113 = vst [vmem:[%s1112] sm:$0xf] %v1106
          %1114 = vst [vmem:[%s1112 + $0x4] sm:$0xf] %v1107
        $region204: #{lmsnn_forward.3} parent=182 // loop_footer
          %s795 = sadd.s32 1, %s791
        $region205: #{lmsnn_forward.3} parent=182 // loop_footer_branch
          %790 = sbr.rel target = $region201
        $region206: #{lmsnn_forward.3} parent=182 // loop_exit
          _
        %1115 = vst [vmem:[%s597] sm:$0xff] %v796
        %1116 = vst [vmem:[%s597 + $0x8] sm:$0xff] %v797
        %1117 = vst [vmem:[%s603] sm:$0xff] %v798
        %1118 = vst [vmem:[%s603 + $0x8] sm:$0xff] %v799
        %s1119 = sand.u32 %s179, 1
        %s1120 = sand.u32 %s179, 1
        %s1121 = smul.addr %s1120, 64
        %s1122 = scalar_lea.vmem [#allocation7], %s1121
        %s1123 = sand.u32 %s205, 1
        %s1124 = sand.u32 %s205, 1
        %s1125 = smul.addr %s1124, 16
        %s1126 = scalar_lea.vmem [#allocation8], %s1125
        %s1127 = sand.u32 %s231, 1
        %s1128 = sand.u32 %s231, 1
        %s1129 = smul.addr %s1128, 16
        %s1130 = scalar_lea.vmem [#allocation9], %s1129
        // Predicated region
        $region207: #{lmsnn_forward.3} parent=182 // pred_check
          %p1131 = pneg %p189
        $region208: #{lmsnn_forward.3} parent=182 // pred_check_branch
          %1133 = sbr.rel (%p1131) target = $region210
        $region209: #{lmsnn_forward.3} parent=182 // pred_region
          %s1134 = smul.addr %s20, 4
          %s1135 = scalar_lea.vmem %s6, %s1134
          // Predicated region
          $region211: #{lmsnn_forward.3} parent=209 // pred_check
            _
          $region212: #{lmsnn_forward.3} parent=209 // pred_check_branch
            %1137 = sbr.rel (0) target = $region214
          $region213: #{lmsnn_forward.3} parent=209 // pred_region
            // Predicated region
            $region215: #{lmsnn_forward.3} parent=213 // pred_check
              _
            $region216: #{lmsnn_forward.3} parent=213 // pred_check_branch
              %1139 = sbr.rel target = $region218
            $region217: #{lmsnn_forward.3} parent=213 // pred_region
              // Predicated region
              $region230: #{lmsnn_forward.3} parent=217 // pred_check
                _
              $region231: #{lmsnn_forward.3} parent=217 // pred_check_branch
                %1185 = sbr.rel (0) target = $region233
              $region232: #{lmsnn_forward.3} parent=217 // pred_region
                loop: start=0, step=1, limit=1
                $region234: #{lmsnn_forward.3} parent=232 // loop_pre_header
                  _
                $region235: #{lmsnn_forward.3} parent=232 // loop_header
                  %s1187 = sphi 0, %s1191
                  %p1188 = scmp.ge.s32.totalorder %s1187, 1
                  %s1192 = sphi %s1122, %s1122
                  %s1193 = sphi %s1135, %s1135
                $region236: #{lmsnn_forward.3} parent=232 // loop_header_branch
                  %1190 = sbr.rel (%p1188) target = $region240
                $region237: #{lmsnn_forward.3} parent=232 // loop_body
                  _
                $region238: #{lmsnn_forward.3} parent=232 // loop_footer
                  %s1191 = sadd.s32 1, %s1187
                $region239: #{lmsnn_forward.3} parent=232 // loop_footer_branch
                  %1186 = sbr.rel target = $region235
                $region240: #{lmsnn_forward.3} parent=232 // loop_exit
                  _
                %s1195 = ssub.s32 16, 1
                loop: start=0, step=1, limit=1
                $region241: #{lmsnn_forward.3} parent=232 // loop_pre_header
                  _
                $region242: #{lmsnn_forward.3} parent=232 // loop_header
                  %s1197 = sphi 0, %s1201
                  %p1198 = scmp.ge.s32.totalorder %s1197, 1
                  %s1202 = sphi %s1122, %s1122
                  %s1203 = sphi %s1135, %s1135
                $region243: #{lmsnn_forward.3} parent=232 // loop_header_branch
                  %1200 = sbr.rel (%p1198) target = $region247
                $region244: #{lmsnn_forward.3} parent=232 // loop_body
                  %v1204 = vld [vmem:[%s1202] sm:%s1195]
                  %1205 = vst [vmem:[%s1203] sm:%s1195] %v1204
                  %v1206 = vld [vmem:[%s1202 + $0x4] sm:%s1195]
                  %1207 = vst [vmem:[%s1203 + $0x8] sm:%s1195] %v1206
                  %v1208 = vld [vmem:[%s1202 + $0x8] sm:%s1195]
                  %1209 = vst [vmem:[%s1203 + $0x10] sm:%s1195] %v1208
                  %v1210 = vld [vmem:[%s1202 + $0xc] sm:%s1195]
                  %1211 = vst [vmem:[%s1203 + $0x18] sm:%s1195] %v1210
                  %v1212 = vld [vmem:[%s1202 + $0x10] sm:%s1195]
                  %1213 = vst [vmem:[%s1203 + $0x20] sm:%s1195] %v1212
                  %v1214 = vld [vmem:[%s1202 + $0x14] sm:%s1195]
                  %1215 = vst [vmem:[%s1203 + $0x28] sm:%s1195] %v1214
                  %v1216 = vld [vmem:[%s1202 + $0x18] sm:%s1195]
                  %1217 = vst [vmem:[%s1203 + $0x30] sm:%s1195] %v1216
                  %v1218 = vld [vmem:[%s1202 + $0x1c] sm:%s1195]
                  %1219 = vst [vmem:[%s1203 + $0x38] sm:%s1195] %v1218
                  %v1220 = vld [vmem:[%s1202 + $0x20] sm:%s1195]
                  %1221 = vst [vmem:[%s1203 + $0x40] sm:%s1195] %v1220
                  %v1222 = vld [vmem:[%s1202 + $0x24] sm:%s1195]
                  %1223 = vst [vmem:[%s1203 + $0x48] sm:%s1195] %v1222
                  %v1224 = vld [vmem:[%s1202 + $0x28] sm:%s1195]
                  %1225 = vst [vmem:[%s1203 + $0x50] sm:%s1195] %v1224
                  %v1226 = vld [vmem:[%s1202 + $0x2c] sm:%s1195]
                  %1227 = vst [vmem:[%s1203 + $0x58] sm:%s1195] %v1226
                  %v1228 = vld [vmem:[%s1202 + $0x30] sm:%s1195]
                  %1229 = vst [vmem:[%s1203 + $0x60] sm:%s1195] %v1228
                  %v1230 = vld [vmem:[%s1202 + $0x34] sm:%s1195]
                  %1231 = vst [vmem:[%s1203 + $0x68] sm:%s1195] %v1230
                  %v1232 = vld [vmem:[%s1202 + $0x38] sm:%s1195]
                  %1233 = vst [vmem:[%s1203 + $0x70] sm:%s1195] %v1232
                  %v1234 = vld [vmem:[%s1202 + $0x3c] sm:%s1195]
                  %1235 = vst [vmem:[%s1203 + $0x78] sm:%s1195] %v1234
                $region245: #{lmsnn_forward.3} parent=232 // loop_footer
                  %s1201 = sadd.s32 1, %s1197
                $region246: #{lmsnn_forward.3} parent=232 // loop_footer_branch
                  %1196 = sbr.rel target = $region242
                $region247: #{lmsnn_forward.3} parent=232 // loop_exit
                  _
              $region233: #{lmsnn_forward.3} parent=217 // pred_fallthru
                _
            $region218: #{lmsnn_forward.3} parent=213 // pred_fallthru
              _
            // Predicated region
            $region219: #{lmsnn_forward.3} parent=213 // pred_check
              _
            $region220: #{lmsnn_forward.3} parent=213 // pred_check_branch
              %1141 = sbr.rel (0) target = $region222
            $region221: #{lmsnn_forward.3} parent=213 // pred_region
              %s1143 = ssub.s32 16, 1
              loop: start=0, step=1, limit=1
              $region223: #{lmsnn_forward.3} parent=221 // loop_pre_header
                _
              $region224: #{lmsnn_forward.3} parent=221 // loop_header
                %s1145 = sphi 0, %s1149
                %p1146 = scmp.ge.s32.totalorder %s1145, 1
                %s1150 = sphi %s1122, %s1122
                %s1151 = sphi %s1135, %s1135
              $region225: #{lmsnn_forward.3} parent=221 // loop_header_branch
                %1148 = sbr.rel (%p1146) target = $region229
              $region226: #{lmsnn_forward.3} parent=221 // loop_body
                %v1152 = vld [vmem:[%s1150] sm:%s1143]
                %1153 = vst [vmem:[%s1151] sm:%s1143] %v1152
                %v1154 = vld [vmem:[%s1150 + $0x4] sm:%s1143]
                %1155 = vst [vmem:[%s1151 + $0x8] sm:%s1143] %v1154
                %v1156 = vld [vmem:[%s1150 + $0x8] sm:%s1143]
                %1157 = vst [vmem:[%s1151 + $0x10] sm:%s1143] %v1156
                %v1158 = vld [vmem:[%s1150 + $0xc] sm:%s1143]
                %1159 = vst [vmem:[%s1151 + $0x18] sm:%s1143] %v1158
                %v1160 = vld [vmem:[%s1150 + $0x10] sm:%s1143]
                %1161 = vst [vmem:[%s1151 + $0x20] sm:%s1143] %v1160
                %v1162 = vld [vmem:[%s1150 + $0x14] sm:%s1143]
                %1163 = vst [vmem:[%s1151 + $0x28] sm:%s1143] %v1162
                %v1164 = vld [vmem:[%s1150 + $0x18] sm:%s1143]
                %1165 = vst [vmem:[%s1151 + $0x30] sm:%s1143] %v1164
                %v1166 = vld [vmem:[%s1150 + $0x1c] sm:%s1143]
                %1167 = vst [vmem:[%s1151 + $0x38] sm:%s1143] %v1166
                %v1168 = vld [vmem:[%s1150 + $0x20] sm:%s1143]
                %1169 = vst [vmem:[%s1151 + $0x40] sm:%s1143] %v1168
                %v1170 = vld [vmem:[%s1150 + $0x24] sm:%s1143]
                %1171 = vst [vmem:[%s1151 + $0x48] sm:%s1143] %v1170
                %v1172 = vld [vmem:[%s1150 + $0x28] sm:%s1143]
                %1173 = vst [vmem:[%s1151 + $0x50] sm:%s1143] %v1172
                %v1174 = vld [vmem:[%s1150 + $0x2c] sm:%s1143]
                %1175 = vst [vmem:[%s1151 + $0x58] sm:%s1143] %v1174
                %v1176 = vld [vmem:[%s1150 + $0x30] sm:%s1143]
                %1177 = vst [vmem:[%s1151 + $0x60] sm:%s1143] %v1176
                %v1178 = vld [vmem:[%s1150 + $0x34] sm:%s1143]
                %1179 = vst [vmem:[%s1151 + $0x68] sm:%s1143] %v1178
                %v1180 = vld [vmem:[%s1150 + $0x38] sm:%s1143]
                %1181 = vst [vmem:[%s1151 + $0x70] sm:%s1143] %v1180
                %v1182 = vld [vmem:[%s1150 + $0x3c] sm:%s1143]
                %1183 = vst [vmem:[%s1151 + $0x78] sm:%s1143] %v1182
              $region227: #{lmsnn_forward.3} parent=221 // loop_footer
                %s1149 = sadd.s32 1, %s1145
              $region228: #{lmsnn_forward.3} parent=221 // loop_footer_branch
                %1144 = sbr.rel target = $region224
              $region229: #{lmsnn_forward.3} parent=221 // loop_exit
                _
            $region222: #{lmsnn_forward.3} parent=213 // pred_fallthru
              _
          $region214: #{lmsnn_forward.3} parent=209 // pred_fallthru
            _
          %1236 = vnop
        $region210: #{lmsnn_forward.3} parent=182 // pred_fallthru
          _
        // Predicated region
        $region248: #{lmsnn_forward.3} parent=182 // pred_check
          %p1237 = pneg %p215
        $region249: #{lmsnn_forward.3} parent=182 // pred_check_branch
          %1239 = sbr.rel (%p1237) target = $region251
        $region250: #{lmsnn_forward.3} parent=182 // pred_region
          %s1240 = smul.addr %s20, 8
          %s1241 = scalar_lea.vmem %s7, %s1240
          // Predicated region
          $region252: #{lmsnn_forward.3} parent=250 // pred_check
            _
          $region253: #{lmsnn_forward.3} parent=250 // pred_check_branch
            %1243 = sbr.rel (0) target = $region255
          $region254: #{lmsnn_forward.3} parent=250 // pred_region
            // Predicated region
            $region256: #{lmsnn_forward.3} parent=254 // pred_check
              _
            $region257: #{lmsnn_forward.3} parent=254 // pred_check_branch
              %1245 = sbr.rel (0) target = $region259
            $region258: #{lmsnn_forward.3} parent=254 // pred_region
              // Predicated region
              $region271: #{lmsnn_forward.3} parent=258 // pred_check
                _
              $region272: #{lmsnn_forward.3} parent=258 // pred_check_branch
                %1263 = sbr.rel (0) target = $region274
              $region273: #{lmsnn_forward.3} parent=258 // pred_region
                loop: start=0, step=1, limit=1
                $region275: #{lmsnn_forward.3} parent=273 // loop_pre_header
                  _
                $region276: #{lmsnn_forward.3} parent=273 // loop_header
                  %s1265 = sphi 0, %s1269
                  %p1266 = scmp.ge.s32.totalorder %s1265, 1
                  %s1270 = sphi %s1126, %s1126
                  %s1271 = sphi %s1241, %s1241
                $region277: #{lmsnn_forward.3} parent=273 // loop_header_branch
                  %1268 = sbr.rel (%p1266) target = $region281
                $region278: #{lmsnn_forward.3} parent=273 // loop_body
                  %v1272 = vld [vmem:[%s1270] sm:$0xff]
                  %1273 = vst [vmem:[%s1271] sm:$0xff] %v1272
                  %v1274 = vld [vmem:[%s1270 + $0x8] sm:$0xff]
                  %1275 = vst [vmem:[%s1271 + $0x10] sm:$0xff] %v1274
                $region279: #{lmsnn_forward.3} parent=273 // loop_footer
                  %s1269 = sadd.s32 1, %s1265
                $region280: #{lmsnn_forward.3} parent=273 // loop_footer_branch
                  %1264 = sbr.rel target = $region276
                $region281: #{lmsnn_forward.3} parent=273 // loop_exit
                  _
              $region274: #{lmsnn_forward.3} parent=258 // pred_fallthru
                _
              // Predicated region
              $region282: #{lmsnn_forward.3} parent=258 // pred_check
                _
              $region283: #{lmsnn_forward.3} parent=258 // pred_check_branch
                %1277 = sbr.rel target = $region285
              $region284: #{lmsnn_forward.3} parent=258 // pred_region
                _
              $region285: #{lmsnn_forward.3} parent=258 // pred_fallthru
                _
            $region259: #{lmsnn_forward.3} parent=254 // pred_fallthru
              _
            // Predicated region
            $region260: #{lmsnn_forward.3} parent=254 // pred_check
              _
            $region261: #{lmsnn_forward.3} parent=254 // pred_check_branch
              %1247 = sbr.rel target = $region263
            $region262: #{lmsnn_forward.3} parent=254 // pred_region
              %s1249 = ssub.s32 256, 1
              loop: start=0, step=1, limit=1
              $region264: #{lmsnn_forward.3} parent=262 // loop_pre_header
                _
              $region265: #{lmsnn_forward.3} parent=262 // loop_header
                %s1251 = sphi 0, %s1255
                %p1252 = scmp.ge.s32.totalorder %s1251, 1
                %s1256 = sphi %s1126, %s1126
                %s1257 = sphi %s1241, %s1241
              $region266: #{lmsnn_forward.3} parent=262 // loop_header_branch
                %1254 = sbr.rel (%p1252) target = $region270
              $region267: #{lmsnn_forward.3} parent=262 // loop_body
                %v1258 = vld [vmem:[%s1256] sm:%s1249]
                %1259 = vst [vmem:[%s1257] sm:%s1249] %v1258
                %v1260 = vld [vmem:[%s1256 + $0x8] sm:%s1249]
                %1261 = vst [vmem:[%s1257 + $0x10] sm:%s1249] %v1260
              $region268: #{lmsnn_forward.3} parent=262 // loop_footer
                %s1255 = sadd.s32 1, %s1251
              $region269: #{lmsnn_forward.3} parent=262 // loop_footer_branch
                %1250 = sbr.rel target = $region265
              $region270: #{lmsnn_forward.3} parent=262 // loop_exit
                _
            $region263: #{lmsnn_forward.3} parent=254 // pred_fallthru
              _
          $region255: #{lmsnn_forward.3} parent=250 // pred_fallthru
            _
          %1278 = vnop
        $region251: #{lmsnn_forward.3} parent=182 // pred_fallthru
          _
        // Predicated region
        $region286: #{lmsnn_forward.3} parent=182 // pred_check
          %p1279 = pneg %p241
        $region287: #{lmsnn_forward.3} parent=182 // pred_check_branch
          %1281 = sbr.rel (%p1279) target = $region289
        $region288: #{lmsnn_forward.3} parent=182 // pred_region
          %s1282 = smul.addr %s20, 8
          %s1283 = scalar_lea.vmem %s8, %s1282
          // Predicated region
          $region290: #{lmsnn_forward.3} parent=288 // pred_check
            _
          $region291: #{lmsnn_forward.3} parent=288 // pred_check_branch
            %1285 = sbr.rel (0) target = $region293
          $region292: #{lmsnn_forward.3} parent=288 // pred_region
            // Predicated region
            $region294: #{lmsnn_forward.3} parent=292 // pred_check
              _
            $region295: #{lmsnn_forward.3} parent=292 // pred_check_branch
              %1287 = sbr.rel (0) target = $region297
            $region296: #{lmsnn_forward.3} parent=292 // pred_region
              // Predicated region
              $region309: #{lmsnn_forward.3} parent=296 // pred_check
                _
              $region310: #{lmsnn_forward.3} parent=296 // pred_check_branch
                %1305 = sbr.rel (0) target = $region312
              $region311: #{lmsnn_forward.3} parent=296 // pred_region
                loop: start=0, step=1, limit=1
                $region313: #{lmsnn_forward.3} parent=311 // loop_pre_header
                  _
                $region314: #{lmsnn_forward.3} parent=311 // loop_header
                  %s1307 = sphi 0, %s1311
                  %p1308 = scmp.ge.s32.totalorder %s1307, 1
                  %s1312 = sphi %s1130, %s1130
                  %s1313 = sphi %s1283, %s1283
                $region315: #{lmsnn_forward.3} parent=311 // loop_header_branch
                  %1310 = sbr.rel (%p1308) target = $region319
                $region316: #{lmsnn_forward.3} parent=311 // loop_body
                  %v1314 = vld [vmem:[%s1312] sm:$0xff]
                  %1315 = vst [vmem:[%s1313] sm:$0xff] %v1314
                  %v1316 = vld [vmem:[%s1312 + $0x8] sm:$0xff]
                  %1317 = vst [vmem:[%s1313 + $0x10] sm:$0xff] %v1316
                $region317: #{lmsnn_forward.3} parent=311 // loop_footer
                  %s1311 = sadd.s32 1, %s1307
                $region318: #{lmsnn_forward.3} parent=311 // loop_footer_branch
                  %1306 = sbr.rel target = $region314
                $region319: #{lmsnn_forward.3} parent=311 // loop_exit
                  _
              $region312: #{lmsnn_forward.3} parent=296 // pred_fallthru
                _
              // Predicated region
              $region320: #{lmsnn_forward.3} parent=296 // pred_check
                _
              $region321: #{lmsnn_forward.3} parent=296 // pred_check_branch
                %1319 = sbr.rel target = $region323
              $region322: #{lmsnn_forward.3} parent=296 // pred_region
                _
              $region323: #{lmsnn_forward.3} parent=296 // pred_fallthru
                _
            $region297: #{lmsnn_forward.3} parent=292 // pred_fallthru
              _
            // Predicated region
            $region298: #{lmsnn_forward.3} parent=292 // pred_check
              _
            $region299: #{lmsnn_forward.3} parent=292 // pred_check_branch
              %1289 = sbr.rel target = $region301
            $region300: #{lmsnn_forward.3} parent=292 // pred_region
              %s1291 = ssub.s32 256, 1
              loop: start=0, step=1, limit=1
              $region302: #{lmsnn_forward.3} parent=300 // loop_pre_header
                _
              $region303: #{lmsnn_forward.3} parent=300 // loop_header
                %s1293 = sphi 0, %s1297
                %p1294 = scmp.ge.s32.totalorder %s1293, 1
                %s1298 = sphi %s1130, %s1130
                %s1299 = sphi %s1283, %s1283
              $region304: #{lmsnn_forward.3} parent=300 // loop_header_branch
                %1296 = sbr.rel (%p1294) target = $region308
              $region305: #{lmsnn_forward.3} parent=300 // loop_body
                %v1300 = vld [vmem:[%s1298] sm:%s1291]
                %1301 = vst [vmem:[%s1299] sm:%s1291] %v1300
                %v1302 = vld [vmem:[%s1298 + $0x8] sm:%s1291]
                %1303 = vst [vmem:[%s1299 + $0x10] sm:%s1291] %v1302
              $region306: #{lmsnn_forward.3} parent=300 // loop_footer
                %s1297 = sadd.s32 1, %s1293
              $region307: #{lmsnn_forward.3} parent=300 // loop_footer_branch
                %1292 = sbr.rel target = $region303
              $region308: #{lmsnn_forward.3} parent=300 // loop_exit
                _
            $region301: #{lmsnn_forward.3} parent=292 // pred_fallthru
              _
          $region293: #{lmsnn_forward.3} parent=288 // pred_fallthru
            _
          %1320 = vnop
        $region289: #{lmsnn_forward.3} parent=182 // pred_fallthru
          _
      $region183: #{lmsnn_forward.3} parent=5 // pred_fallthru
        _
      %p1321 = scmp.le.s32.totalorder 2, %s15
      // Predicated region
      $region324: #{lmsnn_forward.3} parent=5 // pred_check
        %p1322 = pneg %p1321
      $region325: #{lmsnn_forward.3} parent=5 // pred_check_branch
        %1324 = sbr.rel (%p1322) target = $region327
      $region326: #{lmsnn_forward.3} parent=5 // pred_region
        %s1325 = ssub.s32 %s15, 2
        // Predicated region
        $region328: #{lmsnn_forward.3} parent=326 // pred_check
          %p1326 = pneg %p195
        $region329: #{lmsnn_forward.3} parent=326 // pred_check_branch
          %1328 = sbr.rel (%p1326) target = $region331
        $region330: #{lmsnn_forward.3} parent=326 // pred_region
          %s1329 = sand.u32 %s180, 1
          %s1330 = sand.u32 %s180, 1
          %s1331 = smul.addr %s1330, 64
          %s1332 = scalar_lea.vmem [#allocation7], %s1331
        $region331: #{lmsnn_forward.3} parent=326 // pred_fallthru
          _
        // Predicated region
        $region332: #{lmsnn_forward.3} parent=326 // pred_check
          %p1333 = pneg %p221
        $region333: #{lmsnn_forward.3} parent=326 // pred_check_branch
          %1335 = sbr.rel (%p1333) target = $region335
        $region334: #{lmsnn_forward.3} parent=326 // pred_region
          %s1336 = sand.u32 %s206, 1
          %s1337 = sand.u32 %s206, 1
          %s1338 = smul.addr %s1337, 16
          %s1339 = scalar_lea.vmem [#allocation8], %s1338
        $region335: #{lmsnn_forward.3} parent=326 // pred_fallthru
          _
        // Predicated region
        $region336: #{lmsnn_forward.3} parent=326 // pred_check
          %p1340 = pneg %p247
        $region337: #{lmsnn_forward.3} parent=326 // pred_check_branch
          %1342 = sbr.rel (%p1340) target = $region339
        $region338: #{lmsnn_forward.3} parent=326 // pred_region
          %s1343 = sand.u32 %s232, 1
          %s1344 = sand.u32 %s232, 1
          %s1345 = smul.addr %s1344, 16
          %s1346 = scalar_lea.vmem [#allocation9], %s1345
        $region339: #{lmsnn_forward.3} parent=326 // pred_fallthru
          _
      $region327: #{lmsnn_forward.3} parent=5 // pred_fallthru
        _
    $region6: #{lmsnn_forward.3} parent=1 // loop_footer
      %s19 = sadd.s32 1, %s15
    $region7: #{lmsnn_forward.3} parent=1 // loop_footer_branch
      %14 = sbr.rel target = $region3
    $region8: #{lmsnn_forward.3} parent=1 // loop_exit
      _

// kernel: lmsnn_forward.4
$region0: #{lmsnn_forward.4}
  #allocation0 [shape = 'u32[]', space=smem, size = 0x4, offset = 0x4, fixed_abs, tag = 'smem constant byte address 0x4 - core index']
  #allocation1 [shape = 'u32[144,128]{1,0:T(1,128)}', space=vmem, size = 0x12000, scoped, tag = 'internal scratch']
  #allocation2 [shape = 'f32[2,64,128]{2,1,0:T(8,128)}', space=vmem, size = 0x10000, scoped, tag = 'scratch operand']
  %s0 = inlined_call_operand.vmem [shape: bf16[128,256], index: 0, kind: input, shape index: {}]
  %s1 = inlined_call_operand.vmem [shape: bf16[256,128], index: 1, kind: input, shape index: {}]
  %s2 = inlined_call_operand.vmem [shape: f32[1,128], index: 2, kind: input, shape index: {}]
  %s3 = inlined_call_operand.vmem [shape: f32[16,128], index: 3, kind: input, shape index: {}]
  %s4 = inlined_call_operand.vmem [shape: f32[16,128], index: 4, kind: input, shape index: {}]
  %s5 = inlined_call_operand.vmem [shape: f32[16,128], index: 5, kind: input, shape index: {}]
  %s6 = inlined_call_operand.vmem [shape: bf16[8,16,128], index: 6, kind: output, shape index: {0}]
  %s7 = inlined_call_operand.vmem [shape: f32[16,128], index: 7, kind: output, shape index: {1}]
  %s8 = inlined_call_operand.vmem [shape: f32[16,128], index: 8, kind: output, shape index: {2}]
  %9 = xla_tuple %s6, %s7, %s8
  %s10 = sld [smem:[#allocation0]]
  $region57: #{lmsnn_forward.4} parent=0
    _
  %s12 = ssub.s32 1, %s10
  %s13 = scalar_select 0, %s12, %s10
  // Predicated region
  $region2: #{lmsnn_forward.4} parent=0 // pred_check
    _
  $region3: #{lmsnn_forward.4} parent=0 // pred_check_branch
    %15 = sbr.rel (0) target = $region5
  $region4: #{lmsnn_forward.4} parent=0 // pred_region
    _
  $region5: #{lmsnn_forward.4} parent=0 // pred_fallthru
    _
  // Predicated region
  $region6: #{lmsnn_forward.4} parent=0 // pred_check
    _
  $region7: #{lmsnn_forward.4} parent=0 // pred_check_branch
    %17 = sbr.rel (0) target = $region9
  $region8: #{lmsnn_forward.4} parent=0 // pred_region
    _
  $region9: #{lmsnn_forward.4} parent=0 // pred_fallthru
    _
  // Predicated region
  $region10: #{lmsnn_forward.4} parent=0 // pred_check
    _
  $region11: #{lmsnn_forward.4} parent=0 // pred_check_branch
    %19 = sbr.rel (0) target = $region13
  $region12: #{lmsnn_forward.4} parent=0 // pred_region
    _
  $region13: #{lmsnn_forward.4} parent=0 // pred_fallthru
    _
  // Predicated region
  $region14: #{lmsnn_forward.4} parent=0 // pred_check
    _
  $region15: #{lmsnn_forward.4} parent=0 // pred_check_branch
    %21 = sbr.rel (0) target = $region17
  $region16: #{lmsnn_forward.4} parent=0 // pred_region
    _
  $region17: #{lmsnn_forward.4} parent=0 // pred_fallthru
    _
  // Predicated region
  $region18: #{lmsnn_forward.4} parent=0 // pred_check
    _
  $region19: #{lmsnn_forward.4} parent=0 // pred_check_branch
    %23 = sbr.rel (0) target = $region21
  $region20: #{lmsnn_forward.4} parent=0 // pred_region
    _
  $region21: #{lmsnn_forward.4} parent=0 // pred_fallthru
    _
  // Predicated region
  $region22: #{lmsnn_forward.4} parent=0 // pred_check
    _
  $region23: #{lmsnn_forward.4} parent=0 // pred_check_branch
    %25 = sbr.rel (0) target = $region25
  $region24: #{lmsnn_forward.4} parent=0 // pred_region
    _
  $region25: #{lmsnn_forward.4} parent=0 // pred_fallthru
    _
  %v27 = vld [vmem:[%s0] sm:$0xff]
  %v28 = vld [vmem:[%s0 + $0x8] sm:$0xff]
  %v29 = vld [vmem:[%s0 + $0x10] sm:$0xff]
  %v30 = vld [vmem:[%s0 + $0x18] sm:$0xff]
  %v31 = vld [vmem:[%s0 + $0x20] sm:$0xff]
  %v32 = vld [vmem:[%s0 + $0x28] sm:$0xff]
  %v33 = vld [vmem:[%s0 + $0x30] sm:$0xff]
  %v34 = vld [vmem:[%s0 + $0x38] sm:$0xff]
  %v35 = vld [vmem:[%s1] sm:$0xf]
  %v36 = vld [vmem:[%s1 + $0x4] sm:$0xf]
  %v37 = vld [vmem:[%s1 + $0x8] sm:$0xf]
  %v38 = vld [vmem:[%s1 + $0xc] sm:$0xf]
  %v39 = vld [vmem:[%s1 + $0x10] sm:$0xf]
  %v40 = vld [vmem:[%s1 + $0x14] sm:$0xf]
  %v41 = vld [vmem:[%s1 + $0x18] sm:$0xf]
  %v42 = vld [vmem:[%s1 + $0x1c] sm:$0xf]
  %v43 = vld [vmem:[%s1 + $0x20] sm:$0xf]
  %v44 = vld [vmem:[%s1 + $0x24] sm:$0xf]
  %v45 = vld [vmem:[%s1 + $0x28] sm:$0xf]
  %v46 = vld [vmem:[%s1 + $0x2c] sm:$0xf]
  %v47 = vld [vmem:[%s1 + $0x30] sm:$0xf]
  %v48 = vld [vmem:[%s1 + $0x34] sm:$0xf]
  %v49 = vld [vmem:[%s1 + $0x38] sm:$0xf]
  %v50 = vld [vmem:[%s1 + $0x3c] sm:$0xf]
  %v51 = vld [vmem:[%s1 + $0x40] sm:$0xf]
  %v52 = vld [vmem:[%s1 + $0x44] sm:$0xf]
  %v53 = vld [vmem:[%s1 + $0x48] sm:$0xf]
  %v54 = vld [vmem:[%s1 + $0x4c] sm:$0xf]
  %v55 = vld [vmem:[%s1 + $0x50] sm:$0xf]
  %v56 = vld [vmem:[%s1 + $0x54] sm:$0xf]
  %v57 = vld [vmem:[%s1 + $0x58] sm:$0xf]
  %v58 = vld [vmem:[%s1 + $0x5c] sm:$0xf]
  %v59 = vld [vmem:[%s1 + $0x60] sm:$0xf]
  %v60 = vld [vmem:[%s1 + $0x64] sm:$0xf]
  %v61 = vld [vmem:[%s1 + $0x68] sm:$0xf]
  %v62 = vld [vmem:[%s1 + $0x6c] sm:$0xf]
  %v63 = vld [vmem:[%s1 + $0x70] sm:$0xf]
  %v64 = vld [vmem:[%s1 + $0x74] sm:$0xf]
  %v65 = vld [vmem:[%s1 + $0x78] sm:$0xf]
  %v66 = vld [vmem:[%s1 + $0x7c] sm:$0xf]
  %v67 = vld [vmem:[%s2] sm:$0x1]
  %v69 = vlaneseq
  %v70 = vshrl.u32 %v69, 7
  %v71 = vsub.s32 0, %v70
  %v72 = vrot.slane %v67, %v71
  %v82 = vunpack.c.l.b16 %v27
  %v83 = vunpack.c.h.b16 %v27
  %v84 = vunpack.c.l.b16 %v28
  %v85 = vunpack.c.h.b16 %v28
  %v86 = vunpack.c.l.b16 %v29
  %v87 = vunpack.c.h.b16 %v29
  %v88 = vunpack.c.l.b16 %v30
  %v89 = vunpack.c.h.b16 %v30
  %v90 = vunpack.c.l.b16 %v31
  %v91 = vunpack.c.h.b16 %v31
  %v92 = vunpack.c.l.b16 %v32
  %v93 = vunpack.c.h.b16 %v32
  %v94 = vunpack.c.l.b16 %v33
  %v95 = vunpack.c.h.b16 %v33
  %v96 = vunpack.c.l.b16 %v34
  %v97 = vunpack.c.h.b16 %v34
  %v98 = vpack.c.b16 %v84, %v82
  %v99 = vpack.c.b16 %v85, %v83
  %v100 = vpack.c.b16 %v88, %v86
  %v101 = vpack.c.b16 %v89, %v87
  %v102 = vpack.c.b16 %v92, %v90
  %v103 = vpack.c.b16 %v93, %v91
  %v104 = vpack.c.b16 %v96, %v94
  %v105 = vpack.c.b16 %v97, %v95
  %v146 = vunpack.c.l.b16 %v35
  %v147 = vunpack.c.l.b16 %v36
  %v148 = vunpack.c.l.b16 %v37
  %v149 = vunpack.c.l.b16 %v38
  %v150 = vunpack.c.l.b16 %v39
  %v151 = vunpack.c.l.b16 %v40
  %v152 = vunpack.c.l.b16 %v41
  %v153 = vunpack.c.l.b16 %v42
  %v154 = vunpack.c.l.b16 %v43
  %v155 = vunpack.c.l.b16 %v44
  %v156 = vunpack.c.l.b16 %v45
  %v157 = vunpack.c.l.b16 %v46
  %v158 = vunpack.c.l.b16 %v47
  %v159 = vunpack.c.l.b16 %v48
  %v160 = vunpack.c.l.b16 %v49
  %v161 = vunpack.c.l.b16 %v50
  %v162 = vunpack.c.l.b16 %v51
  %v163 = vunpack.c.l.b16 %v52
  %v164 = vunpack.c.l.b16 %v53
  %v165 = vunpack.c.l.b16 %v54
  %v166 = vunpack.c.l.b16 %v55
  %v167 = vunpack.c.l.b16 %v56
  %v168 = vunpack.c.l.b16 %v57
  %v169 = vunpack.c.l.b16 %v58
  %v170 = vunpack.c.l.b16 %v59
  %v171 = vunpack.c.l.b16 %v60
  %v172 = vunpack.c.l.b16 %v61
  %v173 = vunpack.c.l.b16 %v62
  %v174 = vunpack.c.l.b16 %v63
  %v175 = vunpack.c.l.b16 %v64
  %v176 = vunpack.c.l.b16 %v65
  %v177 = vunpack.c.l.b16 %v66
  %v178 = vpack.c.b16 %v147, %v146
  %v179 = vpack.c.b16 %v149, %v148
  %v180 = vpack.c.b16 %v151, %v150
  %v181 = vpack.c.b16 %v153, %v152
  %v182 = vpack.c.b16 %v155, %v154
  %v183 = vpack.c.b16 %v157, %v156
  %v184 = vpack.c.b16 %v159, %v158
  %v185 = vpack.c.b16 %v161, %v160
  %v186 = vpack.c.b16 %v163, %v162
  %v187 = vpack.c.b16 %v165, %v164
  %v188 = vpack.c.b16 %v167, %v166
  %v189 = vpack.c.b16 %v169, %v168
  %v190 = vpack.c.b16 %v171, %v170
  %v191 = vpack.c.b16 %v173, %v172
  %v192 = vpack.c.b16 %v175, %v174
  %v193 = vpack.c.b16 %v177, %v176
  %210 = vmatprep.subr.bf16.mxu0 0
  %211 = vmatpush1.bf16.msra.mxu0 %v185
  %212 = vmatprep.subr.bf16.mxu0 0
  %213 = vmatpush1.bf16.msra.mxu0 %v184
  %214 = vmatprep.subr.bf16.mxu0 0
  %215 = vmatpush1.bf16.msra.mxu0 %v183
  %216 = vmatprep.subr.bf16.mxu0 0
  %217 = vmatpush1.bf16.msra.mxu0 %v182
  %218 = vmatprep.subr.bf16.mxu0 0
  %219 = vmatpush1.bf16.msra.mxu0 %v181
  %220 = vmatprep.subr.bf16.mxu0 0
  %221 = vmatpush1.bf16.msra.mxu0 %v180
  %222 = vmatprep.subr.bf16.mxu0 0
  %223 = vmatpush1.bf16.msra.mxu0 %v179
  %224 = vmatprep.subr.bf16.mxu0 0
  %225 = vmatpush1.bf16.msra.mxu0 %v178
  %226 = vmatprep.subr.bf16.mxu0 0
  %227 = vmatpush2.bf16.msra.mxu0 %v193
  %228 = vmatprep.subr.bf16.mxu0 0
  %229 = vmatpush2.bf16.msra.mxu0 %v192
  %230 = vmatprep.subr.bf16.mxu0 0
  %231 = vmatpush2.bf16.msra.mxu0 %v191
  %232 = vmatprep.subr.bf16.mxu0 0
  %233 = vmatpush2.bf16.msra.mxu0 %v190
  %234 = vmatprep.subr.bf16.mxu0 0
  %235 = vmatpush2.bf16.msra.mxu0 %v189
  %236 = vmatprep.subr.bf16.mxu0 0
  %237 = vmatpush2.bf16.msra.mxu0 %v188
  %238 = vmatprep.subr.bf16.mxu0 0
  %239 = vmatpush2.bf16.msra.mxu0 %v187
  %240 = vmatprep.subr.bf16.mxu0 0
  %241 = vmatpush2.bf16.msra.mxu0 %v186
  %242 = vmatprep.mubr.bf16.mxu0 %v99
  %243 = vmatmul.mubr.bf16.gmra.mxu0 %v98
  %v244 = vpop.f32.mrf.mxu0
  %v245 = vadd.f32 %v72, %v244
  %v246 = vpop.f32.mrf.mxu0
  %v247 = vpop.f32.mrf.mxu0
  %v248 = vadd.f32 %v72, %v247
  %v249 = vpop.f32.mrf.mxu0
  %250 = vmatprep.mubr.bf16.mxu0 %v101
  %251 = vmatmul.mubr.bf16.gmra.mxu0 %v100
  %v252 = vpop.f32.mrf.mxu0
  %v253 = vadd.f32 %v72, %v252
  %v254 = vpop.f32.mrf.mxu0
  %v255 = vpop.f32.mrf.mxu0
  %v256 = vadd.f32 %v72, %v255
  %v257 = vpop.f32.mrf.mxu0
  %258 = vmatprep.mubr.bf16.mxu0 %v103
  %259 = vmatmul.mubr.bf16.gmra.mxu0 %v102
  %v260 = vpop.f32.mrf.mxu0
  %v261 = vadd.f32 %v72, %v260
  %v262 = vpop.f32.mrf.mxu0
  %v263 = vpop.f32.mrf.mxu0
  %v264 = vadd.f32 %v72, %v263
  %v265 = vpop.f32.mrf.mxu0
  %266 = vmatprep.mubr.bf16.mxu0 %v105
  %267 = vmatmul.mubr.bf16.gmra.mxu0 %v104
  %v268 = vpop.f32.mrf.mxu0
  %v269 = vadd.f32 %v72, %v268
  %v270 = vpop.f32.mrf.mxu0
  %v271 = vpop.f32.mrf.mxu0
  %v272 = vadd.f32 %v72, %v271
  %v273 = vpop.f32.mrf.mxu0
  %274 = vdwg.mxu0
  %275 = vst [vmem:[#allocation2] sm:$0xff] %v245
  %276 = vst [vmem:[#allocation2 + $0x8] sm:$0xff] %v248
  %277 = vst [vmem:[#allocation2 + $0x10] sm:$0xff] %v253
  %278 = vst [vmem:[#allocation2 + $0x18] sm:$0xff] %v256
  %279 = vst [vmem:[#allocation2 + $0x20] sm:$0xff] %v261
  %280 = vst [vmem:[#allocation2 + $0x28] sm:$0xff] %v264
  %281 = vst [vmem:[#allocation2 + $0x30] sm:$0xff] %v269
  %282 = vst [vmem:[#allocation2 + $0x38] sm:$0xff] %v272
  %v283 = vld [vmem:[%s5] sm:$0xff]
  %v284 = vld [vmem:[%s5 + $0x8] sm:$0xff]
  %v285 = vld [vmem:[%s3] sm:$0xff]
  %v286 = vld [vmem:[%s3 + $0x8] sm:$0xff]
  %v287 = vld [vmem:[%s4] sm:$0xff]
  %v288 = vld [vmem:[%s4 + $0x8] sm:$0xff]
  loop: start=0, step=1, limit=2
  $region26: #{lmsnn_forward.4} parent=0 // loop_pre_header
    _
  $region27: #{lmsnn_forward.4} parent=0 // loop_header
    %s290 = sphi 0, %s294
    %p291 = scmp.ge.s32.totalorder %s290, 2
    %v295 = vphi %v285, %v673
    %v296 = vphi %v286, %v674
    %v297 = vphi %v287, %v679
    %v298 = vphi %v288, %v680
  $region28: #{lmsnn_forward.4} parent=0 // loop_header_branch
    %293 = sbr.rel (%p291) target = $region32
  $region29: #{lmsnn_forward.4} parent=0 // loop_body
    %p299 = scmp.lt.s32.totalorder %s290, 0
    %s300 = ssub.s32 0, %s290
    %s301 = scalar_select %p299, %s300, %s290
    %s302 = sand.u32 %s301, 1
    %s303 = ssub.s32 0, %s302
    %s304 = scalar_select %p299, %s303, %s302
    %s305 = sadd.s32 %s290, 1
    %p306 = scmp.lt.s32.totalorder %s305, 1
    %s307 = scalar_select %p306, %s305, 1
    %s308 = ssub.s32 1, %s304
    %s309 = smul.u32 %s307, 64
    %s310 = sshra.s32 %s309, 3
    %s311 = sand.u32 %s309, 7
    %s312 = smul.u32 %s310, 2
    %s313 = smul.addr %s312, 4
    %s314 = scalar_lea.vmem %s0, %s313
    %v315 = vld [vmem:[%s314] sm:$0xff]
    %v316 = vld [vmem:[%s314 + $0x8] sm:$0xff]
    %v317 = vld [vmem:[%s314 + $0x10] sm:$0xff]
    %v318 = vld [vmem:[%s314 + $0x18] sm:$0xff]
    %v319 = vld [vmem:[%s314 + $0x20] sm:$0xff]
    %v320 = vld [vmem:[%s314 + $0x28] sm:$0xff]
    %v321 = vld [vmem:[%s314 + $0x30] sm:$0xff]
    %v322 = vld [vmem:[%s314 + $0x38] sm:$0xff]
    %v323 = vld [vmem:[%s1] sm:$0xf]
    %v324 = vld [vmem:[%s1 + $0x4] sm:$0xf]
    %v325 = vld [vmem:[%s1 + $0x8] sm:$0xf]
    %v326 = vld [vmem:[%s1 + $0xc] sm:$0xf]
    %v327 = vld [vmem:[%s1 + $0x10] sm:$0xf]
    %v328 = vld [vmem:[%s1 + $0x14] sm:$0xf]
    %v329 = vld [vmem:[%s1 + $0x18] sm:$0xf]
    %v330 = vld [vmem:[%s1 + $0x1c] sm:$0xf]
    %v331 = vld [vmem:[%s1 + $0x20] sm:$0xf]
    %v332 = vld [vmem:[%s1 + $0x24] sm:$0xf]
    %v333 = vld [vmem:[%s1 + $0x28] sm:$0xf]
    %v334 = vld [vmem:[%s1 + $0x2c] sm:$0xf]
    %v335 = vld [vmem:[%s1 + $0x30] sm:$0xf]
    %v336 = vld [vmem:[%s1 + $0x34] sm:$0xf]
    %v337 = vld [vmem:[%s1 + $0x38] sm:$0xf]
    %v338 = vld [vmem:[%s1 + $0x3c] sm:$0xf]
    %v339 = vld [vmem:[%s1 + $0x40] sm:$0xf]
    %v340 = vld [vmem:[%s1 + $0x44] sm:$0xf]
    %v341 = vld [vmem:[%s1 + $0x48] sm:$0xf]
    %v342 = vld [vmem:[%s1 + $0x4c] sm:$0xf]
    %v343 = vld [vmem:[%s1 + $0x50] sm:$0xf]
    %v344 = vld [vmem:[%s1 + $0x54] sm:$0xf]
    %v345 = vld [vmem:[%s1 + $0x58] sm:$0xf]
    %v346 = vld [vmem:[%s1 + $0x5c] sm:$0xf]
    %v347 = vld [vmem:[%s1 + $0x60] sm:$0xf]
    %v348 = vld [vmem:[%s1 + $0x64] sm:$0xf]
    %v349 = vld [vmem:[%s1 + $0x68] sm:$0xf]
    %v350 = vld [vmem:[%s1 + $0x6c] sm:$0xf]
    %v351 = vld [vmem:[%s1 + $0x70] sm:$0xf]
    %v352 = vld [vmem:[%s1 + $0x74] sm:$0xf]
    %v353 = vld [vmem:[%s1 + $0x78] sm:$0xf]
    %v354 = vld [vmem:[%s1 + $0x7c] sm:$0xf]
    %v355 = vld [vmem:[%s2] sm:$0x1]
    %v357 = vlaneseq
    %v358 = vshrl.u32 %v357, 7
    %v359 = vsub.s32 0, %v358
    %v360 = vrot.slane %v355, %v359
    %v370 = vunpack.c.l.b16 %v315
    %v371 = vunpack.c.h.b16 %v315
    %v372 = vunpack.c.l.b16 %v316
    %v373 = vunpack.c.h.b16 %v316
    %v374 = vunpack.c.l.b16 %v317
    %v375 = vunpack.c.h.b16 %v317
    %v376 = vunpack.c.l.b16 %v318
    %v377 = vunpack.c.h.b16 %v318
    %v378 = vunpack.c.l.b16 %v319
    %v379 = vunpack.c.h.b16 %v319
    %v380 = vunpack.c.l.b16 %v320
    %v381 = vunpack.c.h.b16 %v320
    %v382 = vunpack.c.l.b16 %v321
    %v383 = vunpack.c.h.b16 %v321
    %v384 = vunpack.c.l.b16 %v322
    %v385 = vunpack.c.h.b16 %v322
    %v386 = vpack.c.b16 %v372, %v370
    %v387 = vpack.c.b16 %v373, %v371
    %v388 = vpack.c.b16 %v376, %v374
    %v389 = vpack.c.b16 %v377, %v375
    %v390 = vpack.c.b16 %v380, %v378
    %v391 = vpack.c.b16 %v381, %v379
    %v392 = vpack.c.b16 %v384, %v382
    %v393 = vpack.c.b16 %v385, %v383
    %v434 = vunpack.c.l.b16 %v323
    %v435 = vunpack.c.l.b16 %v324
    %v436 = vunpack.c.l.b16 %v325
    %v437 = vunpack.c.l.b16 %v326
    %v438 = vunpack.c.l.b16 %v327
    %v439 = vunpack.c.l.b16 %v328
    %v440 = vunpack.c.l.b16 %v329
    %v441 = vunpack.c.l.b16 %v330
    %v442 = vunpack.c.l.b16 %v331
    %v443 = vunpack.c.l.b16 %v332
    %v444 = vunpack.c.l.b16 %v333
    %v445 = vunpack.c.l.b16 %v334
    %v446 = vunpack.c.l.b16 %v335
    %v447 = vunpack.c.l.b16 %v336
    %v448 = vunpack.c.l.b16 %v337
    %v449 = vunpack.c.l.b16 %v338
    %v450 = vunpack.c.l.b16 %v339
    %v451 = vunpack.c.l.b16 %v340
    %v452 = vunpack.c.l.b16 %v341
    %v453 = vunpack.c.l.b16 %v342
    %v454 = vunpack.c.l.b16 %v343
    %v455 = vunpack.c.l.b16 %v344
    %v456 = vunpack.c.l.b16 %v345
    %v457 = vunpack.c.l.b16 %v346
    %v458 = vunpack.c.l.b16 %v347
    %v459 = vunpack.c.l.b16 %v348
    %v460 = vunpack.c.l.b16 %v349
    %v461 = vunpack.c.l.b16 %v350
    %v462 = vunpack.c.l.b16 %v351
    %v463 = vunpack.c.l.b16 %v352
    %v464 = vunpack.c.l.b16 %v353
    %v465 = vunpack.c.l.b16 %v354
    %v466 = vpack.c.b16 %v435, %v434
    %v467 = vpack.c.b16 %v437, %v436
    %v468 = vpack.c.b16 %v439, %v438
    %v469 = vpack.c.b16 %v441, %v440
    %v470 = vpack.c.b16 %v443, %v442
    %v471 = vpack.c.b16 %v445, %v444
    %v472 = vpack.c.b16 %v447, %v446
    %v473 = vpack.c.b16 %v449, %v448
    %v474 = vpack.c.b16 %v451, %v450
    %v475 = vpack.c.b16 %v453, %v452
    %v476 = vpack.c.b16 %v455, %v454
    %v477 = vpack.c.b16 %v457, %v456
    %v478 = vpack.c.b16 %v459, %v458
    %v479 = vpack.c.b16 %v461, %v460
    %v480 = vpack.c.b16 %v463, %v462
    %v481 = vpack.c.b16 %v465, %v464
    %498 = vmatprep.subr.bf16.mxu0 0
    %499 = vmatpush1.bf16.msra.mxu0 %v473
    %500 = vmatprep.subr.bf16.mxu0 0
    %501 = vmatpush1.bf16.msra.mxu0 %v472
    %502 = vmatprep.subr.bf16.mxu0 0
    %503 = vmatpush1.bf16.msra.mxu0 %v471
    %504 = vmatprep.subr.bf16.mxu0 0
    %505 = vmatpush1.bf16.msra.mxu0 %v470
    %506 = vmatprep.subr.bf16.mxu0 0
    %507 = vmatpush1.bf16.msra.mxu0 %v469
    %508 = vmatprep.subr.bf16.mxu0 0
    %509 = vmatpush1.bf16.msra.mxu0 %v468
    %510 = vmatprep.subr.bf16.mxu0 0
    %511 = vmatpush1.bf16.msra.mxu0 %v467
    %512 = vmatprep.subr.bf16.mxu0 0
    %513 = vmatpush1.bf16.msra.mxu0 %v466
    %514 = vmatprep.subr.bf16.mxu0 0
    %515 = vmatpush2.bf16.msra.mxu0 %v481
    %516 = vmatprep.subr.bf16.mxu0 0
    %517 = vmatpush2.bf16.msra.mxu0 %v480
    %518 = vmatprep.subr.bf16.mxu0 0
    %519 = vmatpush2.bf16.msra.mxu0 %v479
    %520 = vmatprep.subr.bf16.mxu0 0
    %521 = vmatpush2.bf16.msra.mxu0 %v478
    %522 = vmatprep.subr.bf16.mxu0 0
    %523 = vmatpush2.bf16.msra.mxu0 %v477
    %524 = vmatprep.subr.bf16.mxu0 0
    %525 = vmatpush2.bf16.msra.mxu0 %v476
    %526 = vmatprep.subr.bf16.mxu0 0
    %527 = vmatpush2.bf16.msra.mxu0 %v475
    %528 = vmatprep.subr.bf16.mxu0 0
    %529 = vmatpush2.bf16.msra.mxu0 %v474
    %530 = vmatprep.mubr.bf16.mxu0 %v387
    %531 = vmatmul.mubr.bf16.gmra.mxu0 %v386
    %v532 = vpop.f32.mrf.mxu0
    %v533 = vadd.f32 %v360, %v532
    %v534 = vpop.f32.mrf.mxu0
    %v535 = vpop.f32.mrf.mxu0
    %v536 = vadd.f32 %v360, %v535
    %v537 = vpop.f32.mrf.mxu0
    %538 = vmatprep.mubr.bf16.mxu0 %v389
    %539 = vmatmul.mubr.bf16.gmra.mxu0 %v388
    %v540 = vpop.f32.mrf.mxu0
    %v541 = vadd.f32 %v360, %v540
    %v542 = vpop.f32.mrf.mxu0
    %v543 = vpop.f32.mrf.mxu0
    %v544 = vadd.f32 %v360, %v543
    %v545 = vpop.f32.mrf.mxu0
    %546 = vmatprep.mubr.bf16.mxu0 %v391
    %547 = vmatmul.mubr.bf16.gmra.mxu0 %v390
    %v548 = vpop.f32.mrf.mxu0
    %v549 = vadd.f32 %v360, %v548
    %v550 = vpop.f32.mrf.mxu0
    %v551 = vpop.f32.mrf.mxu0
    %v552 = vadd.f32 %v360, %v551
    %v553 = vpop.f32.mrf.mxu0
    %554 = vmatprep.mubr.bf16.mxu0 %v393
    %555 = vmatmul.mubr.bf16.gmra.mxu0 %v392
    %v556 = vpop.f32.mrf.mxu0
    %v557 = vadd.f32 %v360, %v556
    %v558 = vpop.f32.mrf.mxu0
    %v559 = vpop.f32.mrf.mxu0
    %v560 = vadd.f32 %v360, %v559
    %v561 = vpop.f32.mrf.mxu0
    %562 = vdwg.mxu0
    %s563 = smul.u32 %s308, 64
    %s564 = scalar_lea.vmem [#allocation2], %s563
    %565 = vst [vmem:[%s564] sm:$0xff] %v533
    %566 = vst [vmem:[%s564 + $0x8] sm:$0xff] %v536
    %567 = vst [vmem:[%s564 + $0x10] sm:$0xff] %v541
    %568 = vst [vmem:[%s564 + $0x18] sm:$0xff] %v544
    %569 = vst [vmem:[%s564 + $0x20] sm:$0xff] %v549
    %570 = vst [vmem:[%s564 + $0x28] sm:$0xff] %v552
    %571 = vst [vmem:[%s564 + $0x30] sm:$0xff] %v557
    %572 = vst [vmem:[%s564 + $0x38] sm:$0xff] %v560
    %s573 = smul.u32 %s304, 64
    %s574 = scalar_lea.vmem [#allocation2], %s573
    %v575 = vld [vmem:[%s574] sm:$0xff]
    %v576 = vld [vmem:[%s574 + $0x8] sm:$0xff]
    %vm577 = vcmp.gt.f32.partialorder %v297, 0.0
    %vm578 = vcmp.gt.f32.partialorder %v298, 0.0
    %v579 = vmul.f32 %v295, 0.5
    %v580 = vmul.f32 %v296, 0.5
    %v581 = vadd.f32 %v579, %v575
    %v582 = vadd.f32 %v580, %v576
    %v583 = vsel %vm577, %v575, %v581
    %v584 = vsel %vm578, %v576, %v582
    %vm585 = vcmp.gt.f32.partialorder %v583, %v283
    %vm586 = vcmp.gt.f32.partialorder %v584, %v284
    %v587 = vsel %vm585, 1, 0
    %v588 = vsel %vm586, 1, 0
    %v589 = vcvt.s32.f32 %v587
    %v590 = vcvt.s32.f32 %v588
    %v591 = vpack.c.bf16 %v590, %v589
    %s592 = smul.u32 %s290, 4
    %v594 = vunpack.c.l.b16 %v591
    %v595 = vunpack.c.h.b16 %v591
    %v596 = vpack.c.b16 %v594, %v594
    %v597 = vpack.c.b16 %v595, %v595
    %s600 = smul.u32 %s592, 2
    %s601 = smul.addr %s600, 4
    %s602 = scalar_lea.vmem %s6, %s601
    %603 = vst [vmem:[%s602] sm:$0xf] %v596
    %604 = vst [vmem:[%s602 + $0x4] sm:$0xf] %v597
    %v605 = vld [vmem:[%s574 + $0x10] sm:$0xff]
    %v606 = vld [vmem:[%s574 + $0x18] sm:$0xff]
    %vm607 = vcmp.gt.f32.partialorder %v589, 0.0
    %vm608 = vcmp.gt.f32.partialorder %v590, 0.0
    %v609 = vmul.f32 %v583, 0.5
    %v610 = vmul.f32 %v584, 0.5
    %v611 = vadd.f32 %v609, %v605
    %v612 = vadd.f32 %v610, %v606
    %v613 = vsel %vm607, %v605, %v611
    %v614 = vsel %vm608, %v606, %v612
    %vm615 = vcmp.gt.f32.partialorder %v613, %v283
    %vm616 = vcmp.gt.f32.partialorder %v614, %v284
    %v617 = vsel %vm615, 1, 0
    %v618 = vsel %vm616, 1, 0
    %v619 = vcvt.s32.f32 %v617
    %v620 = vcvt.s32.f32 %v618
    %v621 = vpack.c.bf16 %v620, %v619
    %s622 = sadd.s32 %s592, 1
    %v624 = vunpack.c.l.b16 %v621
    %v625 = vunpack.c.h.b16 %v621
    %v626 = vpack.c.b16 %v624, %v624
    %v627 = vpack.c.b16 %v625, %v625
    %s630 = smul.u32 %s622, 2
    %s631 = smul.addr %s630, 4
    %s632 = scalar_lea.vmem %s6, %s631
    %633 = vst [vmem:[%s632] sm:$0xf] %v626
    %634 = vst [vmem:[%s632 + $0x4] sm:$0xf] %v627
    %v635 = vld [vmem:[%s574 + $0x20] sm:$0xff]
    %v636 = vld [vmem:[%s574 + $0x28] sm:$0xff]
    %vm637 = vcmp.gt.f32.partialorder %v619, 0.0
    %vm638 = vcmp.gt.f32.partialorder %v620, 0.0
    %v639 = vmul.f32 %v613, 0.5
    %v640 = vmul.f32 %v614, 0.5
    %v641 = vadd.f32 %v639, %v635
    %v642 = vadd.f32 %v640, %v636
    %v643 = vsel %vm637, %v635, %v641
    %v644 = vsel %vm638, %v636, %v642
    %vm645 = vcmp.gt.f32.partialorder %v643, %v283
    %vm646 = vcmp.gt.f32.partialorder %v644, %v284
    %v647 = vsel %vm645, 1, 0
    %v648 = vsel %vm646, 1, 0
    %v649 = vcvt.s32.f32 %v647
    %v650 = vcvt.s32.f32 %v648
    %v651 = vpack.c.bf16 %v650, %v649
    %s652 = sadd.s32 %s592, 2
    %v654 = vunpack.c.l.b16 %v651
    %v655 = vunpack.c.h.b16 %v651
    %v656 = vpack.c.b16 %v654, %v654
    %v657 = vpack.c.b16 %v655, %v655
    %s660 = smul.u32 %s652, 2
    %s661 = smul.addr %s660, 4
    %s662 = scalar_lea.vmem %s6, %s661
    %663 = vst [vmem:[%s662] sm:$0xf] %v656
    %664 = vst [vmem:[%s662 + $0x4] sm:$0xf] %v657
    %v665 = vld [vmem:[%s574 + $0x30] sm:$0xff]
    %v666 = vld [vmem:[%s574 + $0x38] sm:$0xff]
    %vm667 = vcmp.gt.f32.partialorder %v649, 0.0
    %vm668 = vcmp.gt.f32.partialorder %v650, 0.0
    %v669 = vmul.f32 %v643, 0.5
    %v670 = vmul.f32 %v644, 0.5
    %v671 = vadd.f32 %v669, %v665
    %v672 = vadd.f32 %v670, %v666
    %v673 = vsel %vm667, %v665, %v671
    %v674 = vsel %vm668, %v666, %v672
    %vm675 = vcmp.gt.f32.partialorder %v673, %v283
    %vm676 = vcmp.gt.f32.partialorder %v674, %v284
    %v677 = vsel %vm675, 1, 0
    %v678 = vsel %vm676, 1, 0
    %v679 = vcvt.s32.f32 %v677
    %v680 = vcvt.s32.f32 %v678
    %v681 = vpack.c.bf16 %v680, %v679
    %s682 = sadd.s32 %s592, 3
    %v684 = vunpack.c.l.b16 %v681
    %v685 = vunpack.c.h.b16 %v681
    %v686 = vpack.c.b16 %v684, %v684
    %v687 = vpack.c.b16 %v685, %v685
    %s690 = smul.u32 %s682, 2
    %s691 = smul.addr %s690, 4
    %s692 = scalar_lea.vmem %s6, %s691
    %693 = vst [vmem:[%s692] sm:$0xf] %v686
    %694 = vst [vmem:[%s692 + $0x4] sm:$0xf] %v687
  $region30: #{lmsnn_forward.4} parent=0 // loop_footer
    %s294 = sadd.s32 1, %s290
  $region31: #{lmsnn_forward.4} parent=0 // loop_footer_branch
    %289 = sbr.rel target = $region27
  $region32: #{lmsnn_forward.4} parent=0 // loop_exit
    _
  %695 = vst [vmem:[%s7] sm:$0xff] %v295
  %696 = vst [vmem:[%s7 + $0x8] sm:$0xff] %v296
  %697 = vst [vmem:[%s8] sm:$0xff] %v297
  %698 = vst [vmem:[%s8 + $0x8] sm:$0xff] %v298
  // Predicated region
  $region33: #{lmsnn_forward.4} parent=0 // pred_check
    _
  $region34: #{lmsnn_forward.4} parent=0 // pred_check_branch
    %700 = sbr.rel (0) target = $region36
  $region35: #{lmsnn_forward.4} parent=0 // pred_region
    _
  $region36: #{lmsnn_forward.4} parent=0 // pred_fallthru
    _
  // Predicated region
  $region37: #{lmsnn_forward.4} parent=0 // pred_check
    _
  $region38: #{lmsnn_forward.4} parent=0 // pred_check_branch
    %702 = sbr.rel (0) target = $region40
  $region39: #{lmsnn_forward.4} parent=0 // pred_region
    _
  $region40: #{lmsnn_forward.4} parent=0 // pred_fallthru
    _
  // Predicated region
  $region41: #{lmsnn_forward.4} parent=0 // pred_check
    _
  $region42: #{lmsnn_forward.4} parent=0 // pred_check_branch
    %704 = sbr.rel (0) target = $region44
  $region43: #{lmsnn_forward.4} parent=0 // pred_region
    _
  $region44: #{lmsnn_forward.4} parent=0 // pred_fallthru
    _
  // Predicated region
  $region45: #{lmsnn_forward.4} parent=0 // pred_check
    _
  $region46: #{lmsnn_forward.4} parent=0 // pred_check_branch
    %706 = sbr.rel (0) target = $region48
  $region47: #{lmsnn_forward.4} parent=0 // pred_region
    _
  $region48: #{lmsnn_forward.4} parent=0 // pred_fallthru
    _
  // Predicated region
  $region49: #{lmsnn_forward.4} parent=0 // pred_check
    _
  $region50: #{lmsnn_forward.4} parent=0 // pred_check_branch
    %708 = sbr.rel (0) target = $region52
  $region51: #{lmsnn_forward.4} parent=0 // pred_region
    _
  $region52: #{lmsnn_forward.4} parent=0 // pred_fallthru
    _
  // Predicated region
  $region53: #{lmsnn_forward.4} parent=0 // pred_check
    _
  $region54: #{lmsnn_forward.4} parent=0 // pred_check_branch
    %710 = sbr.rel (0) target = $region56
  $region55: #{lmsnn_forward.4} parent=0 // pred_region
    _
  $region56: #{lmsnn_forward.4} parent=0 // pred_fallthru
    _

</llo_original>
